<compile_context>
chip_gen: v5e
topology: v5e:2x2
jax: 0.10.0
libtpu: 0.0.40
codegen_flags: <defaults>
</compile_context>

<pallas_src>
import functools
import math

import jax
import jax.numpy as jnp
import numpy as np
from jax.experimental import pallas as pl
from jax.experimental.pallas import tpu as pltpu


LN_EPS = 1e-12  # ESPnet transformer LayerNorm default


# ----------------------------------------------------------------------------
# helpers
# ----------------------------------------------------------------------------
def _round_up(x, m):
    return (x + m - 1) // m * m


def _row_tile(M, cap=512):
    """Row tile for (M, K) row-wise kernels: full array if small, else a fixed
    lane-dense cap with a pl.cdiv grid (trailing partial block is masked)."""
    return M if M <= cap else cap


def _q_tile(T, cap=256):
    """Query tile for the fused attention kernel (divides T, multiple of 8)."""
    if T <= cap:
        return T
    for tq in range(cap - cap % 8, 7, -8):
        if T % tq == 0:
            return tq
    return T


def _cparams(semantics, est_bytes=0):
    """CompilerParams with an explicit scoped-VMEM budget only when the
    per-step working set could exceed the smallest generation default."""
    if est_bytes > (12 << 20):
        limit = int(min(max(2 * est_bytes, 32 << 20), 64 << 20))
    else:
        limit = None
    return pltpu.CompilerParams(dimension_semantics=semantics,
                                vmem_limit_bytes=limit)


def _sigmoid(x):
    # exp -> EUP, approximate reciprocal -> EUP; keeps the VALU slot free.
    return pl.reciprocal(1.0 + jnp.exp(-x), approx=True)


def _layernorm(x, g, b, eps):
    mu = jnp.mean(x, axis=-1, keepdims=True)
    var = jnp.mean((x - mu) ** 2, axis=-1, keepdims=True)
    return (x - mu) * jax.lax.rsqrt(var + eps) * g + b


# ----------------------------------------------------------------------------
# one-time probe: does the strided lane-roll lower here, and with which sign?
# ----------------------------------------------------------------------------
_PROBE_SHIFT = 5


def probe_roll_direction():
    """Returns +1 if pltpu.roll follows jnp.roll semantics
    (out[j] = in[(j - amount) % n], amount = shift + stride * row),
    -1 for the opposite convention, or None if the strided roll is unavailable
    on this TPU (kernels then use a slice-based fallback)."""
    def kern(o_ref):
        x = jax.lax.broadcasted_iota(jnp.int32, (8, 128), 1).astype(jnp.float32)
        o_ref[...] = pltpu.roll(x, _PROBE_SHIFT, 1, stride=1, stride_axis=0)

    try:
        out = pl.pallas_call(
            kern, out_shape=jax.ShapeDtypeStruct((8, 128), jnp.float32))()
        out = np.asarray(jax.device_get(out))
    except Exception:
        return None
    j = np.arange(128)[None, :]
    i = np.arange(8)[:, None]
    if np.array_equal(out, ((j - _PROBE_SHIFT - i) % 128).astype(np.float32)):
        return 1
    if np.array_equal(out, ((j + _PROBE_SHIFT + i) % 128).astype(np.float32)):
        return -1
    return None


# ----------------------------------------------------------------------------
# Pallas kernels
# ----------------------------------------------------------------------------
def _linear_act_kernel(x_ref, w_ref, b_ref, o_ref, *, act):
    """y = act(x @ W + b); x:(TM,K) bf16, W:(K,N) bf16, b:(1,N) f32."""
    y = jnp.dot(x_ref[...], w_ref[...], preferred_element_type=jnp.float32)
    y = y + b_ref[...]
    if act == "relu":
        y = jnp.maximum(y, 0.0)
    elif act == "sigmoid":
        y = _sigmoid(y)
    elif act == "tanh":
        y = jnp.tanh(y)
    o_ref[...] = y.astype(o_ref.dtype)


def _input_layer_kernel(x_ref, w_ref, b_ref, g_ref, be_ref, o_ref, *, eps, scale):
    """Input layer: Linear -> LayerNorm -> xscale (RelPositionalEncoding)."""
    y = jnp.dot(x_ref[...], w_ref[...], preferred_element_type=jnp.float32)
    y = y + b_ref[...]
    y = _layernorm(y, g_ref[...], be_ref[...], eps)
    o_ref[...] = (y * scale).astype(o_ref.dtype)


def _ff_module_kernel(x_ref, w1_ref, b1_ref, w2_ref, b2_ref, g1_ref, be1_ref,
                      *rest, eps, final_ln):
    """Fused FF module: LN(x + 0.5*(W2 swish(W1 x + b1) + b2)) [+ final LN]."""
    if final_ln:
        g2_ref, be2_ref, o_ref = rest
    else:
        (o_ref,) = rest
    x_bf = x_ref[...]                                            # (TM, D) bf16
    h = jnp.dot(x_bf, w1_ref[...], preferred_element_type=jnp.float32) + b1_ref[...]
    h = h * _sigmoid(h)                                          # swish (f32)
    y = jnp.dot(h.astype(w2_ref.dtype), w2_ref[...],
                preferred_element_type=jnp.float32) + b2_ref[...]
    r = x_bf.astype(jnp.float32) + 0.5 * y                       # macaron ff_scale
    r = _layernorm(r, g1_ref[...], be1_ref[...], eps)
    if final_ln:
        r = _layernorm(r, g2_ref[...], be2_ref[...], eps)
    o_ref[...] = r.astype(o_ref.dtype)


def _attn_block_kernel(x_ref, wq_ref, wk_ref, wv_ref, bq_ref, bk_ref, bv_ref,
                       pu_ref, pv_ref, pos_ref, wo_ref, bo_ref, g_ref, be_ref,
                       o_ref, acc_ref, *, H, T, TQ, QT, Ppad, scale, eps,
                       roll_dir):
    """Fully fused rel-pos self-attention per (batch, query-tile, head):
    QKV projection, content + positional scores, in-VMEM rel_shift, softmax,
    PV, per-head fold of the output projection, residual + LayerNorm."""
    h_id = pl.program_id(2)

    @pl.when(h_id == 0)
    def _():
        acc_ref[...] = jnp.zeros_like(acc_ref)

    if QT > 1:
        q0 = pl.multiple_of(pl.program_id(1) * TQ, 8)
    else:
        q0 = 0

    x = x_ref[0]                                      # (T, D) bf16
    xq = x_ref[0, pl.ds(q0, TQ), :]                   # (TQ, D) bf16 query rows

    q = jnp.dot(xq, wq_ref[0], preferred_element_type=jnp.float32) + bq_ref[0]
    k = jnp.dot(x, wk_ref[0], preferred_element_type=jnp.float32) + bk_ref[0]
    v = jnp.dot(x, wv_ref[0], preferred_element_type=jnp.float32) + bv_ref[0]

    q_u = (q + pu_ref[0]).astype(jnp.bfloat16)        # q + pos_bias_u
    q_v = (q + pv_ref[0]).astype(jnp.bfloat16)        # q + pos_bias_v
    k_b = k.astype(jnp.bfloat16)
    v_b = v.astype(jnp.bfloat16)

    # content scores (TQ, T)
    ac = jax.lax.dot_general(q_u, k_b, (((1,), (1,)), ((), ())),
                             preferred_element_type=jnp.float32)
    # positional scores vs. the 128-padded rel-pos table (TQ, Ppad)
    bd_full = jax.lax.dot_general(q_v, pos_ref[0], (((1,), (1,)), ((), ())),
                                  preferred_element_type=jnp.float32)

    # ESPnet rel_shift in VMEM: bd[a, j] = bd_full[a, T - (q0 + a) + j]
    if roll_dir == 1:
        rolled = pltpu.roll(bd_full, Ppad - T + q0, 1, stride=1, stride_axis=0)
        bd = rolled[:, :T]
    else:
        # TODO(synk): fallback when the strided lane-roll is unavailable /
        # opposite convention; wrapper forces QT == 1 so the slices are static.
        rows = jax.lax.broadcasted_iota(jnp.int32, (TQ, T), 0)
        bd = jnp.zeros((TQ, T), jnp.float32)
        for a in range(TQ):
            bd = jnp.where(rows == a, bd_full[a:a + 1, T - a:2 * T - a], bd)

    s = (ac + bd) * scale
    s = s - jnp.max(s, axis=-1, keepdims=True)
    p = jnp.exp(s)
    p = p * pl.reciprocal(jnp.sum(p, axis=-1, keepdims=True), approx=True)

    o_h = jnp.dot(p.astype(jnp.bfloat16), v_b, preferred_element_type=jnp.float32)
    acc_ref[...] += jnp.dot(o_h.astype(jnp.bfloat16), wo_ref[0],
                            preferred_element_type=jnp.float32)

    @pl.when(h_id == H - 1)
    def _():
        r = xq.astype(jnp.float32) + acc_ref[...] + bo_ref[...]
        o_ref[0] = _layernorm(r, g_ref[...], be_ref[...], eps).astype(o_ref.dtype)


def _conv_module_kernel(x_ref, w1a_ref, b1a_ref, w1b_ref, b1b_ref,
                        dww_ref, dwb_ref, w2_ref, b2_ref, g_ref, be_ref, o_ref,
                        *, K, T, eps, bn_scale, roll_dir):
    """Fused conformer conv module (per batch element), no HBM padding:
    pointwise1 (split GLU) -> depthwise conv via rolled taps -> eval-BN scale
    + swish -> pointwise2 -> residual -> LayerNorm."""
    pad = (K - 1) // 2
    x = x_ref[0]                                                 # (T, D) bf16
    a = jnp.dot(x, w1a_ref[...], preferred_element_type=jnp.float32) + b1a_ref[...]
    gt = jnp.dot(x, w1b_ref[...], preferred_element_type=jnp.float32) + b1b_ref[...]
    c = a * _sigmoid(gt)                                         # GLU, (T, D) f32

    # depthwise conv along time; torch zero-pads the GLU output by `pad` frames
    t_idx = jax.lax.broadcasted_iota(jnp.int32, c.shape, 0)
    acc = c * dww_ref[pad]                                       # center tap
    for k in range(K):
        s = k - pad
        if s == 0:
            continue
        if roll_dir is not None:
            amt = (-s) % T if roll_dir == 1 else s % T
            shifted = pltpu.roll(c, amt, 0)                      # XLU sublane rotate
        else:
            zeros = jnp.zeros((abs(s), c.shape[1]), c.dtype)
            shifted = (jnp.concatenate([c[s:], zeros], axis=0) if s > 0
                       else jnp.concatenate([zeros, c[:s]], axis=0))
        shifted = jnp.where((t_idx + s >= 0) & (t_idx + s < T), shifted, 0.0)
        acc = acc + shifted * dww_ref[k]
    acc = acc + dwb_ref[...]

    # eval-mode BatchNorm (running stats) folded into a scale, then swish
    hsw = acc * bn_scale
    hsw = hsw * _sigmoid(hsw)
    # pointwise conv2 + residual + LayerNorm
    y = jnp.dot(hsw.astype(w2_ref.dtype), w2_ref[...],
                preferred_element_type=jnp.float32) + b2_ref[...]
    r = x.astype(jnp.float32) + y
    o_ref[0] = _layernorm(r, g_ref[...], be_ref[...], eps).astype(o_ref.dtype)


# ----------------------------------------------------------------------------
# pallas_call wrappers
# ----------------------------------------------------------------------------
def _rowwise_pallas_call(kernel, x, consts, n_out, out_dtype, extra_f32_cols=0):
    M, Kin = x.shape
    TM = _row_tile(M)
    in_specs = [pl.BlockSpec((TM, Kin), lambda i: (i, 0))]
    for c in consts:
        in_specs.append(pl.BlockSpec(c.shape, lambda i, _n=c.ndim: (0,) * _n))
    est = (2 * TM * Kin * x.dtype.itemsize
           + 2 * TM * n_out * jnp.dtype(out_dtype).itemsize
           + TM * (n_out + extra_f32_cols) * 4
           + sum(int(c.size) * c.dtype.itemsize for c in consts))
    return pl.pallas_call(
        kernel,
        out_shape=jax.ShapeDtypeStruct((M, n_out), out_dtype),
        grid=(pl.cdiv(M, TM),),
        in_specs=in_specs,
        out_specs=pl.BlockSpec((TM, n_out), lambda i: (i, 0)),
        compiler_params=_cparams(("parallel",), est),
    )(x, *consts)


def linear_act(x2, w, b, *, act="none", out_dtype=jnp.float32):
    kern = functools.partial(_linear_act_kernel, act=act)
    return _rowwise_pallas_call(kern, x2, [w, b], w.shape[1], out_dtype)


def in_layer(x2, w, b, g, be, *, scale):
    kern = functools.partial(_input_layer_kernel, eps=LN_EPS, scale=scale)
    return _rowwise_pallas_call(kern, x2, [w, b, g, be], w.shape[1], jnp.bfloat16)


def ff_module(x2, w1, b1, w2, b2, g1, be1, *, final_ln=None):
    consts = [w1, b1, w2, b2, g1, be1]
    if final_ln is not None:
        consts += list(final_ln)
    kern = functools.partial(_ff_module_kernel, eps=LN_EPS,
                             final_ln=final_ln is not None)
    return _rowwise_pallas_call(kern, x2, consts, x2.shape[1], jnp.bfloat16,
                                extra_f32_cols=w1.shape[1])


def attn_module(x, pos_l, p, *, H, dk, roll_dir):
    B, T, D = x.shape
    Ppad = pos_l.shape[1]
    scale = 1.0 / math.sqrt(dk)
    TQ = _q_tile(T)
    QT = T // TQ
    if roll_dir != 1:
        TQ, QT = T, 1          # static slice fallback needs a static query offset

    kern = functools.partial(_attn_block_kernel, H=H, T=T, TQ=TQ, QT=QT,
                             Ppad=Ppad, scale=scale, eps=LN_EPS,
                             roll_dir=roll_dir)

    def head_spec(shape):
        return pl.BlockSpec((1,) + tuple(shape[1:]), lambda b, q, h: (h, 0, 0))

    def const_spec(shape):
        return pl.BlockSpec(tuple(shape), lambda b, q, h, _n=len(shape): (0,) * _n)

    est = (2 * T * D * 2 * 2                       # x double-buffered (bf16)
           + TQ * D * 4                            # accumulator scratch
           + TQ * Ppad * 4 + 2 * TQ * T * 4        # score values
           + 2 * T * dk * 4 * 2                    # k / v f32 intermediates
           + 2 * TQ * D * 2                        # output double-buffered
           + (3 * D * dk + Ppad * dk + dk * D) * 2)  # per-head weights (bf16)

    return pl.pallas_call(
        kern,
        out_shape=jax.ShapeDtypeStruct((B, T, D), jnp.bfloat16),
        grid=(B, QT, H),
        in_specs=[
            pl.BlockSpec((1, T, D), lambda b, q, h: (b, 0, 0)),   # x
            head_spec(p["wq"].shape), head_spec(p["wk"].shape),
            head_spec(p["wv"].shape),
            head_spec(p["bq"].shape), head_spec(p["bk"].shape),
            head_spec(p["bv"].shape),
            head_spec(p["att_u"].shape), head_spec(p["att_v"].shape),
            head_spec(pos_l.shape),
            head_spec(p["wo"].shape),
            const_spec(p["bo"].shape),
            const_spec(p["ln_mha_g"].shape), const_spec(p["ln_mha_b"].shape),
        ],
        out_specs=pl.BlockSpec((1, TQ, D), lambda b, q, h: (b, q, 0)),
        scratch_shapes=[pltpu.VMEM((TQ, D), jnp.float32)],
        compiler_params=_cparams(("parallel", "parallel", "arbitrary"), est),
    )(x, p["wq"], p["wk"], p["wv"], p["bq"], p["bk"], p["bv"],
      p["att_u"], p["att_v"], pos_l, p["wo"], p["bo"],
      p["ln_mha_g"], p["ln_mha_b"])


def conv_module(x, p, *, K, roll_dir):
    B, T, D = x.shape
    # TODO(synk): BatchNorm uses default running stats (mean 0, var 1, affine id);
    # fold real checkpoint stats into bn_scale / dw bias when porting weights.
    bn_scale = 1.0 / math.sqrt(1.0 + 1e-5)
    consts = [p["pw1a_w"], p["pw1a_b"], p["pw1b_w"], p["pw1b_b"],
              p["dw_w"], p["dw_b"], p["pw2_w"], p["pw2_b"],
              p["ln_conv_g"], p["ln_conv_b"]]
    kern = functools.partial(_conv_module_kernel, K=K, T=T, eps=LN_EPS,
                             bn_scale=bn_scale, roll_dir=roll_dir)
    in_specs = [pl.BlockSpec((1, T, D), lambda b: (b, 0, 0))]
    in_specs += [pl.BlockSpec(c.shape, lambda b, _n=c.ndim: (0,) * _n)
                 for c in consts]
    est = (2 * 2 * T * D * 2 + 3 * T * D * 4
           + sum(int(c.size) * c.dtype.itemsize for c in consts))
    # TODO(synk): add a time-tile grid axis (halo exchange) for very long T.
    return pl.pallas_call(
        kern,
        out_shape=jax.ShapeDtypeStruct((B, T, D), jnp.bfloat16),
        grid=(B,),
        in_specs=in_specs,
        out_specs=pl.BlockSpec((1, T, D), lambda b: (b, 0, 0)),
        compiler_params=_cparams(("parallel",), est),
    )(x, *consts)


# ----------------------------------------------------------------------------
# Conformer glue (positional encoding, forward)
# ----------------------------------------------------------------------------
def rel_pos_emb(T, D):
    """ESPnet RelPositionalEncoding table, shape (2T-1, D)."""
    pos = jnp.arange(T, dtype=jnp.float32)[:, None]
    div = jnp.exp(jnp.arange(0, D, 2, dtype=jnp.float32) * (-(math.log(10000.0) / D)))
    pe_pos = jnp.zeros((T, D), jnp.float32)
    pe_pos = pe_pos.at[:, 0::2].set(jnp.sin(pos * div))
    pe_pos = pe_pos.at[:, 1::2].set(jnp.cos(pos * div))
    pe_neg = jnp.zeros((T, D), jnp.float32)
    pe_neg = pe_neg.at[:, 0::2].set(jnp.sin(-pos * div))
    pe_neg = pe_neg.at[:, 1::2].set(jnp.cos(-pos * div))
    return jnp.concatenate([jnp.flip(pe_pos, axis=0), pe_neg[1:]], axis=0)


def conformer_separator_forward(inp, params, *, heads, cnn_k, nonlinear="relu",
                                roll_dir=1):
    """inp: (B, C, F, T) real features. Returns mask of shape (B, 2, F, T)."""
    B, C, F, T = inp.shape
    D = params["in_ln_g"].shape[1]
    dk = D // heads

    # is_complex(input) is False for real input -> feature = input.
    # (B, C, F, T) -> time-major (B*T, C*F) feature matrix.
    feat = jnp.transpose(inp, (0, 3, 1, 2)).reshape(B * T, C * F).astype(jnp.bfloat16)

    # input layer: Linear -> LayerNorm -> (dropout = id) -> xscale(RelPosEnc)
    h = in_layer(feat, params["in_w"], params["in_b"],
                 params["in_ln_g"], params["in_ln_b"], scale=math.sqrt(D))
    h = h.reshape(B, T, D)

    # Relative positional table: one zero guard row + ESPnet (2T-1, D) table,
    # lane-padded to a multiple of 128 so the in-kernel rel-shift is lane-dense.
    Ppad = _round_up(2 * T, 128)
    pe = rel_pos_emb(T, D)
    pos_ext = jnp.concatenate(
        [jnp.zeros((1, D), jnp.float32), pe,
         jnp.zeros((Ppad - 2 * T, D), jnp.float32)], axis=0)

    # Positional projections for all layers in one lane-dense bf16 matmul.
    wpos_all = jnp.concatenate([blk["wpos"] for blk in params["blocks"]], axis=1)
    zb = jnp.zeros((1, wpos_all.shape[1]), jnp.float32)
    pos_proj_all = linear_act(pos_ext.astype(jnp.bfloat16), wpos_all, zb,
                              act="none", out_dtype=jnp.bfloat16)   # (Ppad, L*D)

    # pad mask is all-true (full-length sequences), so no attention masking.
    for li, blk in enumerate(params["blocks"]):
        pos_l = pos_proj_all[:, li * D:(li + 1) * D]
        pos_l = jnp.transpose(pos_l.reshape(Ppad, heads, dk), (1, 0, 2))  # (H,Ppad,dk)
        # macaron feed-forward + LN
        h = ff_module(h.reshape(B * T, D), blk["ffm_w1"], blk["ffm_b1"],
                      blk["ffm_w2"], blk["ffm_b2"],
                      blk["ln_ffm_g"], blk["ln_ffm_b"]).reshape(B, T, D)
        # rel-pos self-attention + out-proj + residual + LN (one fused kernel)
        h = attn_module(h, pos_l, blk, H=heads, dk=dk, roll_dir=roll_dir)
        # convolution module + residual + LN
        h = conv_module(h, blk, K=cnn_k, roll_dir=roll_dir)
        # feed-forward + LN + final LN
        h = ff_module(h.reshape(B * T, D), blk["ff_w1"], blk["ff_b1"],
                      blk["ff_w2"], blk["ff_b2"], blk["ln_ff_g"], blk["ln_ff_b"],
                      final_ln=(blk["ln_fin_g"], blk["ln_fin_b"])).reshape(B, T, D)

    # mask-estimation head (only masks[0] contributes to the returned mask)
    w0, b0 = params["mask_linears"][0]
    y = linear_act(h.reshape(B * T, D), w0, b0, act=nonlinear,
                   out_dtype=jnp.float32)                              # (B*T, 2F)
    mask = jnp.transpose(y.reshape(B, T, 2 * F), (0, 2, 1)).reshape(B, 2, F, T)
    return mask


# ----------------------------------------------------------------------------
# Deterministic parameter construction (kernel-ready layout)
# ----------------------------------------------------------------------------
def init_params(key, *, idim, ich, adim, heads, units, cnn_k, layers, num_out):
    dk = adim // heads
    keys = iter(jax.random.split(key, 64 * layers + 16))
    bf, f32 = jnp.bfloat16, jnp.float32

    def rnd(shape, dtype=f32, scale=0.1):
        return (jax.random.normal(next(keys), shape, f32) * scale).astype(dtype)

    def ln_pair(n):
        return jnp.ones((1, n), f32), jnp.zeros((1, n), f32)

    in_g, in_be = ln_pair(adim)
    params = {
        "in_w": rnd((idim * ich, adim), bf), "in_b": rnd((1, adim)),
        "in_ln_g": in_g, "in_ln_b": in_be,
        "blocks": [], "mask_linears": [],
    }
    for _ in range(layers):
        g_ffm, b_ffm = ln_pair(adim)
        g_mha, b_mha = ln_pair(adim)
        g_cnv, b_cnv = ln_pair(adim)
        g_ff, b_ff = ln_pair(adim)
        g_fin, b_fin = ln_pair(adim)
        blk = {
            # macaron feed-forward
            "ffm_w1": rnd((adim, units), bf), "ffm_b1": rnd((1, units)),
            "ffm_w2": rnd((units, adim), bf), "ffm_b2": rnd((1, adim)),
            "ln_ffm_g": g_ffm, "ln_ffm_b": b_ffm,
            # rel-pos MHSA, per-head kernel-ready layout (head axis leads)
            "wq": rnd((heads, adim, dk), bf), "bq": rnd((heads, 1, dk)),
            "wk": rnd((heads, adim, dk), bf), "bk": rnd((heads, 1, dk)),
            "wv": rnd((heads, adim, dk), bf), "bv": rnd((heads, 1, dk)),
            "wpos": rnd((adim, adim), bf),
            "att_u": rnd((heads, 1, dk)), "att_v": rnd((heads, 1, dk)),
            "wo": rnd((heads, dk, adim), bf), "bo": rnd((1, adim)),
            "ln_mha_g": g_mha, "ln_mha_b": b_mha,
            # conv module; pw1a / pw1b are value / gate halves of pointwise_conv1
            "pw1a_w": rnd((adim, adim), bf), "pw1a_b": rnd((1, adim)),
            "pw1b_w": rnd((adim, adim), bf), "pw1b_b": rnd((1, adim)),
            "dw_w": rnd((cnn_k, 1, adim)), "dw_b": rnd((1, adim)),
            "pw2_w": rnd((adim, adim), bf), "pw2_b": rnd((1, adim)),
            "ln_conv_g": g_cnv, "ln_conv_b": b_cnv,
            # feed-forward
            "ff_w1": rnd((adim, units), bf), "ff_b1": rnd((1, units)),
            "ff_w2": rnd((units, adim), bf), "ff_b2": rnd((1, adim)),
            "ln_ff_g": g_ff, "ln_ff_b": b_ff,
            "ln_fin_g": g_fin, "ln_fin_b": b_fin,
        }
        params["blocks"].append(blk)
    for _ in range(num_out):
        params["mask_linears"].append((rnd((adim, idim * 2), bf), rnd((1, idim * 2))))
    return params


# ----------------------------------------------------------------------------
if __name__ == "__main__":
    # Small shapes consistent with the module's forward:
    #   input (B, C, F, T); input_dim = F; mask output (B, 2, F, T)
    # NOTE: production configs (adim=384, dk=96) are lane-friendlier; the tiny
    # demo dims (adim=32, dk=8) are functional but under-fill vregs by design.
    B, C, F, T = 2, 1, 8, 16
    ADIM, HEADS, LAYERS, UNITS, CNN_K = 32, 4, 2, 64, 7
    NUM_SPK = 2  # predict_noise=False -> num_outputs == num_spk

    roll_dir = probe_roll_direction()   # strided lane-roll support / sign

    key = jax.random.PRNGKey(0)
    kx, kp = jax.random.split(key)
    x = jax.random.normal(kx, (B, C, F, T), jnp.float32)

    params = init_params(kp, idim=F, ich=C, adim=ADIM, heads=HEADS,
                         units=UNITS, cnn_k=CNN_K, layers=LAYERS,
                         num_out=NUM_SPK)

    fwd = jax.jit(functools.partial(conformer_separator_forward,
                                    heads=HEADS, cnn_k=CNN_K, nonlinear="relu",
                                    roll_dir=roll_dir))
    mask = jax.block_until_ready(fwd(x, params))
    assert mask.shape == (B, 2, F, T), mask.shape
    assert mask.dtype == jnp.float32
    print("KERNEL_OK")
</pallas_src>

<mosaic_0001>
module attributes {stable_mosaic.version = 11 : i64} {
  func.func @_linear_act_kernel(%arg0: i32, %arg1: memref<128x32xbf16, #tpu.memory_space<vmem>>, %arg2: memref<32x64xbf16, #tpu.memory_space<vmem>>, %arg3: memref<1x64xf32, #tpu.memory_space<vmem>>, %arg4: memref<128x64xbf16, #tpu.memory_space<vmem>>) attributes {dimension_semantics = [#tpu.dimension_semantics<parallel>], iteration_bounds = array<i64: 1>, scalar_prefetch = 0 : i64, scratch_operands = 0 : i64, tpu.core_type = #tpu.core_type<tc>, window_params = [{transform_indices = @transform_0, window_bounds = array<i64: 128, 32>}, {pipeline_mode = #tpu.pipeline_mode<synchronous>, transform_indices = @transform_1, window_bounds = array<i64: 32, 64>}, {pipeline_mode = #tpu.pipeline_mode<synchronous>, transform_indices = @transform_2, window_bounds = array<i64: 1, 64>}, {transform_indices = @transform_3, window_bounds = array<i64: 128, 64>}]} {
    %c0 = arith.constant 0 : index
    %c0_0 = arith.constant 0 : index
    %0 = vector.load %arg1[%c0, %c0_0] : memref<128x32xbf16, #tpu.memory_space<vmem>>, vector<128x32xbf16>
    %c0_1 = arith.constant 0 : index
    %c0_2 = arith.constant 0 : index
    %1 = vector.load %arg2[%c0_1, %c0_2] : memref<32x64xbf16, #tpu.memory_space<vmem>>, vector<32x64xbf16>
    %cst = arith.constant dense<0.000000e+00> : vector<128x64xf32>
    %2 = tpu.matmul %0, %1, %cst {dimension_numbers = #tpu.dot_dimension_numbers<[1], [0], [0], [1], [0, 0, 1, 1], [], []>} : vector<128x32xbf16>, vector<32x64xbf16>, vector<128x64xf32> -> vector<128x64xf32>
    %c0_3 = arith.constant 0 : index
    %c0_4 = arith.constant 0 : index
    %3 = vector.load %arg3[%c0_3, %c0_4] : memref<1x64xf32, #tpu.memory_space<vmem>>, vector<1x64xf32>
    %4 = vector.broadcast %3 : vector<1x64xf32> to vector<128x64xf32>
    %5 = arith.addf %2, %4 : vector<128x64xf32>
    %6 = arith.truncf %5 : vector<128x64xf32> to vector<128x64xbf16>
    %c0_5 = arith.constant 0 : index
    %c0_6 = arith.constant 0 : index
    %7 = vector.load %arg4[%c0_5, %c0_6] : memref<128x64xbf16, #tpu.memory_space<vmem>>, vector<128x64xbf16>
    tpu.vector_store %arg4[%c0_5, %c0_6], %6 {strides = array<i32>} : memref<128x64xbf16, #tpu.memory_space<vmem>>, vector<128x64xbf16>,
    return
  }
  func.func @transform_0(%arg0: i32) -> (i32, i32) {
    %c0_i32 = arith.constant 0 : i32
    %c0_i32_0 = arith.constant 0 : i32
    return %arg0, %c0_i32 : i32, i32
  }
  func.func @transform_1(%arg0: i32) -> (i32, i32) {
    %c0_i32 = arith.constant 0 : i32
    %c0_i32_0 = arith.constant 0 : i32
    %c0_i32_1 = arith.constant 0 : i32
    return %c0_i32, %c0_i32_0 : i32, i32
  }
  func.func @transform_2(%arg0: i32) -> (i32, i32) {
    %c0_i32 = arith.constant 0 : i32
    %c0_i32_0 = arith.constant 0 : i32
    %c0_i32_1 = arith.constant 0 : i32
    return %c0_i32, %c0_i32_0 : i32, i32
  }
  func.func @transform_3(%arg0: i32) -> (i32, i32) {
    %c0_i32 = arith.constant 0 : i32
    %c0_i32_0 = arith.constant 0 : i32
    return %arg0, %c0_i32 : i32, i32
  }
}

module attributes {stable_mosaic.version = 11 : i64} {
  func.func @_input_layer_kernel(%arg0: i32, %arg1: memref<32x8xbf16, #tpu.memory_space<vmem>>, %arg2: memref<8x32xbf16, #tpu.memory_space<vmem>>, %arg3: memref<1x32xf32, #tpu.memory_space<vmem>>, %arg4: memref<1x32xf32, #tpu.memory_space<vmem>>, %arg5: memref<1x32xf32, #tpu.memory_space<vmem>>, %arg6: memref<32x32xbf16, #tpu.memory_space<vmem>>) attributes {dimension_semantics = [#tpu.dimension_semantics<parallel>], iteration_bounds = array<i64: 1>, scalar_prefetch = 0 : i64, scratch_operands = 0 : i64, tpu.core_type = #tpu.core_type<tc>, window_params = [{transform_indices = @transform_0, window_bounds = array<i64: 32, 8>}, {pipeline_mode = #tpu.pipeline_mode<synchronous>, transform_indices = @transform_1, window_bounds = array<i64: 8, 32>}, {pipeline_mode = #tpu.pipeline_mode<synchronous>, transform_indices = @transform_2, window_bounds = array<i64: 1, 32>}, {pipeline_mode = #tpu.pipeline_mode<synchronous>, transform_indices = @transform_3, window_bounds = array<i64: 1, 32>}, {pipeline_mode = #tpu.pipeline_mode<synchronous>, transform_indices = @transform_4, window_bounds = array<i64: 1, 32>}, {transform_indices = @transform_5, window_bounds = array<i64: 32, 32>}]} {
    %c0 = arith.constant 0 : index
    %c0_0 = arith.constant 0 : index
    %0 = vector.load %arg1[%c0, %c0_0] : memref<32x8xbf16, #tpu.memory_space<vmem>>, vector<32x8xbf16>
    %c0_1 = arith.constant 0 : index
    %c0_2 = arith.constant 0 : index
    %1 = vector.load %arg2[%c0_1, %c0_2] : memref<8x32xbf16, #tpu.memory_space<vmem>>, vector<8x32xbf16>
    %cst = arith.constant dense<0.000000e+00> : vector<32x32xf32>
    %2 = tpu.matmul %0, %1, %cst {dimension_numbers = #tpu.dot_dimension_numbers<[1], [0], [0], [1], [0, 0, 1, 1], [], []>} : vector<32x8xbf16>, vector<8x32xbf16>, vector<32x32xf32> -> vector<32x32xf32>
    %c0_3 = arith.constant 0 : index
    %c0_4 = arith.constant 0 : index
    %3 = vector.load %arg3[%c0_3, %c0_4] : memref<1x32xf32, #tpu.memory_space<vmem>>, vector<1x32xf32>
    %4 = vector.broadcast %3 : vector<1x32xf32> to vector<32x32xf32>
    %5 = arith.addf %2, %4 : vector<32x32xf32>
    %c0_5 = arith.constant 0 : index
    %c0_6 = arith.constant 0 : index
    %6 = vector.load %arg4[%c0_5, %c0_6] : memref<1x32xf32, #tpu.memory_space<vmem>>, vector<1x32xf32>
    %c0_7 = arith.constant 0 : index
    %c0_8 = arith.constant 0 : index
    %7 = vector.load %arg5[%c0_7, %c0_8] : memref<1x32xf32, #tpu.memory_space<vmem>>, vector<1x32xf32>
    %cst_9 = arith.constant dense<0.000000e+00> : vector<32xf32>
    %8 = vector.multi_reduction <add>, %5, %cst_9 [1] : vector<32x32xf32> to vector<32xf32>
    %9 = vector.shape_cast %8 : vector<32xf32> to vector<32x1xf32>
    %cst_10 = arith.constant 3.200000e+01 : f32
    %10 = vector.broadcast %cst_10 : f32 to vector<32x1xf32>
    %11 = arith.divf %9, %10 : vector<32x1xf32>
    %12 = vector.broadcast %11 : vector<32x1xf32> to vector<32x32xf32>
    %13 = arith.subf %5, %12 : vector<32x32xf32>
    %14 = arith.mulf %13, %13 : vector<32x32xf32>
    %cst_11 = arith.constant dense<0.000000e+00> : vector<32xf32>
    %15 = vector.multi_reduction <add>, %14, %cst_11 [1] : vector<32x32xf32> to vector<32xf32>
    %16 = vector.shape_cast %15 : vector<32xf32> to vector<32x1xf32>
    %cst_12 = arith.constant 3.200000e+01 : f32
    %17 = vector.broadcast %cst_12 : f32 to vector<32x1xf32>
    %18 = arith.divf %16, %17 : vector<32x1xf32>
    %19 = vector.broadcast %11 : vector<32x1xf32> to vector<32x32xf32>
    %20 = arith.subf %5, %19 : vector<32x32xf32>
    %cst_13 = arith.constant 9.99999996E-13 : f32
    %21 = vector.broadcast %cst_13 : f32 to vector<32x1xf32>
    %22 = arith.addf %18, %21 : vector<32x1xf32>
    %23 = math.rsqrt %22 : vector<32x1xf32>
    %24 = vector.broadcast %23 : vector<32x1xf32> to vector<32x32xf32>
    %25 = arith.mulf %20, %24 : vector<32x32xf32>
    %26 = vector.broadcast %6 : vector<1x32xf32> to vector<32x32xf32>
    %27 = arith.mulf %25, %26 : vector<32x32xf32>
    %28 = vector.broadcast %7 : vector<1x32xf32> to vector<32x32xf32>
    %29 = arith.addf %27, %28 : vector<32x32xf32>
    %cst_14 = arith.constant 5.65685415 : f32
    %30 = vector.broadcast %cst_14 : f32 to vector<32x32xf32>
    %31 = arith.mulf %29, %30 : vector<32x32xf32>
    %32 = arith.truncf %31 : vector<32x32xf32> to vector<32x32xbf16>
    %c0_15 = arith.constant 0 : index
    %c0_16 = arith.constant 0 : index
    %33 = vector.load %arg6[%c0_15, %c0_16] : memref<32x32xbf16, #tpu.memory_space<vmem>>, vector<32x32xbf16>
    tpu.vector_store %arg6[%c0_15, %c0_16], %32 {strides = array<i32>} : memref<32x32xbf16, #tpu.memory_space<vmem>>, vector<32x32xbf16>,
    return
  }
  func.func @transform_0(%arg0: i32) -> (i32, i32) {
    %c0_i32 = arith.constant 0 : i32
    %c0_i32_0 = arith.constant 0 : i32
    return %arg0, %c0_i32 : i32, i32
  }
  func.func @transform_1(%arg0: i32) -> (i32, i32) {
    %c0_i32 = arith.constant 0 : i32
    %c0_i32_0 = arith.constant 0 : i32
    %c0_i32_1 = arith.constant 0 : i32
    return %c0_i32, %c0_i32_0 : i32, i32
  }
  func.func @transform_2(%arg0: i32) -> (i32, i32) {
    %c0_i32 = arith.constant 0 : i32
    %c0_i32_0 = arith.constant 0 : i32
    %c0_i32_1 = arith.constant 0 : i32
    return %c0_i32, %c0_i32_0 : i32, i32
  }
  func.func @transform_3(%arg0: i32) -> (i32, i32) {
    %c0_i32 = arith.constant 0 : i32
    %c0_i32_0 = arith.constant 0 : i32
    %c0_i32_1 = arith.constant 0 : i32
    return %c0_i32, %c0_i32_0 : i32, i32
  }
  func.func @transform_4(%arg0: i32) -> (i32, i32) {
    %c0_i32 = arith.constant 0 : i32
    %c0_i32_0 = arith.constant 0 : i32
    %c0_i32_1 = arith.constant 0 : i32
    return %c0_i32, %c0_i32_0 : i32, i32
  }
  func.func @transform_5(%arg0: i32) -> (i32, i32) {
    %c0_i32 = arith.constant 0 : i32
    %c0_i32_0 = arith.constant 0 : i32
    return %arg0, %c0_i32 : i32, i32
  }
}

module attributes {stable_mosaic.version = 11 : i64} {
  func.func @_ff_module_kernel(%arg0: i32, %arg1: memref<32x32xbf16, #tpu.memory_space<vmem>>, %arg2: memref<32x64xbf16, #tpu.memory_space<vmem>>, %arg3: memref<1x64xf32, #tpu.memory_space<vmem>>, %arg4: memref<64x32xbf16, #tpu.memory_space<vmem>>, %arg5: memref<1x32xf32, #tpu.memory_space<vmem>>, %arg6: memref<1x32xf32, #tpu.memory_space<vmem>>, %arg7: memref<1x32xf32, #tpu.memory_space<vmem>>, %arg8: memref<32x32xbf16, #tpu.memory_space<vmem>>) attributes {dimension_semantics = [#tpu.dimension_semantics<parallel>], iteration_bounds = array<i64: 1>, scalar_prefetch = 0 : i64, scratch_operands = 0 : i64, tpu.core_type = #tpu.core_type<tc>, window_params = [{transform_indices = @transform_0, window_bounds = array<i64: 32, 32>}, {pipeline_mode = #tpu.pipeline_mode<synchronous>, transform_indices = @transform_1, window_bounds = array<i64: 32, 64>}, {pipeline_mode = #tpu.pipeline_mode<synchronous>, transform_indices = @transform_2, window_bounds = array<i64: 1, 64>}, {pipeline_mode = #tpu.pipeline_mode<synchronous>, transform_indices = @transform_3, window_bounds = array<i64: 64, 32>}, {pipeline_mode = #tpu.pipeline_mode<synchronous>, transform_indices = @transform_4, window_bounds = array<i64: 1, 32>}, {pipeline_mode = #tpu.pipeline_mode<synchronous>, transform_indices = @transform_5, window_bounds = array<i64: 1, 32>}, {pipeline_mode = #tpu.pipeline_mode<synchronous>, transform_indices = @transform_6, window_bounds = array<i64: 1, 32>}, {transform_indices = @transform_7, window_bounds = array<i64: 32, 32>}]} {
    %c0 = arith.constant 0 : index
    %c0_0 = arith.constant 0 : index
    %0 = vector.load %arg1[%c0, %c0_0] : memref<32x32xbf16, #tpu.memory_space<vmem>>, vector<32x32xbf16>
    %c0_1 = arith.constant 0 : index
    %c0_2 = arith.constant 0 : index
    %1 = vector.load %arg2[%c0_1, %c0_2] : memref<32x64xbf16, #tpu.memory_space<vmem>>, vector<32x64xbf16>
    %cst = arith.constant dense<0.000000e+00> : vector<32x64xf32>
    %2 = tpu.matmul %0, %1, %cst {dimension_numbers = #tpu.dot_dimension_numbers<[1], [0], [0], [1], [0, 0, 1, 1], [], []>} : vector<32x32xbf16>, vector<32x64xbf16>, vector<32x64xf32> -> vector<32x64xf32>
    %c0_3 = arith.constant 0 : index
    %c0_4 = arith.constant 0 : index
    %3 = vector.load %arg3[%c0_3, %c0_4] : memref<1x64xf32, #tpu.memory_space<vmem>>, vector<1x64xf32>
    %4 = vector.broadcast %3 : vector<1x64xf32> to vector<32x64xf32>
    %5 = arith.addf %2, %4 : vector<32x64xf32>
    %cst_5 = arith.constant 0.000000e+00 : f32
    %6 = vector.broadcast %cst_5 : f32 to vector<32x64xf32>
    %7 = arith.subf %6, %5 : vector<32x64xf32>
    %8 = math.exp %7 : vector<32x64xf32>
    %cst_6 = arith.constant 1.000000e+00 : f32
    %9 = vector.broadcast %cst_6 : f32 to vector<32x64xf32>
    %10 = arith.addf %9, %8 : vector<32x64xf32>
    %11 = tpu.reciprocal %10 {approx = true} : vector<32x64xf32> -> vector<32x64xf32>
    %12 = arith.mulf %5, %11 : vector<32x64xf32>
    %13 = arith.truncf %12 : vector<32x64xf32> to vector<32x64xbf16>
    %c0_7 = arith.constant 0 : index
    %c0_8 = arith.constant 0 : index
    %14 = vector.load %arg4[%c0_7, %c0_8] : memref<64x32xbf16, #tpu.memory_space<vmem>>, vector<64x32xbf16>
    %cst_9 = arith.constant dense<0.000000e+00> : vector<32x32xf32>
    %15 = tpu.matmul %13, %14, %cst_9 {dimension_numbers = #tpu.dot_dimension_numbers<[1], [0], [0], [1], [0, 0, 1, 1], [], []>} : vector<32x64xbf16>, vector<64x32xbf16>, vector<32x32xf32> -> vector<32x32xf32>
    %c0_10 = arith.constant 0 : index
    %c0_11 = arith.constant 0 : index
    %16 = vector.load %arg5[%c0_10, %c0_11] : memref<1x32xf32, #tpu.memory_space<vmem>>, vector<1x32xf32>
    %17 = vector.broadcast %16 : vector<1x32xf32> to vector<32x32xf32>
    %18 = arith.addf %15, %17 : vector<32x32xf32>
    %19 = arith.extf %0 : vector<32x32xbf16> to vector<32x32xf32>
    %cst_12 = arith.constant 5.000000e-01 : f32
    %20 = vector.broadcast %cst_12 : f32 to vector<32x32xf32>
    %21 = arith.mulf %20, %18 : vector<32x32xf32>
    %22 = arith.addf %19, %21 : vector<32x32xf32>
    %c0_13 = arith.constant 0 : index
    %c0_14 = arith.constant 0 : index
    %23 = vector.load %arg6[%c0_13, %c0_14] : memref<1x32xf32, #tpu.memory_space<vmem>>, vector<1x32xf32>
    %c0_15 = arith.constant 0 : index
    %c0_16 = arith.constant 0 : index
    %24 = vector.load %arg7[%c0_15, %c0_16] : memref<1x32xf32, #tpu.memory_space<vmem>>, vector<1x32xf32>
    %cst_17 = arith.constant dense<0.000000e+00> : vector<32xf32>
    %25 = vector.multi_reduction <add>, %22, %cst_17 [1] : vector<32x32xf32> to vector<32xf32>
    %26 = vector.shape_cast %25 : vector<32xf32> to vector<32x1xf32>
    %cst_18 = arith.constant 3.200000e+01 : f32
    %27 = vector.broadcast %cst_18 : f32 to vector<32x1xf32>
    %28 = arith.divf %26, %27 : vector<32x1xf32>
    %29 = vector.broadcast %28 : vector<32x1xf32> to vector<32x32xf32>
    %30 = arith.subf %22, %29 : vector<32x32xf32>
    %31 = arith.mulf %30, %30 : vector<32x32xf32>
    %cst_19 = arith.constant dense<0.000000e+00> : vector<32xf32>
    %32 = vector.multi_reduction <add>, %31, %cst_19 [1] : vector<32x32xf32> to vector<32xf32>
    %33 = vector.shape_cast %32 : vector<32xf32> to vector<32x1xf32>
    %cst_20 = arith.constant 3.200000e+01 : f32
    %34 = vector.broadcast %cst_20 : f32 to vector<32x1xf32>
    %35 = arith.divf %33, %34 : vector<32x1xf32>
    %36 = vector.broadcast %28 : vector<32x1xf32> to vector<32x32xf32>
    %37 = arith.subf %22, %36 : vector<32x32xf32>
    %cst_21 = arith.constant 9.99999996E-13 : f32
    %38 = vector.broadcast %cst_21 : f32 to vector<32x1xf32>
    %39 = arith.addf %35, %38 : vector<32x1xf32>
    %40 = math.rsqrt %39 : vector<32x1xf32>
    %41 = vector.broadcast %40 : vector<32x1xf32> to vector<32x32xf32>
    %42 = arith.mulf %37, %41 : vector<32x32xf32>
    %43 = vector.broadcast %23 : vector<1x32xf32> to vector<32x32xf32>
    %44 = arith.mulf %42, %43 : vector<32x32xf32>
    %45 = vector.broadcast %24 : vector<1x32xf32> to vector<32x32xf32>
    %46 = arith.addf %44, %45 : vector<32x32xf32>
    %47 = arith.truncf %46 : vector<32x32xf32> to vector<32x32xbf16>
    %c0_22 = arith.constant 0 : index
    %c0_23 = arith.constant 0 : index
    %48 = vector.load %arg8[%c0_22, %c0_23] : memref<32x32xbf16, #tpu.memory_space<vmem>>, vector<32x32xbf16>
    tpu.vector_store %arg8[%c0_22, %c0_23], %47 {strides = array<i32>} : memref<32x32xbf16, #tpu.memory_space<vmem>>, vector<32x32xbf16>,
    return
  }
  func.func @transform_0(%arg0: i32) -> (i32, i32) {
    %c0_i32 = arith.constant 0 : i32
    %c0_i32_0 = arith.constant 0 : i32
    return %arg0, %c0_i32 : i32, i32
  }
  func.func @transform_1(%arg0: i32) -> (i32, i32) {
    %c0_i32 = arith.constant 0 : i32
    %c0_i32_0 = arith.constant 0 : i32
    %c0_i32_1 = arith.constant 0 : i32
    return %c0_i32, %c0_i32_0 : i32, i32
  }
  func.func @transform_2(%arg0: i32) -> (i32, i32) {
    %c0_i32 = arith.constant 0 : i32
    %c0_i32_0 = arith.constant 0 : i32
    %c0_i32_1 = arith.constant 0 : i32
    return %c0_i32, %c0_i32_0 : i32, i32
  }
  func.func @transform_3(%arg0: i32) -> (i32, i32) {
    %c0_i32 = arith.constant 0 : i32
    %c0_i32_0 = arith.constant 0 : i32
    %c0_i32_1 = arith.constant 0 : i32
    return %c0_i32, %c0_i32_0 : i32, i32
  }
  func.func @transform_4(%arg0: i32) -> (i32, i32) {
    %c0_i32 = arith.constant 0 : i32
    %c0_i32_0 = arith.constant 0 : i32
    %c0_i32_1 = arith.constant 0 : i32
    return %c0_i32, %c0_i32_0 : i32, i32
  }
  func.func @transform_5(%arg0: i32) -> (i32, i32) {
    %c0_i32 = arith.constant 0 : i32
    %c0_i32_0 = arith.constant 0 : i32
    %c0_i32_1 = arith.constant 0 : i32
    return %c0_i32, %c0_i32_0 : i32, i32
  }
  func.func @transform_6(%arg0: i32) -> (i32, i32) {
    %c0_i32 = arith.constant 0 : i32
    %c0_i32_0 = arith.constant 0 : i32
    %c0_i32_1 = arith.constant 0 : i32
    return %c0_i32, %c0_i32_0 : i32, i32
  }
  func.func @transform_7(%arg0: i32) -> (i32, i32) {
    %c0_i32 = arith.constant 0 : i32
    %c0_i32_0 = arith.constant 0 : i32
    return %arg0, %c0_i32 : i32, i32
  }
}

module attributes {stable_mosaic.version = 11 : i64} {
  func.func @_attn_block_kernel(%arg0: i32, %arg1: i32, %arg2: i32, %arg3: memref<1x16x32xbf16, #tpu.memory_space<vmem>>, %arg4: memref<1x32x8xbf16, #tpu.memory_space<vmem>>, %arg5: memref<1x32x8xbf16, #tpu.memory_space<vmem>>, %arg6: memref<1x32x8xbf16, #tpu.memory_space<vmem>>, %arg7: memref<1x1x8xf32, #tpu.memory_space<vmem>>, %arg8: memref<1x1x8xf32, #tpu.memory_space<vmem>>, %arg9: memref<1x1x8xf32, #tpu.memory_space<vmem>>, %arg10: memref<1x1x8xf32, #tpu.memory_space<vmem>>, %arg11: memref<1x1x8xf32, #tpu.memory_space<vmem>>, %arg12: memref<1x128x8xbf16, #tpu.memory_space<vmem>>, %arg13: memref<1x8x32xbf16, #tpu.memory_space<vmem>>, %arg14: memref<1x32xf32, #tpu.memory_space<vmem>>, %arg15: memref<1x32xf32, #tpu.memory_space<vmem>>, %arg16: memref<1x32xf32, #tpu.memory_space<vmem>>, %arg17: memref<1x16x32xbf16, #tpu.memory_space<vmem>>, %arg18: memref<16x32xf32, #tpu.memory_space<vmem>>) attributes {dimension_semantics = [#tpu.dimension_semantics<parallel>, #tpu.dimension_semantics<parallel>, #tpu.dimension_semantics<arbitrary>], iteration_bounds = array<i64: 2, 1, 4>, scalar_prefetch = 0 : i64, scratch_operands = 1 : i64, tpu.core_type = #tpu.core_type<tc>, window_params = [{transform_indices = @transform_0, window_bounds = array<i64: 1, 16, 32>}, {transform_indices = @transform_1, window_bounds = array<i64: 1, 32, 8>}, {transform_indices = @transform_2, window_bounds = array<i64: 1, 32, 8>}, {transform_indices = @transform_3, window_bounds = array<i64: 1, 32, 8>}, {transform_indices = @transform_4, window_bounds = array<i64: 1, 1, 8>}, {transform_indices = @transform_5, window_bounds = array<i64: 1, 1, 8>}, {transform_indices = @transform_6, window_bounds = array<i64: 1, 1, 8>}, {transform_indices = @transform_7, window_bounds = array<i64: 1, 1, 8>}, {transform_indices = @transform_8, window_bounds = array<i64: 1, 1, 8>}, {transform_indices = @transform_9, window_bounds = array<i64: 1, 128, 8>}, {transform_indices = @transform_10, window_bounds = array<i64: 1, 8, 32>}, {pipeline_mode = #tpu.pipeline_mode<synchronous>, transform_indices = @transform_11, window_bounds = array<i64: 1, 32>}, {pipeline_mode = #tpu.pipeline_mode<synchronous>, transform_indices = @transform_12, window_bounds = array<i64: 1, 32>}, {pipeline_mode = #tpu.pipeline_mode<synchronous>, transform_indices = @transform_13, window_bounds = array<i64: 1, 32>}, {transform_indices = @transform_14, window_bounds = array<i64: 1, 16, 32>}]} {
    %c0_i32 = arith.constant 0 : i32
    %0 = arith.cmpi eq, %arg2, %c0_i32 : i32
    %1 = arith.extui %0 : i1 to i32
    %c0_i32_0 = arith.constant 0 : i32
    %2 = arith.cmpi ne, %1, %c0_i32_0 : i32
    scf.if %2 {
      %cst_53 = arith.constant 0.000000e+00 : f32
      %167 = vector.broadcast %cst_53 : f32 to vector<16x32xf32>
      %c0_54 = arith.constant 0 : index
      %c0_55 = arith.constant 0 : index
      %168 = vector.load %arg18[%c0_54, %c0_55] : memref<16x32xf32, #tpu.memory_space<vmem>>, vector<16x32xf32>
      tpu.vector_store %arg18[%c0_54, %c0_55], %167 {strides = array<i32>} : memref<16x32xf32, #tpu.memory_space<vmem>>, vector<16x32xf32>,
    } else {
    }
    %c0 = arith.constant 0 : index
    %c0_1 = arith.constant 0 : index
    %c0_2 = arith.constant 0 : index
    %3 = vector.load %arg3[%c0, %c0_1, %c0_2] : memref<1x16x32xbf16, #tpu.memory_space<vmem>>, vector<1x16x32xbf16>
    %4 = vector.shape_cast %3 : vector<1x16x32xbf16> to vector<16x32xbf16>
    %c0_3 = arith.constant 0 : index
    %c0_4 = arith.constant 0 : index
    %c0_5 = arith.constant 0 : index
    %5 = vector.load %arg3[%c0_3, %c0_4, %c0_5] : memref<1x16x32xbf16, #tpu.memory_space<vmem>>, vector<1x16x32xbf16>
    %6 = vector.shape_cast %5 : vector<1x16x32xbf16> to vector<16x32xbf16>
    %c0_6 = arith.constant 0 : index
    %c0_7 = arith.constant 0 : index
    %c0_8 = arith.constant 0 : index
    %7 = vector.load %arg4[%c0_6, %c0_7, %c0_8] : memref<1x32x8xbf16, #tpu.memory_space<vmem>>, vector<1x32x8xbf16>
    %8 = vector.shape_cast %7 : vector<1x32x8xbf16> to vector<32x8xbf16>
    %cst = arith.constant dense<0.000000e+00> : vector<16x8xf32>
    %9 = tpu.matmul %6, %8, %cst {dimension_numbers = #tpu.dot_dimension_numbers<[1], [0], [0], [1], [0, 0, 1, 1], [], []>} : vector<16x32xbf16>, vector<32x8xbf16>, vector<16x8xf32> -> vector<16x8xf32>
    %c0_9 = arith.constant 0 : index
    %c0_10 = arith.constant 0 : index
    %c0_11 = arith.constant 0 : index
    %10 = vector.load %arg7[%c0_9, %c0_10, %c0_11] : memref<1x1x8xf32, #tpu.memory_space<vmem>>, vector<1x1x8xf32>
    %11 = vector.shape_cast %10 : vector<1x1x8xf32> to vector<1x8xf32>
    %12 = vector.broadcast %11 : vector<1x8xf32> to vector<16x8xf32>
    %13 = arith.addf %9, %12 : vector<16x8xf32>
    %c0_12 = arith.constant 0 : index
    %c0_13 = arith.constant 0 : index
    %c0_14 = arith.constant 0 : index
    %14 = vector.load %arg5[%c0_12, %c0_13, %c0_14] : memref<1x32x8xbf16, #tpu.memory_space<vmem>>, vector<1x32x8xbf16>
    %15 = vector.shape_cast %14 : vector<1x32x8xbf16> to vector<32x8xbf16>
    %cst_15 = arith.constant dense<0.000000e+00> : vector<16x8xf32>
    %16 = tpu.matmul %4, %15, %cst_15 {dimension_numbers = #tpu.dot_dimension_numbers<[1], [0], [0], [1], [0, 0, 1, 1], [], []>} : vector<16x32xbf16>, vector<32x8xbf16>, vector<16x8xf32> -> vector<16x8xf32>
    %c0_16 = arith.constant 0 : index
    %c0_17 = arith.constant 0 : index
    %c0_18 = arith.constant 0 : index
    %17 = vector.load %arg8[%c0_16, %c0_17, %c0_18] : memref<1x1x8xf32, #tpu.memory_space<vmem>>, vector<1x1x8xf32>
    %18 = vector.shape_cast %17 : vector<1x1x8xf32> to vector<1x8xf32>
    %19 = vector.broadcast %18 : vector<1x8xf32> to vector<16x8xf32>
    %20 = arith.addf %16, %19 : vector<16x8xf32>
    %c0_19 = arith.constant 0 : index
    %c0_20 = arith.constant 0 : index
    %c0_21 = arith.constant 0 : index
    %21 = vector.load %arg6[%c0_19, %c0_20, %c0_21] : memref<1x32x8xbf16, #tpu.memory_space<vmem>>, vector<1x32x8xbf16>
    %22 = vector.shape_cast %21 : vector<1x32x8xbf16> to vector<32x8xbf16>
    %cst_22 = arith.constant dense<0.000000e+00> : vector<16x8xf32>
    %23 = tpu.matmul %4, %22, %cst_22 {dimension_numbers = #tpu.dot_dimension_numbers<[1], [0], [0], [1], [0, 0, 1, 1], [], []>} : vector<16x32xbf16>, vector<32x8xbf16>, vector<16x8xf32> -> vector<16x8xf32>
    %c0_23 = arith.constant 0 : index
    %c0_24 = arith.constant 0 : index
    %c0_25 = arith.constant 0 : index
    %24 = vector.load %arg9[%c0_23, %c0_24, %c0_25] : memref<1x1x8xf32, #tpu.memory_space<vmem>>, vector<1x1x8xf32>
    %25 = vector.shape_cast %24 : vector<1x1x8xf32> to vector<1x8xf32>
    %26 = vector.broadcast %25 : vector<1x8xf32> to vector<16x8xf32>
    %27 = arith.addf %23, %26 : vector<16x8xf32>
    %c0_26 = arith.constant 0 : index
    %c0_27 = arith.constant 0 : index
    %c0_28 = arith.constant 0 : index
    %28 = vector.load %arg10[%c0_26, %c0_27, %c0_28] : memref<1x1x8xf32, #tpu.memory_space<vmem>>, vector<1x1x8xf32>
    %29 = vector.shape_cast %28 : vector<1x1x8xf32> to vector<1x8xf32>
    %30 = vector.broadcast %29 : vector<1x8xf32> to vector<16x8xf32>
    %31 = arith.addf %13, %30 : vector<16x8xf32>
    %32 = arith.truncf %31 : vector<16x8xf32> to vector<16x8xbf16>
    %c0_29 = arith.constant 0 : index
    %c0_30 = arith.constant 0 : index
    %c0_31 = arith.constant 0 : index
    %33 = vector.load %arg11[%c0_29, %c0_30, %c0_31] : memref<1x1x8xf32, #tpu.memory_space<vmem>>, vector<1x1x8xf32>
    %34 = vector.shape_cast %33 : vector<1x1x8xf32> to vector<1x8xf32>
    %35 = vector.broadcast %34 : vector<1x8xf32> to vector<16x8xf32>
    %36 = arith.addf %13, %35 : vector<16x8xf32>
    %37 = arith.truncf %36 : vector<16x8xf32> to vector<16x8xbf16>
    %38 = arith.truncf %20 : vector<16x8xf32> to vector<16x8xbf16>
    %39 = arith.truncf %27 : vector<16x8xf32> to vector<16x8xbf16>
    %cst_32 = arith.constant dense<0.000000e+00> : vector<16x16xf32>
    %40 = tpu.matmul %32, %38, %cst_32 {dimension_numbers = #tpu.dot_dimension_numbers<[1], [1], [0], [0], [0, 0, 1, 0], [], []>} : vector<16x8xbf16>, vector<16x8xbf16>, vector<16x16xf32> -> vector<16x16xf32>
    %c0_33 = arith.constant 0 : index
    %c0_34 = arith.constant 0 : index
    %c0_35 = arith.constant 0 : index
    %41 = vector.load %arg12[%c0_33, %c0_34, %c0_35] : memref<1x128x8xbf16, #tpu.memory_space<vmem>>, vector<1x128x8xbf16>
    %42 = vector.shape_cast %41 : vector<1x128x8xbf16> to vector<128x8xbf16>
    %cst_36 = arith.constant dense<0.000000e+00> : vector<16x128xf32>
    %43 = tpu.matmul %37, %42, %cst_36 {dimension_numbers = #tpu.dot_dimension_numbers<[1], [1], [0], [0], [0, 0, 1, 0], [], []>} : vector<16x8xbf16>, vector<128x8xbf16>, vector<16x128xf32> -> vector<16x128xf32>
    %44 = tpu.iota {dimensions = array<i32: 0>} : vector<16x16xi32>
    %cst_37 = arith.constant 0.000000e+00 : f32
    %45 = vector.broadcast %cst_37 : f32 to vector<16x16xf32>
    %c0_i32_38 = arith.constant 0 : i32
    %46 = vector.broadcast %c0_i32_38 : i32 to vector<16x16xi32>
    %47 = arith.cmpi eq, %44, %46 : vector<16x16xi32>
    %48 = vector.extract_strided_slice %43 {offsets = [0, 16], sizes = [1, 16], strides = [1, 1]} : vector<16x128xf32> to vector<1x16xf32>
    %49 = vector.shape_cast %48 : vector<1x16xf32> to vector<1x16xf32>
    %50 = vector.broadcast %49 : vector<1x16xf32> to vector<16x16xf32>
    %51 = arith.select %47, %50, %45 : vector<16x16xi1>, vector<16x16xf32>
    %c1_i32 = arith.constant 1 : i32
    %52 = vector.broadcast %c1_i32 : i32 to vector<16x16xi32>
    %53 = arith.cmpi eq, %44, %52 : vector<16x16xi32>
    %54 = vector.extract_strided_slice %43 {offsets = [1, 15], sizes = [1, 16], strides = [1, 1]} : vector<16x128xf32> to vector<1x16xf32>
    %55 = vector.shape_cast %54 : vector<1x16xf32> to vector<1x16xf32>
    %56 = vector.broadcast %55 : vector<1x16xf32> to vector<16x16xf32>
    %57 = arith.select %53, %56, %51 : vector<16x16xi1>, vector<16x16xf32>
    %c2_i32 = arith.constant 2 : i32
    %58 = vector.broadcast %c2_i32 : i32 to vector<16x16xi32>
    %59 = arith.cmpi eq, %44, %58 : vector<16x16xi32>
    %60 = vector.extract_strided_slice %43 {offsets = [2, 14], sizes = [1, 16], strides = [1, 1]} : vector<16x128xf32> to vector<1x16xf32>
    %61 = vector.shape_cast %60 : vector<1x16xf32> to vector<1x16xf32>
    %62 = vector.broadcast %61 : vector<1x16xf32> to vector<16x16xf32>
    %63 = arith.select %59, %62, %57 : vector<16x16xi1>, vector<16x16xf32>
    %c3_i32 = arith.constant 3 : i32
    %64 = vector.broadcast %c3_i32 : i32 to vector<16x16xi32>
    %65 = arith.cmpi eq, %44, %64 : vector<16x16xi32>
    %66 = vector.extract_strided_slice %43 {offsets = [3, 13], sizes = [1, 16], strides = [1, 1]} : vector<16x128xf32> to vector<1x16xf32>
    %67 = vector.shape_cast %66 : vector<1x16xf32> to vector<1x16xf32>
    %68 = vector.broadcast %67 : vector<1x16xf32> to vector<16x16xf32>
    %69 = arith.select %65, %68, %63 : vector<16x16xi1>, vector<16x16xf32>
    %c4_i32 = arith.constant 4 : i32
    %70 = vector.broadcast %c4_i32 : i32 to vector<16x16xi32>
    %71 = arith.cmpi eq, %44, %70 : vector<16x16xi32>
    %72 = vector.extract_strided_slice %43 {offsets = [4, 12], sizes = [1, 16], strides = [1, 1]} : vector<16x128xf32> to vector<1x16xf32>
    %73 = vector.shape_cast %72 : vector<1x16xf32> to vector<1x16xf32>
    %74 = vector.broadcast %73 : vector<1x16xf32> to vector<16x16xf32>
    %75 = arith.select %71, %74, %69 : vector<16x16xi1>, vector<16x16xf32>
    %c5_i32 = arith.constant 5 : i32
    %76 = vector.broadcast %c5_i32 : i32 to vector<16x16xi32>
    %77 = arith.cmpi eq, %44, %76 : vector<16x16xi32>
    %78 = vector.extract_strided_slice %43 {offsets = [5, 11], sizes = [1, 16], strides = [1, 1]} : vector<16x128xf32> to vector<1x16xf32>
    %79 = vector.shape_cast %78 : vector<1x16xf32> to vector<1x16xf32>
    %80 = vector.broadcast %79 : vector<1x16xf32> to vector<16x16xf32>
    %81 = arith.select %77, %80, %75 : vector<16x16xi1>, vector<16x16xf32>
    %c6_i32 = arith.constant 6 : i32
    %82 = vector.broadcast %c6_i32 : i32 to vector<16x16xi32>
    %83 = arith.cmpi eq, %44, %82 : vector<16x16xi32>
    %84 = vector.extract_strided_slice %43 {offsets = [6, 10], sizes = [1, 16], strides = [1, 1]} : vector<16x128xf32> to vector<1x16xf32>
    %85 = vector.shape_cast %84 : vector<1x16xf32> to vector<1x16xf32>
    %86 = vector.broadcast %85 : vector<1x16xf32> to vector<16x16xf32>
    %87 = arith.select %83, %86, %81 : vector<16x16xi1>, vector<16x16xf32>
    %c7_i32 = arith.constant 7 : i32
    %88 = vector.broadcast %c7_i32 : i32 to vector<16x16xi32>
    %89 = arith.cmpi eq, %44, %88 : vector<16x16xi32>
    %90 = vector.extract_strided_slice %43 {offsets = [7, 9], sizes = [1, 16], strides = [1, 1]} : vector<16x128xf32> to vector<1x16xf32>
    %91 = vector.shape_cast %90 : vector<1x16xf32> to vector<1x16xf32>
    %92 = vector.broadcast %91 : vector<1x16xf32> to vector<16x16xf32>
    %93 = arith.select %89, %92, %87 : vector<16x16xi1>, vector<16x16xf32>
    %c8_i32 = arith.constant 8 : i32
    %94 = vector.broadcast %c8_i32 : i32 to vector<16x16xi32>
    %95 = arith.cmpi eq, %44, %94 : vector<16x16xi32>
    %96 = vector.extract_strided_slice %43 {offsets = [8, 8], sizes = [1, 16], strides = [1, 1]} : vector<16x128xf32> to vector<1x16xf32>
    %97 = vector.shape_cast %96 : vector<1x16xf32> to vector<1x16xf32>
    %98 = vector.broadcast %97 : vector<1x16xf32> to vector<16x16xf32>
    %99 = arith.select %95, %98, %93 : vector<16x16xi1>, vector<16x16xf32>
    %c9_i32 = arith.constant 9 : i32
    %100 = vector.broadcast %c9_i32 : i32 to vector<16x16xi32>
    %101 = arith.cmpi eq, %44, %100 : vector<16x16xi32>
    %102 = vector.extract_strided_slice %43 {offsets = [9, 7], sizes = [1, 16], strides = [1, 1]} : vector<16x128xf32> to vector<1x16xf32>
    %103 = vector.shape_cast %102 : vector<1x16xf32> to vector<1x16xf32>
    %104 = vector.broadcast %103 : vector<1x16xf32> to vector<16x16xf32>
    %105 = arith.select %101, %104, %99 : vector<16x16xi1>, vector<16x16xf32>
    %c10_i32 = arith.constant 10 : i32
    %106 = vector.broadcast %c10_i32 : i32 to vector<16x16xi32>
    %107 = arith.cmpi eq, %44, %106 : vector<16x16xi32>
    %108 = vector.extract_strided_slice %43 {offsets = [10, 6], sizes = [1, 16], strides = [1, 1]} : vector<16x128xf32> to vector<1x16xf32>
    %109 = vector.shape_cast %108 : vector<1x16xf32> to vector<1x16xf32>
    %110 = vector.broadcast %109 : vector<1x16xf32> to vector<16x16xf32>
    %111 = arith.select %107, %110, %105 : vector<16x16xi1>, vector<16x16xf32>
    %c11_i32 = arith.constant 11 : i32
    %112 = vector.broadcast %c11_i32 : i32 to vector<16x16xi32>
    %113 = arith.cmpi eq, %44, %112 : vector<16x16xi32>
    %114 = vector.extract_strided_slice %43 {offsets = [11, 5], sizes = [1, 16], strides = [1, 1]} : vector<16x128xf32> to vector<1x16xf32>
    %115 = vector.shape_cast %114 : vector<1x16xf32> to vector<1x16xf32>
    %116 = vector.broadcast %115 : vector<1x16xf32> to vector<16x16xf32>
    %117 = arith.select %113, %116, %111 : vector<16x16xi1>, vector<16x16xf32>
    %c12_i32 = arith.constant 12 : i32
    %118 = vector.broadcast %c12_i32 : i32 to vector<16x16xi32>
    %119 = arith.cmpi eq, %44, %118 : vector<16x16xi32>
    %120 = vector.extract_strided_slice %43 {offsets = [12, 4], sizes = [1, 16], strides = [1, 1]} : vector<16x128xf32> to vector<1x16xf32>
    %121 = vector.shape_cast %120 : vector<1x16xf32> to vector<1x16xf32>
    %122 = vector.broadcast %121 : vector<1x16xf32> to vector<16x16xf32>
    %123 = arith.select %119, %122, %117 : vector<16x16xi1>, vector<16x16xf32>
    %c13_i32 = arith.constant 13 : i32
    %124 = vector.broadcast %c13_i32 : i32 to vector<16x16xi32>
    %125 = arith.cmpi eq, %44, %124 : vector<16x16xi32>
    %126 = vector.extract_strided_slice %43 {offsets = [13, 3], sizes = [1, 16], strides = [1, 1]} : vector<16x128xf32> to vector<1x16xf32>
    %127 = vector.shape_cast %126 : vector<1x16xf32> to vector<1x16xf32>
    %128 = vector.broadcast %127 : vector<1x16xf32> to vector<16x16xf32>
    %129 = arith.select %125, %128, %123 : vector<16x16xi1>, vector<16x16xf32>
    %c14_i32 = arith.constant 14 : i32
    %130 = vector.broadcast %c14_i32 : i32 to vector<16x16xi32>
    %131 = arith.cmpi eq, %44, %130 : vector<16x16xi32>
    %132 = vector.extract_strided_slice %43 {offsets = [14, 2], sizes = [1, 16], strides = [1, 1]} : vector<16x128xf32> to vector<1x16xf32>
    %133 = vector.shape_cast %132 : vector<1x16xf32> to vector<1x16xf32>
    %134 = vector.broadcast %133 : vector<1x16xf32> to vector<16x16xf32>
    %135 = arith.select %131, %134, %129 : vector<16x16xi1>, vector<16x16xf32>
    %c15_i32 = arith.constant 15 : i32
    %136 = vector.broadcast %c15_i32 : i32 to vector<16x16xi32>
    %137 = arith.cmpi eq, %44, %136 : vector<16x16xi32>
    %138 = vector.extract_strided_slice %43 {offsets = [15, 1], sizes = [1, 16], strides = [1, 1]} : vector<16x128xf32> to vector<1x16xf32>
    %139 = vector.shape_cast %138 : vector<1x16xf32> to vector<1x16xf32>
    %140 = vector.broadcast %139 : vector<1x16xf32> to vector<16x16xf32>
    %141 = arith.select %137, %140, %135 : vector<16x16xi1>, vector<16x16xf32>
    %142 = arith.addf %40, %141 : vector<16x16xf32>
    %cst_39 = arith.constant 0.353553385 : f32
    %143 = vector.broadcast %cst_39 : f32 to vector<16x16xf32>
    %144 = arith.mulf %142, %143 : vector<16x16xf32>
    %cst_40 = arith.constant dense<0xFF800000> : vector<16xf32>
    %145 = vector.multi_reduction <maximumf>, %144, %cst_40 [1] : vector<16x16xf32> to vector<16xf32>
    %146 = vector.shape_cast %145 : vector<16xf32> to vector<16x1xf32>
    %147 = vector.broadcast %146 : vector<16x1xf32> to vector<16x16xf32>
    %148 = arith.subf %144, %147 : vector<16x16xf32>
    %149 = math.exp %148 : vector<16x16xf32>
    %cst_41 = arith.constant dense<0.000000e+00> : vector<16xf32>
    %150 = vector.multi_reduction <add>, %149, %cst_41 [1] : vector<16x16xf32> to vector<16xf32>
    %151 = vector.shape_cast %150 : vector<16xf32> to vector<16x1xf32>
    %152 = tpu.reciprocal %151 {approx = true} : vector<16x1xf32> -> vector<16x1xf32>
    %153 = vector.broadcast %152 : vector<16x1xf32> to vector<16x16xf32>
    %154 = arith.mulf %149, %153 : vector<16x16xf32>
    %155 = arith.truncf %154 : vector<16x16xf32> to vector<16x16xbf16>
    %cst_42 = arith.constant dense<0.000000e+00> : vector<16x8xf32>
    %156 = tpu.matmul %155, %39, %cst_42 {dimension_numbers = #tpu.dot_dimension_numbers<[1], [0], [0], [1], [0, 0, 1, 1], [], []>} : vector<16x16xbf16>, vector<16x8xbf16>, vector<16x8xf32> -> vector<16x8xf32>
    %c0_43 = arith.constant 0 : index
    %c0_44 = arith.constant 0 : index
    %157 = vector.load %arg18[%c0_43, %c0_44] : memref<16x32xf32, #tpu.memory_space<vmem>>, vector<16x32xf32>
    %158 = arith.truncf %156 : vector<16x8xf32> to vector<16x8xbf16>
    %c0_45 = arith.constant 0 : index
    %c0_46 = arith.constant 0 : index
    %c0_47 = arith.constant 0 : index
    %159 = vector.load %arg13[%c0_45, %c0_46, %c0_47] : memref<1x8x32xbf16, #tpu.memory_space<vmem>>, vector<1x8x32xbf16>
    %160 = vector.shape_cast %159 : vector<1x8x32xbf16> to vector<8x32xbf16>
    %cst_48 = arith.constant dense<0.000000e+00> : vector<16x32xf32>
    %161 = tpu.matmul %158, %160, %cst_48 {dimension_numbers = #tpu.dot_dimension_numbers<[1], [0], [0], [1], [0, 0, 1, 1], [], []>} : vector<16x8xbf16>, vector<8x32xbf16>, vector<16x32xf32> -> vector<16x32xf32>
    %162 = arith.addf %157, %161 : vector<16x32xf32>
    %c0_49 = arith.constant 0 : index
    %c0_50 = arith.constant 0 : index
    %163 = vector.load %arg18[%c0_49, %c0_50] : memref<16x32xf32, #tpu.memory_space<vmem>>, vector<16x32xf32>
    tpu.vector_store %arg18[%c0_49, %c0_50], %162 {strides = array<i32>} : memref<16x32xf32, #tpu.memory_space<vmem>>, vector<16x32xf32>,
    %c3_i32_51 = arith.constant 3 : i32
    %164 = arith.cmpi eq, %arg2, %c3_i32_51 : i32
    %165 = arith.extui %164 : i1 to i32
    %c0_i32_52 = arith.constant 0 : i32
    %166 = arith.cmpi ne, %165, %c0_i32_52 : i32
    scf.if %166 {
      %167 = arith.extf %6 : vector<16x32xbf16> to vector<16x32xf32>
      %c0_53 = arith.constant 0 : index
      %c0_54 = arith.constant 0 : index
      %168 = vector.load %arg18[%c0_53, %c0_54] : memref<16x32xf32, #tpu.memory_space<vmem>>, vector<16x32xf32>
      %169 = arith.addf %167, %168 : vector<16x32xf32>
      %c0_55 = arith.constant 0 : index
      %c0_56 = arith.constant 0 : index
      %170 = vector.load %arg14[%c0_55, %c0_56] : memref<1x32xf32, #tpu.memory_space<vmem>>, vector<1x32xf32>
      %171 = vector.broadcast %170 : vector<1x32xf32> to vector<16x32xf32>
      %172 = arith.addf %169, %171 : vector<16x32xf32>
      %c0_57 = arith.constant 0 : index
      %c0_58 = arith.constant 0 : index
      %173 = vector.load %arg15[%c0_57, %c0_58] : memref<1x32xf32, #tpu.memory_space<vmem>>, vector<1x32xf32>
      %c0_59 = arith.constant 0 : index
      %c0_60 = arith.constant 0 : index
      %174 = vector.load %arg16[%c0_59, %c0_60] : memref<1x32xf32, #tpu.memory_space<vmem>>, vector<1x32xf32>
      %cst_61 = arith.constant dense<0.000000e+00> : vector<16xf32>
      %175 = vector.multi_reduction <add>, %172, %cst_61 [1] : vector<16x32xf32> to vector<16xf32>
      %176 = vector.shape_cast %175 : vector<16xf32> to vector<16x1xf32>
      %cst_62 = arith.constant 3.200000e+01 : f32
      %177 = vector.broadcast %cst_62 : f32 to vector<16x1xf32>
      %178 = arith.divf %176, %177 : vector<16x1xf32>
      %179 = vector.broadcast %178 : vector<16x1xf32> to vector<16x32xf32>
      %180 = arith.subf %172, %179 : vector<16x32xf32>
      %181 = arith.mulf %180, %180 : vector<16x32xf32>
      %cst_63 = arith.constant dense<0.000000e+00> : vector<16xf32>
      %182 = vector.multi_reduction <add>, %181, %cst_63 [1] : vector<16x32xf32> to vector<16xf32>
      %183 = vector.shape_cast %182 : vector<16xf32> to vector<16x1xf32>
      %cst_64 = arith.constant 3.200000e+01 : f32
      %184 = vector.broadcast %cst_64 : f32 to vector<16x1xf32>
      %185 = arith.divf %183, %184 : vector<16x1xf32>
      %186 = vector.broadcast %178 : vector<16x1xf32> to vector<16x32xf32>
      %187 = arith.subf %172, %186 : vector<16x32xf32>
      %cst_65 = arith.constant 9.99999996E-13 : f32
      %188 = vector.broadcast %cst_65 : f32 to vector<16x1xf32>
      %189 = arith.addf %185, %188 : vector<16x1xf32>
      %190 = math.rsqrt %189 : vector<16x1xf32>
      %191 = vector.broadcast %190 : vector<16x1xf32> to vector<16x32xf32>
      %192 = arith.mulf %187, %191 : vector<16x32xf32>
      %193 = vector.broadcast %173 : vector<1x32xf32> to vector<16x32xf32>
      %194 = arith.mulf %192, %193 : vector<16x32xf32>
      %195 = vector.broadcast %174 : vector<1x32xf32> to vector<16x32xf32>
      %196 = arith.addf %194, %195 : vector<16x32xf32>
      %197 = arith.truncf %196 : vector<16x32xf32> to vector<16x32xbf16>
      %c0_66 = arith.constant 0 : index
      %c0_67 = arith.constant 0 : index
      %c0_68 = arith.constant 0 : index
      %198 = vector.load %arg17[%c0_66, %c0_67, %c0_68] : memref<1x16x32xbf16, #tpu.memory_space<vmem>>, vector<1x16x32xbf16>
      %199 = vector.shape_cast %198 : vector<1x16x32xbf16> to vector<16x32xbf16>
      %200 = vector.shape_cast %197 : vector<16x32xbf16> to vector<1x16x32xbf16>
      tpu.vector_store %arg17[%c0_66, %c0_67, %c0_68], %200 {strides = array<i32>} : memref<1x16x32xbf16, #tpu.memory_space<vmem>>, vector<1x16x32xbf16>,
    } else {
    }
    return
  }
  func.func @transform_0(%arg0: i32, %arg1: i32, %arg2: i32) -> (i32, i32, i32) {
    %c0_i32 = arith.constant 0 : i32
    %c0_i32_0 = arith.constant 0 : i32
    %c0_i32_1 = arith.constant 0 : i32
    return %arg0, %c0_i32, %c0_i32_0 : i32, i32, i32
  }
  func.func @transform_1(%arg0: i32, %arg1: i32, %arg2: i32) -> (i32, i32, i32) {
    %c0_i32 = arith.constant 0 : i32
    %c0_i32_0 = arith.constant 0 : i32
    %c0_i32_1 = arith.constant 0 : i32
    return %arg2, %c0_i32, %c0_i32_0 : i32, i32, i32
  }
  func.func @transform_2(%arg0: i32, %arg1: i32, %arg2: i32) -> (i32, i32, i32) {
    %c0_i32 = arith.constant 0 : i32
    %c0_i32_0 = arith.constant 0 : i32
    %c0_i32_1 = arith.constant 0 : i32
    return %arg2, %c0_i32, %c0_i32_0 : i32, i32, i32
  }
  func.func @transform_3(%arg0: i32, %arg1: i32, %arg2: i32) -> (i32, i32, i32) {
    %c0_i32 = arith.constant 0 : i32
    %c0_i32_0 = arith.constant 0 : i32
    %c0_i32_1 = arith.constant 0 : i32
    return %arg2, %c0_i32, %c0_i32_0 : i32, i32, i32
  }
  func.func @transform_4(%arg0: i32, %arg1: i32, %arg2: i32) -> (i32, i32, i32) {
    %c0_i32 = arith.constant 0 : i32
    %c0_i32_0 = arith.constant 0 : i32
    %c0_i32_1 = arith.constant 0 : i32
    return %arg2, %c0_i32, %c0_i32_0 : i32, i32, i32
  }
  func.func @transform_5(%arg0: i32, %arg1: i32, %arg2: i32) -> (i32, i32, i32) {
    %c0_i32 = arith.constant 0 : i32
    %c0_i32_0 = arith.constant 0 : i32
    %c0_i32_1 = arith.constant 0 : i32
    return %arg2, %c0_i32, %c0_i32_0 : i32, i32, i32
  }
  func.func @transform_6(%arg0: i32, %arg1: i32, %arg2: i32) -> (i32, i32, i32) {
    %c0_i32 = arith.constant 0 : i32
    %c0_i32_0 = arith.constant 0 : i32
    %c0_i32_1 = arith.constant 0 : i32
    return %arg2, %c0_i32, %c0_i32_0 : i32, i32, i32
  }
  func.func @transform_7(%arg0: i32, %arg1: i32, %arg2: i32) -> (i32, i32, i32) {
    %c0_i32 = arith.constant 0 : i32
    %c0_i32_0 = arith.constant 0 : i32
    %c0_i32_1 = arith.constant 0 : i32
    return %arg2, %c0_i32, %c0_i32_0 : i32, i32, i32
  }
  func.func @transform_8(%arg0: i32, %arg1: i32, %arg2: i32) -> (i32, i32, i32) {
    %c0_i32 = arith.constant 0 : i32
    %c0_i32_0 = arith.constant 0 : i32
    %c0_i32_1 = arith.constant 0 : i32
    return %arg2, %c0_i32, %c0_i32_0 : i32, i32, i32
  }
  func.func @transform_9(%arg0: i32, %arg1: i32, %arg2: i32) -> (i32, i32, i32) {
    %c0_i32 = arith.constant 0 : i32
    %c0_i32_0 = arith.constant 0 : i32
    %c0_i32_1 = arith.constant 0 : i32
    return %arg2, %c0_i32, %c0_i32_0 : i32, i32, i32
  }
  func.func @transform_10(%arg0: i32, %arg1: i32, %arg2: i32) -> (i32, i32, i32) {
    %c0_i32 = arith.constant 0 : i32
    %c0_i32_0 = arith.constant 0 : i32
    %c0_i32_1 = arith.constant 0 : i32
    return %arg2, %c0_i32, %c0_i32_0 : i32, i32, i32
  }
  func.func @transform_11(%arg0: i32, %arg1: i32, %arg2: i32) -> (i32, i32) {
    %c0_i32 = arith.constant 0 : i32
    %c0_i32_0 = arith.constant 0 : i32
    %c0_i32_1 = arith.constant 0 : i32
    return %c0_i32, %c0_i32_0 : i32, i32
  }
  func.func @transform_12(%arg0: i32, %arg1: i32, %arg2: i32) -> (i32, i32) {
    %c0_i32 = arith.constant 0 : i32
    %c0_i32_0 = arith.constant 0 : i32
    %c0_i32_1 = arith.constant 0 : i32
    return %c0_i32, %c0_i32_0 : i32, i32
  }
  func.func @transform_13(%arg0: i32, %arg1: i32, %arg2: i32) -> (i32, i32) {
    %c0_i32 = arith.constant 0 : i32
    %c0_i32_0 = arith.constant 0 : i32
    %c0_i32_1 = arith.constant 0 : i32
    return %c0_i32, %c0_i32_0 : i32, i32
  }
  func.func @transform_14(%arg0: i32, %arg1: i32, %arg2: i32) -> (i32, i32, i32) {
    %c0_i32 = arith.constant 0 : i32
    %c0_i32_0 = arith.constant 0 : i32
    return %arg0, %arg1, %c0_i32 : i32, i32, i32
  }
}

module attributes {stable_mosaic.version = 11 : i64} {
  func.func @_ff_module_kernel(%arg0: i32, %arg1: memref<32x32xbf16, #tpu.memory_space<vmem>>, %arg2: memref<32x64xbf16, #tpu.memory_space<vmem>>, %arg3: memref<1x64xf32, #tpu.memory_space<vmem>>, %arg4: memref<64x32xbf16, #tpu.memory_space<vmem>>, %arg5: memref<1x32xf32, #tpu.memory_space<vmem>>, %arg6: memref<1x32xf32, #tpu.memory_space<vmem>>, %arg7: memref<1x32xf32, #tpu.memory_space<vmem>>, %arg8: memref<1x32xf32, #tpu.memory_space<vmem>>, %arg9: memref<1x32xf32, #tpu.memory_space<vmem>>, %arg10: memref<32x32xbf16, #tpu.memory_space<vmem>>) attributes {dimension_semantics = [#tpu.dimension_semantics<parallel>], iteration_bounds = array<i64: 1>, scalar_prefetch = 0 : i64, scratch_operands = 0 : i64, tpu.core_type = #tpu.core_type<tc>, window_params = [{transform_indices = @transform_0, window_bounds = array<i64: 32, 32>}, {pipeline_mode = #tpu.pipeline_mode<synchronous>, transform_indices = @transform_1, window_bounds = array<i64: 32, 64>}, {pipeline_mode = #tpu.pipeline_mode<synchronous>, transform_indices = @transform_2, window_bounds = array<i64: 1, 64>}, {pipeline_mode = #tpu.pipeline_mode<synchronous>, transform_indices = @transform_3, window_bounds = array<i64: 64, 32>}, {pipeline_mode = #tpu.pipeline_mode<synchronous>, transform_indices = @transform_4, window_bounds = array<i64: 1, 32>}, {pipeline_mode = #tpu.pipeline_mode<synchronous>, transform_indices = @transform_5, window_bounds = array<i64: 1, 32>}, {pipeline_mode = #tpu.pipeline_mode<synchronous>, transform_indices = @transform_6, window_bounds = array<i64: 1, 32>}, {pipeline_mode = #tpu.pipeline_mode<synchronous>, transform_indices = @transform_7, window_bounds = array<i64: 1, 32>}, {pipeline_mode = #tpu.pipeline_mode<synchronous>, transform_indices = @transform_8, window_bounds = array<i64: 1, 32>}, {transform_indices = @transform_9, window_bounds = array<i64: 32, 32>}]} {
    %c0 = arith.constant 0 : index
    %c0_0 = arith.constant 0 : index
    %0 = vector.load %arg1[%c0, %c0_0] : memref<32x32xbf16, #tpu.memory_space<vmem>>, vector<32x32xbf16>
    %c0_1 = arith.constant 0 : index
    %c0_2 = arith.constant 0 : index
    %1 = vector.load %arg2[%c0_1, %c0_2] : memref<32x64xbf16, #tpu.memory_space<vmem>>, vector<32x64xbf16>
    %cst = arith.constant dense<0.000000e+00> : vector<32x64xf32>
    %2 = tpu.matmul %0, %1, %cst {dimension_numbers = #tpu.dot_dimension_numbers<[1], [0], [0], [1], [0, 0, 1, 1], [], []>} : vector<32x32xbf16>, vector<32x64xbf16>, vector<32x64xf32> -> vector<32x64xf32>
    %c0_3 = arith.constant 0 : index
    %c0_4 = arith.constant 0 : index
    %3 = vector.load %arg3[%c0_3, %c0_4] : memref<1x64xf32, #tpu.memory_space<vmem>>, vector<1x64xf32>
    %4 = vector.broadcast %3 : vector<1x64xf32> to vector<32x64xf32>
    %5 = arith.addf %2, %4 : vector<32x64xf32>
    %cst_5 = arith.constant 0.000000e+00 : f32
    %6 = vector.broadcast %cst_5 : f32 to vector<32x64xf32>
    %7 = arith.subf %6, %5 : vector<32x64xf32>
    %8 = math.exp %7 : vector<32x64xf32>
    %cst_6 = arith.constant 1.000000e+00 : f32
    %9 = vector.broadcast %cst_6 : f32 to vector<32x64xf32>
    %10 = arith.addf %9, %8 : vector<32x64xf32>
    %11 = tpu.reciprocal %10 {approx = true} : vector<32x64xf32> -> vector<32x64xf32>
    %12 = arith.mulf %5, %11 : vector<32x64xf32>
    %13 = arith.truncf %12 : vector<32x64xf32> to vector<32x64xbf16>
    %c0_7 = arith.constant 0 : index
    %c0_8 = arith.constant 0 : index
    %14 = vector.load %arg4[%c0_7, %c0_8] : memref<64x32xbf16, #tpu.memory_space<vmem>>, vector<64x32xbf16>
    %cst_9 = arith.constant dense<0.000000e+00> : vector<32x32xf32>
    %15 = tpu.matmul %13, %14, %cst_9 {dimension_numbers = #tpu.dot_dimension_numbers<[1], [0], [0], [1], [0, 0, 1, 1], [], []>} : vector<32x64xbf16>, vector<64x32xbf16>, vector<32x32xf32> -> vector<32x32xf32>
    %c0_10 = arith.constant 0 : index
    %c0_11 = arith.constant 0 : index
    %16 = vector.load %arg5[%c0_10, %c0_11] : memref<1x32xf32, #tpu.memory_space<vmem>>, vector<1x32xf32>
    %17 = vector.broadcast %16 : vector<1x32xf32> to vector<32x32xf32>
    %18 = arith.addf %15, %17 : vector<32x32xf32>
    %19 = arith.extf %0 : vector<32x32xbf16> to vector<32x32xf32>
    %cst_12 = arith.constant 5.000000e-01 : f32
    %20 = vector.broadcast %cst_12 : f32 to vector<32x32xf32>
    %21 = arith.mulf %20, %18 : vector<32x32xf32>
    %22 = arith.addf %19, %21 : vector<32x32xf32>
    %c0_13 = arith.constant 0 : index
    %c0_14 = arith.constant 0 : index
    %23 = vector.load %arg6[%c0_13, %c0_14] : memref<1x32xf32, #tpu.memory_space<vmem>>, vector<1x32xf32>
    %c0_15 = arith.constant 0 : index
    %c0_16 = arith.constant 0 : index
    %24 = vector.load %arg7[%c0_15, %c0_16] : memref<1x32xf32, #tpu.memory_space<vmem>>, vector<1x32xf32>
    %cst_17 = arith.constant dense<0.000000e+00> : vector<32xf32>
    %25 = vector.multi_reduction <add>, %22, %cst_17 [1] : vector<32x32xf32> to vector<32xf32>
    %26 = vector.shape_cast %25 : vector<32xf32> to vector<32x1xf32>
    %cst_18 = arith.constant 3.200000e+01 : f32
    %27 = vector.broadcast %cst_18 : f32 to vector<32x1xf32>
    %28 = arith.divf %26, %27 : vector<32x1xf32>
    %29 = vector.broadcast %28 : vector<32x1xf32> to vector<32x32xf32>
    %30 = arith.subf %22, %29 : vector<32x32xf32>
    %31 = arith.mulf %30, %30 : vector<32x32xf32>
    %cst_19 = arith.constant dense<0.000000e+00> : vector<32xf32>
    %32 = vector.multi_reduction <add>, %31, %cst_19 [1] : vector<32x32xf32> to vector<32xf32>
    %33 = vector.shape_cast %32 : vector<32xf32> to vector<32x1xf32>
    %cst_20 = arith.constant 3.200000e+01 : f32
    %34 = vector.broadcast %cst_20 : f32 to vector<32x1xf32>
    %35 = arith.divf %33, %34 : vector<32x1xf32>
    %36 = vector.broadcast %28 : vector<32x1xf32> to vector<32x32xf32>
    %37 = arith.subf %22, %36 : vector<32x32xf32>
    %cst_21 = arith.constant 9.99999996E-13 : f32
    %38 = vector.broadcast %cst_21 : f32 to vector<32x1xf32>
    %39 = arith.addf %35, %38 : vector<32x1xf32>
    %40 = math.rsqrt %39 : vector<32x1xf32>
    %41 = vector.broadcast %40 : vector<32x1xf32> to vector<32x32xf32>
    %42 = arith.mulf %37, %41 : vector<32x32xf32>
    %43 = vector.broadcast %23 : vector<1x32xf32> to vector<32x32xf32>
    %44 = arith.mulf %42, %43 : vector<32x32xf32>
    %45 = vector.broadcast %24 : vector<1x32xf32> to vector<32x32xf32>
    %46 = arith.addf %44, %45 : vector<32x32xf32>
    %c0_22 = arith.constant 0 : index
    %c0_23 = arith.constant 0 : index
    %47 = vector.load %arg8[%c0_22, %c0_23] : memref<1x32xf32, #tpu.memory_space<vmem>>, vector<1x32xf32>
    %c0_24 = arith.constant 0 : index
    %c0_25 = arith.constant 0 : index
    %48 = vector.load %arg9[%c0_24, %c0_25] : memref<1x32xf32, #tpu.memory_space<vmem>>, vector<1x32xf32>
    %cst_26 = arith.constant dense<0.000000e+00> : vector<32xf32>
    %49 = vector.multi_reduction <add>, %46, %cst_26 [1] : vector<32x32xf32> to vector<32xf32>
    %50 = vector.shape_cast %49 : vector<32xf32> to vector<32x1xf32>
    %cst_27 = arith.constant 3.200000e+01 : f32
    %51 = vector.broadcast %cst_27 : f32 to vector<32x1xf32>
    %52 = arith.divf %50, %51 : vector<32x1xf32>
    %53 = vector.broadcast %52 : vector<32x1xf32> to vector<32x32xf32>
    %54 = arith.subf %46, %53 : vector<32x32xf32>
    %55 = arith.mulf %54, %54 : vector<32x32xf32>
    %cst_28 = arith.constant dense<0.000000e+00> : vector<32xf32>
    %56 = vector.multi_reduction <add>, %55, %cst_28 [1] : vector<32x32xf32> to vector<32xf32>
    %57 = vector.shape_cast %56 : vector<32xf32> to vector<32x1xf32>
    %cst_29 = arith.constant 3.200000e+01 : f32
    %58 = vector.broadcast %cst_29 : f32 to vector<32x1xf32>
    %59 = arith.divf %57, %58 : vector<32x1xf32>
    %60 = vector.broadcast %52 : vector<32x1xf32> to vector<32x32xf32>
    %61 = arith.subf %46, %60 : vector<32x32xf32>
    %cst_30 = arith.constant 9.99999996E-13 : f32
    %62 = vector.broadcast %cst_30 : f32 to vector<32x1xf32>
    %63 = arith.addf %59, %62 : vector<32x1xf32>
    %64 = math.rsqrt %63 : vector<32x1xf32>
    %65 = vector.broadcast %64 : vector<32x1xf32> to vector<32x32xf32>
    %66 = arith.mulf %61, %65 : vector<32x32xf32>
    %67 = vector.broadcast %47 : vector<1x32xf32> to vector<32x32xf32>
    %68 = arith.mulf %66, %67 : vector<32x32xf32>
    %69 = vector.broadcast %48 : vector<1x32xf32> to vector<32x32xf32>
    %70 = arith.addf %68, %69 : vector<32x32xf32>
    %71 = arith.truncf %70 : vector<32x32xf32> to vector<32x32xbf16>
    %c0_31 = arith.constant 0 : index
    %c0_32 = arith.constant 0 : index
    %72 = vector.load %arg10[%c0_31, %c0_32] : memref<32x32xbf16, #tpu.memory_space<vmem>>, vector<32x32xbf16>
    tpu.vector_store %arg10[%c0_31, %c0_32], %71 {strides = array<i32>} : memref<32x32xbf16, #tpu.memory_space<vmem>>, vector<32x32xbf16>,
    return
  }
  func.func @transform_0(%arg0: i32) -> (i32, i32) {
    %c0_i32 = arith.constant 0 : i32
    %c0_i32_0 = arith.constant 0 : i32
    return %arg0, %c0_i32 : i32, i32
  }
  func.func @transform_1(%arg0: i32) -> (i32, i32) {
    %c0_i32 = arith.constant 0 : i32
    %c0_i32_0 = arith.constant 0 : i32
    %c0_i32_1 = arith.constant 0 : i32
    return %c0_i32, %c0_i32_0 : i32, i32
  }
  func.func @transform_2(%arg0: i32) -> (i32, i32) {
    %c0_i32 = arith.constant 0 : i32
    %c0_i32_0 = arith.constant 0 : i32
    %c0_i32_1 = arith.constant 0 : i32
    return %c0_i32, %c0_i32_0 : i32, i32
  }
  func.func @transform_3(%arg0: i32) -> (i32, i32) {
    %c0_i32 = arith.constant 0 : i32
    %c0_i32_0 = arith.constant 0 : i32
    %c0_i32_1 = arith.constant 0 : i32
    return %c0_i32, %c0_i32_0 : i32, i32
  }
  func.func @transform_4(%arg0: i32) -> (i32, i32) {
    %c0_i32 = arith.constant 0 : i32
    %c0_i32_0 = arith.constant 0 : i32
    %c0_i32_1 = arith.constant 0 : i32
    return %c0_i32, %c0_i32_0 : i32, i32
  }
  func.func @transform_5(%arg0: i32) -> (i32, i32) {
    %c0_i32 = arith.constant 0 : i32
    %c0_i32_0 = arith.constant 0 : i32
    %c0_i32_1 = arith.constant 0 : i32
    return %c0_i32, %c0_i32_0 : i32, i32
  }
  func.func @transform_6(%arg0: i32) -> (i32, i32) {
    %c0_i32 = arith.constant 0 : i32
    %c0_i32_0 = arith.constant 0 : i32
    %c0_i32_1 = arith.constant 0 : i32
    return %c0_i32, %c0_i32_0 : i32, i32
  }
  func.func @transform_7(%arg0: i32) -> (i32, i32) {
    %c0_i32 = arith.constant 0 : i32
    %c0_i32_0 = arith.constant 0 : i32
    %c0_i32_1 = arith.constant 0 : i32
    return %c0_i32, %c0_i32_0 : i32, i32
  }
  func.func @transform_8(%arg0: i32) -> (i32, i32) {
    %c0_i32 = arith.constant 0 : i32
    %c0_i32_0 = arith.constant 0 : i32
    %c0_i32_1 = arith.constant 0 : i32
    return %c0_i32, %c0_i32_0 : i32, i32
  }
  func.func @transform_9(%arg0: i32) -> (i32, i32) {
    %c0_i32 = arith.constant 0 : i32
    %c0_i32_0 = arith.constant 0 : i32
    return %arg0, %c0_i32 : i32, i32
  }
}

module attributes {stable_mosaic.version = 11 : i64} {
  func.func @_conv_module_kernel(%arg0: i32, %arg1: memref<1x16x32xbf16, #tpu.memory_space<vmem>>, %arg2: memref<32x32xbf16, #tpu.memory_space<vmem>>, %arg3: memref<1x32xf32, #tpu.memory_space<vmem>>, %arg4: memref<32x32xbf16, #tpu.memory_space<vmem>>, %arg5: memref<1x32xf32, #tpu.memory_space<vmem>>, %arg6: memref<7x1x32xf32, #tpu.memory_space<vmem>>, %arg7: memref<1x32xf32, #tpu.memory_space<vmem>>, %arg8: memref<32x32xbf16, #tpu.memory_space<vmem>>, %arg9: memref<1x32xf32, #tpu.memory_space<vmem>>, %arg10: memref<1x32xf32, #tpu.memory_space<vmem>>, %arg11: memref<1x32xf32, #tpu.memory_space<vmem>>, %arg12: memref<1x16x32xbf16, #tpu.memory_space<vmem>>) attributes {dimension_semantics = [#tpu.dimension_semantics<parallel>], iteration_bounds = array<i64: 2>, scalar_prefetch = 0 : i64, scratch_operands = 0 : i64, tpu.core_type = #tpu.core_type<tc>, window_params = [{transform_indices = @transform_0, window_bounds = array<i64: 1, 16, 32>}, {pipeline_mode = #tpu.pipeline_mode<synchronous>, transform_indices = @transform_1, window_bounds = array<i64: 32, 32>}, {pipeline_mode = #tpu.pipeline_mode<synchronous>, transform_indices = @transform_2, window_bounds = array<i64: 1, 32>}, {pipeline_mode = #tpu.pipeline_mode<synchronous>, transform_indices = @transform_3, window_bounds = array<i64: 32, 32>}, {pipeline_mode = #tpu.pipeline_mode<synchronous>, transform_indices = @transform_4, window_bounds = array<i64: 1, 32>}, {pipeline_mode = #tpu.pipeline_mode<synchronous>, transform_indices = @transform_5, window_bounds = array<i64: 7, 1, 32>}, {pipeline_mode = #tpu.pipeline_mode<synchronous>, transform_indices = @transform_6, window_bounds = array<i64: 1, 32>}, {pipeline_mode = #tpu.pipeline_mode<synchronous>, transform_indices = @transform_7, window_bounds = array<i64: 32, 32>}, {pipeline_mode = #tpu.pipeline_mode<synchronous>, transform_indices = @transform_8, window_bounds = array<i64: 1, 32>}, {pipeline_mode = #tpu.pipeline_mode<synchronous>, transform_indices = @transform_9, window_bounds = array<i64: 1, 32>}, {pipeline_mode = #tpu.pipeline_mode<synchronous>, transform_indices = @transform_10, window_bounds = array<i64: 1, 32>}, {transform_indices = @transform_11, window_bounds = array<i64: 1, 16, 32>}]} {
    %c0 = arith.constant 0 : index
    %c0_0 = arith.constant 0 : index
    %c0_1 = arith.constant 0 : index
    %0 = vector.load %arg1[%c0, %c0_0, %c0_1] : memref<1x16x32xbf16, #tpu.memory_space<vmem>>, vector<1x16x32xbf16>
    %1 = vector.shape_cast %0 : vector<1x16x32xbf16> to vector<16x32xbf16>
    %c0_2 = arith.constant 0 : index
    %c0_3 = arith.constant 0 : index
    %2 = vector.load %arg2[%c0_2, %c0_3] : memref<32x32xbf16, #tpu.memory_space<vmem>>, vector<32x32xbf16>
    %cst = arith.constant dense<0.000000e+00> : vector<16x32xf32>
    %3 = tpu.matmul %1, %2, %cst {dimension_numbers = #tpu.dot_dimension_numbers<[1], [0], [0], [1], [0, 0, 1, 1], [], []>} : vector<16x32xbf16>, vector<32x32xbf16>, vector<16x32xf32> -> vector<16x32xf32>
    %c0_4 = arith.constant 0 : index
    %c0_5 = arith.constant 0 : index
    %4 = vector.load %arg3[%c0_4, %c0_5] : memref<1x32xf32, #tpu.memory_space<vmem>>, vector<1x32xf32>
    %5 = vector.broadcast %4 : vector<1x32xf32> to vector<16x32xf32>
    %6 = arith.addf %3, %5 : vector<16x32xf32>
    %c0_6 = arith.constant 0 : index
    %c0_7 = arith.constant 0 : index
    %7 = vector.load %arg4[%c0_6, %c0_7] : memref<32x32xbf16, #tpu.memory_space<vmem>>, vector<32x32xbf16>
    %cst_8 = arith.constant dense<0.000000e+00> : vector<16x32xf32>
    %8 = tpu.matmul %1, %7, %cst_8 {dimension_numbers = #tpu.dot_dimension_numbers<[1], [0], [0], [1], [0, 0, 1, 1], [], []>} : vector<16x32xbf16>, vector<32x32xbf16>, vector<16x32xf32> -> vector<16x32xf32>
    %c0_9 = arith.constant 0 : index
    %c0_10 = arith.constant 0 : index
    %9 = vector.load %arg5[%c0_9, %c0_10] : memref<1x32xf32, #tpu.memory_space<vmem>>, vector<1x32xf32>
    %10 = vector.broadcast %9 : vector<1x32xf32> to vector<16x32xf32>
    %11 = arith.addf %8, %10 : vector<16x32xf32>
    %cst_11 = arith.constant 0.000000e+00 : f32
    %12 = vector.broadcast %cst_11 : f32 to vector<16x32xf32>
    %13 = arith.subf %12, %11 : vector<16x32xf32>
    %14 = math.exp %13 : vector<16x32xf32>
    %cst_12 = arith.constant 1.000000e+00 : f32
    %15 = vector.broadcast %cst_12 : f32 to vector<16x32xf32>
    %16 = arith.addf %15, %14 : vector<16x32xf32>
    %17 = tpu.reciprocal %16 {approx = true} : vector<16x32xf32> -> vector<16x32xf32>
    %18 = arith.mulf %6, %17 : vector<16x32xf32>
    %19 = tpu.iota {dimensions = array<i32: 0>} : vector<16x32xi32>
    %c3 = arith.constant 3 : index
    %c0_13 = arith.constant 0 : index
    %c0_14 = arith.constant 0 : index
    %20 = vector.load %arg6[%c3, %c0_13, %c0_14] : memref<7x1x32xf32, #tpu.memory_space<vmem>>, vector<1x1x32xf32>
    %21 = vector.shape_cast %20 : vector<1x1x32xf32> to vector<1x32xf32>
    %22 = vector.broadcast %21 : vector<1x32xf32> to vector<16x32xf32>
    %23 = arith.mulf %18, %22 : vector<16x32xf32>
    %cst_15 = arith.constant 0.000000e+00 : f32
    %24 = vector.broadcast %cst_15 : f32 to vector<3x32xf32>
    %25 = vector.extract_strided_slice %18 {offsets = [0, 0], sizes = [13, 32], strides = [1, 1]} : vector<16x32xf32> to vector<13x32xf32>
    %26 = tpu.concatenate %24, %25 in 0 : vector<3x32xf32>, vector<13x32xf32> -> vector<16x32xf32>
    %c-3_i32 = arith.constant -3 : i32
    %27 = vector.broadcast %c-3_i32 : i32 to vector<16x32xi32>
    %28 = arith.addi %19, %27 : vector<16x32xi32>
    %c0_i32 = arith.constant 0 : i32
    %29 = vector.broadcast %c0_i32 : i32 to vector<16x32xi32>
    %30 = arith.cmpi sge, %28, %29 : vector<16x32xi32>
    %c-3_i32_16 = arith.constant -3 : i32
    %31 = vector.broadcast %c-3_i32_16 : i32 to vector<16x32xi32>
    %32 = arith.addi %19, %31 : vector<16x32xi32>
    %c16_i32 = arith.constant 16 : i32
    %33 = vector.broadcast %c16_i32 : i32 to vector<16x32xi32>
    %34 = arith.cmpi slt, %32, %33 : vector<16x32xi32>
    %35 = arith.andi %30, %34 : vector<16x32xi1>
    %cst_17 = arith.constant 0.000000e+00 : f32
    %36 = vector.broadcast %cst_17 : f32 to vector<16x32xf32>
    %37 = arith.select %35, %26, %36 : vector<16x32xi1>, vector<16x32xf32>
    %c0_18 = arith.constant 0 : index
    %c0_19 = arith.constant 0 : index
    %c0_20 = arith.constant 0 : index
    %38 = vector.load %arg6[%c0_18, %c0_19, %c0_20] : memref<7x1x32xf32, #tpu.memory_space<vmem>>, vector<1x1x32xf32>
    %39 = vector.shape_cast %38 : vector<1x1x32xf32> to vector<1x32xf32>
    %40 = vector.broadcast %39 : vector<1x32xf32> to vector<16x32xf32>
    %41 = arith.mulf %37, %40 : vector<16x32xf32>
    %42 = arith.addf %23, %41 : vector<16x32xf32>
    %cst_21 = arith.constant 0.000000e+00 : f32
    %43 = vector.broadcast %cst_21 : f32 to vector<2x32xf32>
    %44 = vector.extract_strided_slice %18 {offsets = [0, 0], sizes = [14, 32], strides = [1, 1]} : vector<16x32xf32> to vector<14x32xf32>
    %45 = tpu.concatenate %43, %44 in 0 : vector<2x32xf32>, vector<14x32xf32> -> vector<16x32xf32>
    %c-2_i32 = arith.constant -2 : i32
    %46 = vector.broadcast %c-2_i32 : i32 to vector<16x32xi32>
    %47 = arith.addi %19, %46 : vector<16x32xi32>
    %c0_i32_22 = arith.constant 0 : i32
    %48 = vector.broadcast %c0_i32_22 : i32 to vector<16x32xi32>
    %49 = arith.cmpi sge, %47, %48 : vector<16x32xi32>
    %c-2_i32_23 = arith.constant -2 : i32
    %50 = vector.broadcast %c-2_i32_23 : i32 to vector<16x32xi32>
    %51 = arith.addi %19, %50 : vector<16x32xi32>
    %c16_i32_24 = arith.constant 16 : i32
    %52 = vector.broadcast %c16_i32_24 : i32 to vector<16x32xi32>
    %53 = arith.cmpi slt, %51, %52 : vector<16x32xi32>
    %54 = arith.andi %49, %53 : vector<16x32xi1>
    %cst_25 = arith.constant 0.000000e+00 : f32
    %55 = vector.broadcast %cst_25 : f32 to vector<16x32xf32>
    %56 = arith.select %54, %45, %55 : vector<16x32xi1>, vector<16x32xf32>
    %c1 = arith.constant 1 : index
    %c0_26 = arith.constant 0 : index
    %c0_27 = arith.constant 0 : index
    %57 = vector.load %arg6[%c1, %c0_26, %c0_27] : memref<7x1x32xf32, #tpu.memory_space<vmem>>, vector<1x1x32xf32>
    %58 = vector.shape_cast %57 : vector<1x1x32xf32> to vector<1x32xf32>
    %59 = vector.broadcast %58 : vector<1x32xf32> to vector<16x32xf32>
    %60 = arith.mulf %56, %59 : vector<16x32xf32>
    %61 = arith.addf %42, %60 : vector<16x32xf32>
    %cst_28 = arith.constant 0.000000e+00 : f32
    %62 = vector.broadcast %cst_28 : f32 to vector<1x32xf32>
    %63 = vector.extract_strided_slice %18 {offsets = [0, 0], sizes = [15, 32], strides = [1, 1]} : vector<16x32xf32> to vector<15x32xf32>
    %64 = tpu.concatenate %62, %63 in 0 : vector<1x32xf32>, vector<15x32xf32> -> vector<16x32xf32>
    %c-1_i32 = arith.constant -1 : i32
    %65 = vector.broadcast %c-1_i32 : i32 to vector<16x32xi32>
    %66 = arith.addi %19, %65 : vector<16x32xi32>
    %c0_i32_29 = arith.constant 0 : i32
    %67 = vector.broadcast %c0_i32_29 : i32 to vector<16x32xi32>
    %68 = arith.cmpi sge, %66, %67 : vector<16x32xi32>
    %c-1_i32_30 = arith.constant -1 : i32
    %69 = vector.broadcast %c-1_i32_30 : i32 to vector<16x32xi32>
    %70 = arith.addi %19, %69 : vector<16x32xi32>
    %c16_i32_31 = arith.constant 16 : i32
    %71 = vector.broadcast %c16_i32_31 : i32 to vector<16x32xi32>
    %72 = arith.cmpi slt, %70, %71 : vector<16x32xi32>
    %73 = arith.andi %68, %72 : vector<16x32xi1>
    %cst_32 = arith.constant 0.000000e+00 : f32
    %74 = vector.broadcast %cst_32 : f32 to vector<16x32xf32>
    %75 = arith.select %73, %64, %74 : vector<16x32xi1>, vector<16x32xf32>
    %c2 = arith.constant 2 : index
    %c0_33 = arith.constant 0 : index
    %c0_34 = arith.constant 0 : index
    %76 = vector.load %arg6[%c2, %c0_33, %c0_34] : memref<7x1x32xf32, #tpu.memory_space<vmem>>, vector<1x1x32xf32>
    %77 = vector.shape_cast %76 : vector<1x1x32xf32> to vector<1x32xf32>
    %78 = vector.broadcast %77 : vector<1x32xf32> to vector<16x32xf32>
    %79 = arith.mulf %75, %78 : vector<16x32xf32>
    %80 = arith.addf %61, %79 : vector<16x32xf32>
    %cst_35 = arith.constant 0.000000e+00 : f32
    %81 = vector.broadcast %cst_35 : f32 to vector<1x32xf32>
    %82 = vector.extract_strided_slice %18 {offsets = [1, 0], sizes = [15, 32], strides = [1, 1]} : vector<16x32xf32> to vector<15x32xf32>
    %83 = tpu.concatenate %82, %81 in 0 : vector<15x32xf32>, vector<1x32xf32> -> vector<16x32xf32>
    %c1_i32 = arith.constant 1 : i32
    %84 = vector.broadcast %c1_i32 : i32 to vector<16x32xi32>
    %85 = arith.addi %19, %84 : vector<16x32xi32>
    %c0_i32_36 = arith.constant 0 : i32
    %86 = vector.broadcast %c0_i32_36 : i32 to vector<16x32xi32>
    %87 = arith.cmpi sge, %85, %86 : vector<16x32xi32>
    %c1_i32_37 = arith.constant 1 : i32
    %88 = vector.broadcast %c1_i32_37 : i32 to vector<16x32xi32>
    %89 = arith.addi %19, %88 : vector<16x32xi32>
    %c16_i32_38 = arith.constant 16 : i32
    %90 = vector.broadcast %c16_i32_38 : i32 to vector<16x32xi32>
    %91 = arith.cmpi slt, %89, %90 : vector<16x32xi32>
    %92 = arith.andi %87, %91 : vector<16x32xi1>
    %cst_39 = arith.constant 0.000000e+00 : f32
    %93 = vector.broadcast %cst_39 : f32 to vector<16x32xf32>
    %94 = arith.select %92, %83, %93 : vector<16x32xi1>, vector<16x32xf32>
    %c4 = arith.constant 4 : index
    %c0_40 = arith.constant 0 : index
    %c0_41 = arith.constant 0 : index
    %95 = vector.load %arg6[%c4, %c0_40, %c0_41] : memref<7x1x32xf32, #tpu.memory_space<vmem>>, vector<1x1x32xf32>
    %96 = vector.shape_cast %95 : vector<1x1x32xf32> to vector<1x32xf32>
    %97 = vector.broadcast %96 : vector<1x32xf32> to vector<16x32xf32>
    %98 = arith.mulf %94, %97 : vector<16x32xf32>
    %99 = arith.addf %80, %98 : vector<16x32xf32>
    %cst_42 = arith.constant 0.000000e+00 : f32
    %100 = vector.broadcast %cst_42 : f32 to vector<2x32xf32>
    %101 = vector.extract_strided_slice %18 {offsets = [2, 0], sizes = [14, 32], strides = [1, 1]} : vector<16x32xf32> to vector<14x32xf32>
    %102 = tpu.concatenate %101, %100 in 0 : vector<14x32xf32>, vector<2x32xf32> -> vector<16x32xf32>
    %c2_i32 = arith.constant 2 : i32
    %103 = vector.broadcast %c2_i32 : i32 to vector<16x32xi32>
    %104 = arith.addi %19, %103 : vector<16x32xi32>
    %c0_i32_43 = arith.constant 0 : i32
    %105 = vector.broadcast %c0_i32_43 : i32 to vector<16x32xi32>
    %106 = arith.cmpi sge, %104, %105 : vector<16x32xi32>
    %c2_i32_44 = arith.constant 2 : i32
    %107 = vector.broadcast %c2_i32_44 : i32 to vector<16x32xi32>
    %108 = arith.addi %19, %107 : vector<16x32xi32>
    %c16_i32_45 = arith.constant 16 : i32
    %109 = vector.broadcast %c16_i32_45 : i32 to vector<16x32xi32>
    %110 = arith.cmpi slt, %108, %109 : vector<16x32xi32>
    %111 = arith.andi %106, %110 : vector<16x32xi1>
    %cst_46 = arith.constant 0.000000e+00 : f32
    %112 = vector.broadcast %cst_46 : f32 to vector<16x32xf32>
    %113 = arith.select %111, %102, %112 : vector<16x32xi1>, vector<16x32xf32>
    %c5 = arith.constant 5 : index
    %c0_47 = arith.constant 0 : index
    %c0_48 = arith.constant 0 : index
    %114 = vector.load %arg6[%c5, %c0_47, %c0_48] : memref<7x1x32xf32, #tpu.memory_space<vmem>>, vector<1x1x32xf32>
    %115 = vector.shape_cast %114 : vector<1x1x32xf32> to vector<1x32xf32>
    %116 = vector.broadcast %115 : vector<1x32xf32> to vector<16x32xf32>
    %117 = arith.mulf %113, %116 : vector<16x32xf32>
    %118 = arith.addf %99, %117 : vector<16x32xf32>
    %cst_49 = arith.constant 0.000000e+00 : f32
    %119 = vector.broadcast %cst_49 : f32 to vector<3x32xf32>
    %120 = vector.extract_strided_slice %18 {offsets = [3, 0], sizes = [13, 32], strides = [1, 1]} : vector<16x32xf32> to vector<13x32xf32>
    %121 = tpu.concatenate %120, %119 in 0 : vector<13x32xf32>, vector<3x32xf32> -> vector<16x32xf32>
    %c3_i32 = arith.constant 3 : i32
    %122 = vector.broadcast %c3_i32 : i32 to vector<16x32xi32>
    %123 = arith.addi %19, %122 : vector<16x32xi32>
    %c0_i32_50 = arith.constant 0 : i32
    %124 = vector.broadcast %c0_i32_50 : i32 to vector<16x32xi32>
    %125 = arith.cmpi sge, %123, %124 : vector<16x32xi32>
    %c3_i32_51 = arith.constant 3 : i32
    %126 = vector.broadcast %c3_i32_51 : i32 to vector<16x32xi32>
    %127 = arith.addi %19, %126 : vector<16x32xi32>
    %c16_i32_52 = arith.constant 16 : i32
    %128 = vector.broadcast %c16_i32_52 : i32 to vector<16x32xi32>
    %129 = arith.cmpi slt, %127, %128 : vector<16x32xi32>
    %130 = arith.andi %125, %129 : vector<16x32xi1>
    %cst_53 = arith.constant 0.000000e+00 : f32
    %131 = vector.broadcast %cst_53 : f32 to vector<16x32xf32>
    %132 = arith.select %130, %121, %131 : vector<16x32xi1>, vector<16x32xf32>
    %c6 = arith.constant 6 : index
    %c0_54 = arith.constant 0 : index
    %c0_55 = arith.constant 0 : index
    %133 = vector.load %arg6[%c6, %c0_54, %c0_55] : memref<7x1x32xf32, #tpu.memory_space<vmem>>, vector<1x1x32xf32>
    %134 = vector.shape_cast %133 : vector<1x1x32xf32> to vector<1x32xf32>
    %135 = vector.broadcast %134 : vector<1x32xf32> to vector<16x32xf32>
    %136 = arith.mulf %132, %135 : vector<16x32xf32>
    %137 = arith.addf %118, %136 : vector<16x32xf32>
    %c0_56 = arith.constant 0 : index
    %c0_57 = arith.constant 0 : index
    %138 = vector.load %arg7[%c0_56, %c0_57] : memref<1x32xf32, #tpu.memory_space<vmem>>, vector<1x32xf32>
    %139 = vector.broadcast %138 : vector<1x32xf32> to vector<16x32xf32>
    %140 = arith.addf %137, %139 : vector<16x32xf32>
    %cst_58 = arith.constant 0.999994993 : f32
    %141 = vector.broadcast %cst_58 : f32 to vector<16x32xf32>
    %142 = arith.mulf %140, %141 : vector<16x32xf32>
    %cst_59 = arith.constant 0.000000e+00 : f32
    %143 = vector.broadcast %cst_59 : f32 to vector<16x32xf32>
    %144 = arith.subf %143, %142 : vector<16x32xf32>
    %145 = math.exp %144 : vector<16x32xf32>
    %cst_60 = arith.constant 1.000000e+00 : f32
    %146 = vector.broadcast %cst_60 : f32 to vector<16x32xf32>
    %147 = arith.addf %146, %145 : vector<16x32xf32>
    %148 = tpu.reciprocal %147 {approx = true} : vector<16x32xf32> -> vector<16x32xf32>
    %149 = arith.mulf %142, %148 : vector<16x32xf32>
    %150 = arith.truncf %149 : vector<16x32xf32> to vector<16x32xbf16>
    %c0_61 = arith.constant 0 : index
    %c0_62 = arith.constant 0 : index
    %151 = vector.load %arg8[%c0_61, %c0_62] : memref<32x32xbf16, #tpu.memory_space<vmem>>, vector<32x32xbf16>
    %cst_63 = arith.constant dense<0.000000e+00> : vector<16x32xf32>
    %152 = tpu.matmul %150, %151, %cst_63 {dimension_numbers = #tpu.dot_dimension_numbers<[1], [0], [0], [1], [0, 0, 1, 1], [], []>} : vector<16x32xbf16>, vector<32x32xbf16>, vector<16x32xf32> -> vector<16x32xf32>
    %c0_64 = arith.constant 0 : index
    %c0_65 = arith.constant 0 : index
    %153 = vector.load %arg9[%c0_64, %c0_65] : memref<1x32xf32, #tpu.memory_space<vmem>>, vector<1x32xf32>
    %154 = vector.broadcast %153 : vector<1x32xf32> to vector<16x32xf32>
    %155 = arith.addf %152, %154 : vector<16x32xf32>
    %156 = arith.extf %1 : vector<16x32xbf16> to vector<16x32xf32>
    %157 = arith.addf %156, %155 : vector<16x32xf32>
    %c0_66 = arith.constant 0 : index
    %c0_67 = arith.constant 0 : index
    %158 = vector.load %arg10[%c0_66, %c0_67] : memref<1x32xf32, #tpu.memory_space<vmem>>, vector<1x32xf32>
    %c0_68 = arith.constant 0 : index
    %c0_69 = arith.constant 0 : index
    %159 = vector.load %arg11[%c0_68, %c0_69] : memref<1x32xf32, #tpu.memory_space<vmem>>, vector<1x32xf32>
    %cst_70 = arith.constant dense<0.000000e+00> : vector<16xf32>
    %160 = vector.multi_reduction <add>, %157, %cst_70 [1] : vector<16x32xf32> to vector<16xf32>
    %161 = vector.shape_cast %160 : vector<16xf32> to vector<16x1xf32>
    %cst_71 = arith.constant 3.200000e+01 : f32
    %162 = vector.broadcast %cst_71 : f32 to vector<16x1xf32>
    %163 = arith.divf %161, %162 : vector<16x1xf32>
    %164 = vector.broadcast %163 : vector<16x1xf32> to vector<16x32xf32>
    %165 = arith.subf %157, %164 : vector<16x32xf32>
    %166 = arith.mulf %165, %165 : vector<16x32xf32>
    %cst_72 = arith.constant dense<0.000000e+00> : vector<16xf32>
    %167 = vector.multi_reduction <add>, %166, %cst_72 [1] : vector<16x32xf32> to vector<16xf32>
    %168 = vector.shape_cast %167 : vector<16xf32> to vector<16x1xf32>
    %cst_73 = arith.constant 3.200000e+01 : f32
    %169 = vector.broadcast %cst_73 : f32 to vector<16x1xf32>
    %170 = arith.divf %168, %169 : vector<16x1xf32>
    %171 = vector.broadcast %163 : vector<16x1xf32> to vector<16x32xf32>
    %172 = arith.subf %157, %171 : vector<16x32xf32>
    %cst_74 = arith.constant 9.99999996E-13 : f32
    %173 = vector.broadcast %cst_74 : f32 to vector<16x1xf32>
    %174 = arith.addf %170, %173 : vector<16x1xf32>
    %175 = math.rsqrt %174 : vector<16x1xf32>
    %176 = vector.broadcast %175 : vector<16x1xf32> to vector<16x32xf32>
    %177 = arith.mulf %172, %176 : vector<16x32xf32>
    %178 = vector.broadcast %158 : vector<1x32xf32> to vector<16x32xf32>
    %179 = arith.mulf %177, %178 : vector<16x32xf32>
    %180 = vector.broadcast %159 : vector<1x32xf32> to vector<16x32xf32>
    %181 = arith.addf %179, %180 : vector<16x32xf32>
    %182 = arith.truncf %181 : vector<16x32xf32> to vector<16x32xbf16>
    %c0_75 = arith.constant 0 : index
    %c0_76 = arith.constant 0 : index
    %c0_77 = arith.constant 0 : index
    %183 = vector.load %arg12[%c0_75, %c0_76, %c0_77] : memref<1x16x32xbf16, #tpu.memory_space<vmem>>, vector<1x16x32xbf16>
    %184 = vector.shape_cast %183 : vector<1x16x32xbf16> to vector<16x32xbf16>
    %185 = vector.shape_cast %182 : vector<16x32xbf16> to vector<1x16x32xbf16>
    tpu.vector_store %arg12[%c0_75, %c0_76, %c0_77], %185 {strides = array<i32>} : memref<1x16x32xbf16, #tpu.memory_space<vmem>>, vector<1x16x32xbf16>,
    return
  }
  func.func @transform_0(%arg0: i32) -> (i32, i32, i32) {
    %c0_i32 = arith.constant 0 : i32
    %c0_i32_0 = arith.constant 0 : i32
    %c0_i32_1 = arith.constant 0 : i32
    return %arg0, %c0_i32, %c0_i32_0 : i32, i32, i32
  }
  func.func @transform_1(%arg0: i32) -> (i32, i32) {
    %c0_i32 = arith.constant 0 : i32
    %c0_i32_0 = arith.constant 0 : i32
    %c0_i32_1 = arith.constant 0 : i32
    return %c0_i32, %c0_i32_0 : i32, i32
  }
  func.func @transform_2(%arg0: i32) -> (i32, i32) {
    %c0_i32 = arith.constant 0 : i32
    %c0_i32_0 = arith.constant 0 : i32
    %c0_i32_1 = arith.constant 0 : i32
    return %c0_i32, %c0_i32_0 : i32, i32
  }
  func.func @transform_3(%arg0: i32) -> (i32, i32) {
    %c0_i32 = arith.constant 0 : i32
    %c0_i32_0 = arith.constant 0 : i32
    %c0_i32_1 = arith.constant 0 : i32
    return %c0_i32, %c0_i32_0 : i32, i32
  }
  func.func @transform_4(%arg0: i32) -> (i32, i32) {
    %c0_i32 = arith.constant 0 : i32
    %c0_i32_0 = arith.constant 0 : i32
    %c0_i32_1 = arith.constant 0 : i32
    return %c0_i32, %c0_i32_0 : i32, i32
  }
  func.func @transform_5(%arg0: i32) -> (i32, i32, i32) {
    %c0_i32 = arith.constant 0 : i32
    %c0_i32_0 = arith.constant 0 : i32
    %c0_i32_1 = arith.constant 0 : i32
    %c0_i32_2 = arith.constant 0 : i32
    return %c0_i32, %c0_i32_0, %c0_i32_1 : i32, i32, i32
  }
  func.func @transform_6(%arg0: i32) -> (i32, i32) {
    %c0_i32 = arith.constant 0 : i32
    %c0_i32_0 = arith.constant 0 : i32
    %c0_i32_1 = arith.constant 0 : i32
    return %c0_i32, %c0_i32_0 : i32, i32
  }
  func.func @transform_7(%arg0: i32) -> (i32, i32) {
    %c0_i32 = arith.constant 0 : i32
    %c0_i32_0 = arith.constant 0 : i32
    %c0_i32_1 = arith.constant 0 : i32
    return %c0_i32, %c0_i32_0 : i32, i32
  }
  func.func @transform_8(%arg0: i32) -> (i32, i32) {
    %c0_i32 = arith.constant 0 : i32
    %c0_i32_0 = arith.constant 0 : i32
    %c0_i32_1 = arith.constant 0 : i32
    return %c0_i32, %c0_i32_0 : i32, i32
  }
  func.func @transform_9(%arg0: i32) -> (i32, i32) {
    %c0_i32 = arith.constant 0 : i32
    %c0_i32_0 = arith.constant 0 : i32
    %c0_i32_1 = arith.constant 0 : i32
    return %c0_i32, %c0_i32_0 : i32, i32
  }
  func.func @transform_10(%arg0: i32) -> (i32, i32) {
    %c0_i32 = arith.constant 0 : i32
    %c0_i32_0 = arith.constant 0 : i32
    %c0_i32_1 = arith.constant 0 : i32
    return %c0_i32, %c0_i32_0 : i32, i32
  }
  func.func @transform_11(%arg0: i32) -> (i32, i32, i32) {
    %c0_i32 = arith.constant 0 : i32
    %c0_i32_0 = arith.constant 0 : i32
    %c0_i32_1 = arith.constant 0 : i32
    return %arg0, %c0_i32, %c0_i32_0 : i32, i32, i32
  }
}

module attributes {stable_mosaic.version = 11 : i64} {
  func.func @_linear_act_kernel(%arg0: i32, %arg1: memref<32x32xbf16, #tpu.memory_space<vmem>>, %arg2: memref<32x16xbf16, #tpu.memory_space<vmem>>, %arg3: memref<1x16xf32, #tpu.memory_space<vmem>>, %arg4: memref<32x16xf32, #tpu.memory_space<vmem>>) attributes {dimension_semantics = [#tpu.dimension_semantics<parallel>], iteration_bounds = array<i64: 1>, scalar_prefetch = 0 : i64, scratch_operands = 0 : i64, tpu.core_type = #tpu.core_type<tc>, window_params = [{transform_indices = @transform_0, window_bounds = array<i64: 32, 32>}, {pipeline_mode = #tpu.pipeline_mode<synchronous>, transform_indices = @transform_1, window_bounds = array<i64: 32, 16>}, {pipeline_mode = #tpu.pipeline_mode<synchronous>, transform_indices = @transform_2, window_bounds = array<i64: 1, 16>}, {transform_indices = @transform_3, window_bounds = array<i64: 32, 16>}]} {
    %c0 = arith.constant 0 : index
    %c0_0 = arith.constant 0 : index
    %0 = vector.load %arg1[%c0, %c0_0] : memref<32x32xbf16, #tpu.memory_space<vmem>>, vector<32x32xbf16>
    %c0_1 = arith.constant 0 : index
    %c0_2 = arith.constant 0 : index
    %1 = vector.load %arg2[%c0_1, %c0_2] : memref<32x16xbf16, #tpu.memory_space<vmem>>, vector<32x16xbf16>
    %cst = arith.constant dense<0.000000e+00> : vector<32x16xf32>
    %2 = tpu.matmul %0, %1, %cst {dimension_numbers = #tpu.dot_dimension_numbers<[1], [0], [0], [1], [0, 0, 1, 1], [], []>} : vector<32x32xbf16>, vector<32x16xbf16>, vector<32x16xf32> -> vector<32x16xf32>
    %c0_3 = arith.constant 0 : index
    %c0_4 = arith.constant 0 : index
    %3 = vector.load %arg3[%c0_3, %c0_4] : memref<1x16xf32, #tpu.memory_space<vmem>>, vector<1x16xf32>
    %4 = vector.broadcast %3 : vector<1x16xf32> to vector<32x16xf32>
    %5 = arith.addf %2, %4 : vector<32x16xf32>
    %cst_5 = arith.constant 0.000000e+00 : f32
    %6 = vector.broadcast %cst_5 : f32 to vector<32x16xf32>
    %7 = arith.maximumf %5, %6 : vector<32x16xf32>
    %c0_6 = arith.constant 0 : index
    %c0_7 = arith.constant 0 : index
    %8 = vector.load %arg4[%c0_6, %c0_7] : memref<32x16xf32, #tpu.memory_space<vmem>>, vector<32x16xf32>
    tpu.vector_store %arg4[%c0_6, %c0_7], %7 {strides = array<i32>} : memref<32x16xf32, #tpu.memory_space<vmem>>, vector<32x16xf32>,
    return
  }
  func.func @transform_0(%arg0: i32) -> (i32, i32) {
    %c0_i32 = arith.constant 0 : i32
    %c0_i32_0 = arith.constant 0 : i32
    return %arg0, %c0_i32 : i32, i32
  }
  func.func @transform_1(%arg0: i32) -> (i32, i32) {
    %c0_i32 = arith.constant 0 : i32
    %c0_i32_0 = arith.constant 0 : i32
    %c0_i32_1 = arith.constant 0 : i32
    return %c0_i32, %c0_i32_0 : i32, i32
  }
  func.func @transform_2(%arg0: i32) -> (i32, i32) {
    %c0_i32 = arith.constant 0 : i32
    %c0_i32_0 = arith.constant 0 : i32
    %c0_i32_1 = arith.constant 0 : i32
    return %c0_i32, %c0_i32_0 : i32, i32
  }
  func.func @transform_3(%arg0: i32) -> (i32, i32) {
    %c0_i32 = arith.constant 0 : i32
    %c0_i32_0 = arith.constant 0 : i32
    return %arg0, %c0_i32 : i32, i32
  }
}

</mosaic_0001>

<llo_original>
// kernel: conformer_separator_forward.11
$region0: #{conformer_separator_forward.11}
  #allocation0 [shape = 'u32[]', space=smem, size = 0x4, offset = 0x4, fixed_abs, tag = 'smem constant byte address 0x4 - core index']
  #allocation1 [shape = 'u32[72,128]{1,0:T(1,128)}', space=vmem, size = 0x9000, scoped, tag = 'internal scratch']
  %s0 = inlined_call_operand.vmem [shape: bf16[32,8], index: 0, kind: input, shape index: {}]
  %s1 = inlined_call_operand.vmem [shape: bf16[8,32], index: 1, kind: input, shape index: {}]
  %s2 = inlined_call_operand.vmem [shape: f32[1,32], index: 2, kind: input, shape index: {}]
  %s3 = inlined_call_operand.vmem [shape: f32[1,32], index: 3, kind: input, shape index: {}]
  %s4 = inlined_call_operand.vmem [shape: f32[1,32], index: 4, kind: input, shape index: {}]
  %s5 = inlined_call_operand.vmem [shape: bf16[32,32], index: 5, kind: output, shape index: {}]
  %s6 = sld [smem:[#allocation0]]
  $region30: #{conformer_separator_forward.11} parent=0
    _
  %s8 = ssub.s32 1, %s6
  %s9 = scalar_select 0, %s8, %s6
  // Predicated region
  $region2: #{conformer_separator_forward.11} parent=0 // pred_check
    _
  $region3: #{conformer_separator_forward.11} parent=0 // pred_check_branch
    %11 = sbr.rel (0) target = $region5
  $region4: #{conformer_separator_forward.11} parent=0 // pred_region
    _
  $region5: #{conformer_separator_forward.11} parent=0 // pred_fallthru
    _
  // Predicated region
  $region6: #{conformer_separator_forward.11} parent=0 // pred_check
    _
  $region7: #{conformer_separator_forward.11} parent=0 // pred_check_branch
    %13 = sbr.rel (0) target = $region9
  $region8: #{conformer_separator_forward.11} parent=0 // pred_region
    _
  $region9: #{conformer_separator_forward.11} parent=0 // pred_fallthru
    _
  // Predicated region
  $region10: #{conformer_separator_forward.11} parent=0 // pred_check
    _
  $region11: #{conformer_separator_forward.11} parent=0 // pred_check_branch
    %15 = sbr.rel (0) target = $region13
  $region12: #{conformer_separator_forward.11} parent=0 // pred_region
    _
  $region13: #{conformer_separator_forward.11} parent=0 // pred_fallthru
    _
  // Predicated region
  $region14: #{conformer_separator_forward.11} parent=0 // pred_check
    _
  $region15: #{conformer_separator_forward.11} parent=0 // pred_check_branch
    %17 = sbr.rel (0) target = $region17
  $region16: #{conformer_separator_forward.11} parent=0 // pred_region
    _
  $region17: #{conformer_separator_forward.11} parent=0 // pred_fallthru
    _
  // Predicated region
  $region18: #{conformer_separator_forward.11} parent=0 // pred_check
    _
  $region19: #{conformer_separator_forward.11} parent=0 // pred_check_branch
    %19 = sbr.rel (0) target = $region21
  $region20: #{conformer_separator_forward.11} parent=0 // pred_region
    _
  $region21: #{conformer_separator_forward.11} parent=0 // pred_fallthru
    _
  %v21 = vld [vmem:[%s0] sm:$0xf]
  %v22 = vld [vmem:[%s0 + $0x4] sm:$0xf]
  %v23 = vld [vmem:[%s0 + $0x8] sm:$0xf]
  %v24 = vld [vmem:[%s0 + $0xc] sm:$0xf]
  %v25 = vld [vmem:[%s1] sm:$0xf]
  %v26 = vld [vmem:[%s2] sm:$0x1]
  %v28 = vperm.slane %v26, 0
  %v34 = vunpack.c.l.b16 %v21
  %v35 = vunpack.c.l.b16 %v22
  %v36 = vunpack.c.l.b16 %v23
  %v37 = vunpack.c.l.b16 %v24
  %v38 = vpack.c.b16 %v35, %v34
  %v39 = vpack.c.b16 %v37, %v36
  %vm40 = vcmask 64512
  %v42 = vsel %vm40, %v38, 0
  %v45 = vsel %vm40, %v39, 0
  %vm47 = vcmask 1043456
  %v49 = vsel %vm47, %v25, 0
  %51 = vmatpush.bf16.msra.mxu0 0
  %52 = vmatpush.bf16.msra.mxu0 0
  %53 = vmatpush.bf16.msra.mxu0 0
  %54 = vmatpush.bf16.msra.mxu0 0
  %55 = vmatpush.bf16.msra.mxu0 0
  %56 = vmatpush.bf16.msra.mxu0 0
  %57 = vmatpush.bf16.msra.mxu0 0
  %58 = vmatpush.bf16.msra.mxu0 %v49
  %59 = vmatmul.bf16.gmra.mxu0 %v42
  %v60 = vpop.f32.mrf.mxu0
  %v61 = vadd.f32 %v28, %v60
  %v62 = vpop.f32.mrf.mxu0
  %v63 = vadd.f32 %v28, %v62
  %64 = vmatmul.bf16.gmra.mxu0 %v45
  %v65 = vpop.f32.mrf.mxu0
  %v66 = vadd.f32 %v28, %v65
  %v67 = vpop.f32.mrf.mxu0
  %v68 = vadd.f32 %v28, %v67
  %69 = vdwg.mxu0
  %v70 = vld [vmem:[%s3] sm:$0x1]
  %v71 = vld [vmem:[%s4] sm:$0x1]
  %vm72 = vcmask 261120
  %v73 = vsel %vm72, %v61, 0.0
  %74 = vadd.xlane.f32.xlu0 %v73
  %v75 = vpop.xlane.xlu0 %74
  %v76 = vsel %vm72, %v63, 0.0
  %77 = vadd.xlane.f32.xlu0 %v76
  %v78 = vpop.xlane.xlu0 %77
  %v79 = vsel %vm72, %v66, 0.0
  %80 = vadd.xlane.f32.xlu0 %v79
  %v81 = vpop.xlane.xlu0 %80
  %v82 = vsel %vm72, %v68, 0.0
  %83 = vadd.xlane.f32.xlu0 %v82
  %v84 = vpop.xlane.xlu0 %83
  %v85 = vrcp.pop 32.0
  %v86 = vmul.f32 32.0, %v85
  %v87 = vsub.f32 1.0, %v86
  %v88 = vmul.f32 %v85, %v87
  %v89 = vadd.f32 %v85, %v88
  %vm90 = vweird.f32 %v85
  %v91 = vsel %vm90, %v85, %v89
  %v92 = vmul.f32 %v75, %v91
  %v93 = vmul.f32 %v78, %v91
  %v94 = vmul.f32 %v81, %v91
  %v95 = vmul.f32 %v84, %v91
  %v96 = vsub.f32 %v61, %v92
  %v97 = vsub.f32 %v63, %v93
  %v98 = vsub.f32 %v66, %v94
  %v99 = vsub.f32 %v68, %v95
  %v100 = vmul.f32 %v96, %v96
  %v101 = vmul.f32 %v97, %v97
  %v102 = vmul.f32 %v98, %v98
  %v103 = vmul.f32 %v99, %v99
  %v104 = vsel %vm72, %v100, 0.0
  %105 = vadd.xlane.f32.xlu0 %v104
  %v106 = vpop.xlane.xlu0 %105
  %v107 = vsel %vm72, %v101, 0.0
  %108 = vadd.xlane.f32.xlu0 %v107
  %v109 = vpop.xlane.xlu0 %108
  %v110 = vsel %vm72, %v102, 0.0
  %111 = vadd.xlane.f32.xlu0 %v110
  %v112 = vpop.xlane.xlu0 %111
  %v113 = vsel %vm72, %v103, 0.0
  %114 = vadd.xlane.f32.xlu0 %v113
  %v115 = vpop.xlane.xlu0 %114
  %v116 = vmul.f32 %v106, %v91
  %v117 = vmul.f32 %v109, %v91
  %v118 = vmul.f32 %v112, %v91
  %v119 = vmul.f32 %v115, %v91
  %v120 = vadd.f32 %v116, 1e-12
  %v121 = vadd.f32 %v117, 1e-12
  %v122 = vadd.f32 %v118, 1e-12
  %v123 = vadd.f32 %v119, 1e-12
  %v124 = vrsqrt.pop %v120
  %v125 = vmul.f32 %v124, %v120
  %v126 = vmul.f32 %v125, %v124
  %v127 = vmul.f32 0.5, %v126
  %v128 = vsub.f32 1.5, %v127
  %v129 = vmul.f32 %v124, %v128
  %vm130 = vweird.f32 %v120
  %vm131 = vweird.f32 %v124
  %vm132 = vmor %vm130, %vm131
  %v133 = vsel %vm132, %v124, %v129
  %v134 = vrsqrt.pop %v121
  %v135 = vmul.f32 %v134, %v121
  %v136 = vmul.f32 %v135, %v134
  %v137 = vmul.f32 0.5, %v136
  %v138 = vsub.f32 1.5, %v137
  %v139 = vmul.f32 %v134, %v138
  %vm140 = vweird.f32 %v121
  %vm141 = vweird.f32 %v134
  %vm142 = vmor %vm140, %vm141
  %v143 = vsel %vm142, %v134, %v139
  %v144 = vrsqrt.pop %v122
  %v145 = vmul.f32 %v144, %v122
  %v146 = vmul.f32 %v145, %v144
  %v147 = vmul.f32 0.5, %v146
  %v148 = vsub.f32 1.5, %v147
  %v149 = vmul.f32 %v144, %v148
  %vm150 = vweird.f32 %v122
  %vm151 = vweird.f32 %v144
  %vm152 = vmor %vm150, %vm151
  %v153 = vsel %vm152, %v144, %v149
  %v154 = vrsqrt.pop %v123
  %v155 = vmul.f32 %v154, %v123
  %v156 = vmul.f32 %v155, %v154
  %v157 = vmul.f32 0.5, %v156
  %v158 = vsub.f32 1.5, %v157
  %v159 = vmul.f32 %v154, %v158
  %vm160 = vweird.f32 %v123
  %vm161 = vweird.f32 %v154
  %vm162 = vmor %vm160, %vm161
  %v163 = vsel %vm162, %v154, %v159
  %v164 = vmul.f32 %v96, %v133
  %v165 = vmul.f32 %v97, %v143
  %v166 = vmul.f32 %v98, %v153
  %v167 = vmul.f32 %v99, %v163
  %v169 = vperm.slane %v70, 0
  %v171 = vmul.f32 %v164, %v169
  %v172 = vmul.f32 %v165, %v169
  %v173 = vmul.f32 %v166, %v169
  %v174 = vmul.f32 %v167, %v169
  %v176 = vperm.slane %v71, 0
  %v178 = vadd.f32 %v171, %v176
  %v179 = vadd.f32 %v172, %v176
  %v180 = vadd.f32 %v173, %v176
  %v181 = vadd.f32 %v174, %v176
  %v182 = vmul.f32 %v178, 5.656854
  %v183 = vmul.f32 %v179, 5.656854
  %v184 = vmul.f32 %v180, 5.656854
  %v185 = vmul.f32 %v181, 5.656854
  %v186 = vpack.c.bf16 %v182, %v182
  %v187 = vpack.c.bf16 %v183, %v183
  %v188 = vpack.c.bf16 %v184, %v184
  %v189 = vpack.c.bf16 %v185, %v185
  %vm190 = vcmask 257024
  %191 = vst.msk [vmem:[%s5] sm:$0xf] %vm190, %v186
  %192 = vst.msk [vmem:[%s5 + $0x4] sm:$0xf] %vm190, %v187
  %193 = vst.msk [vmem:[%s5 + $0x8] sm:$0xf] %vm190, %v188
  %194 = vst.msk [vmem:[%s5 + $0xc] sm:$0xf] %vm190, %v189
  // Predicated region
  $region22: #{conformer_separator_forward.11} parent=0 // pred_check
    _
  $region23: #{conformer_separator_forward.11} parent=0 // pred_check_branch
    %196 = sbr.rel (0) target = $region25
  $region24: #{conformer_separator_forward.11} parent=0 // pred_region
    _
  $region25: #{conformer_separator_forward.11} parent=0 // pred_fallthru
    _
  // Predicated region
  $region26: #{conformer_separator_forward.11} parent=0 // pred_check
    _
  $region27: #{conformer_separator_forward.11} parent=0 // pred_check_branch
    %198 = sbr.rel (0) target = $region29
  $region28: #{conformer_separator_forward.11} parent=0 // pred_region
    _
  $region29: #{conformer_separator_forward.11} parent=0 // pred_fallthru
    _

// kernel: conformer_separator_forward.12
$region0: #{conformer_separator_forward.12}
  #allocation0 [shape = 'u32[]', space=smem, size = 0x4, offset = 0x4, fixed_abs, tag = 'smem constant byte address 0x4 - core index']
  #allocation1 [shape = 'u32[72,128]{1,0:T(1,128)}', space=vmem, size = 0x9000, scoped, tag = 'internal scratch']
  %s0 = inlined_call_operand.vmem [shape: bf16[128,32], index: 0, kind: input, shape index: {}]
  %s1 = inlined_call_operand.vmem [shape: bf16[32,64], index: 1, kind: input, shape index: {}]
  %s2 = inlined_call_operand.vmem [shape: f32[1,64], index: 2, kind: input, shape index: {}]
  %s3 = inlined_call_operand.vmem [shape: bf16[128,64], index: 3, kind: output, shape index: {}]
  %s4 = sld [smem:[#allocation0]]
  $region22: #{conformer_separator_forward.12} parent=0
    _
  %s6 = ssub.s32 1, %s4
  %s7 = scalar_select 0, %s6, %s4
  // Predicated region
  $region2: #{conformer_separator_forward.12} parent=0 // pred_check
    _
  $region3: #{conformer_separator_forward.12} parent=0 // pred_check_branch
    %9 = sbr.rel (0) target = $region5
  $region4: #{conformer_separator_forward.12} parent=0 // pred_region
    _
  $region5: #{conformer_separator_forward.12} parent=0 // pred_fallthru
    _
  // Predicated region
  $region6: #{conformer_separator_forward.12} parent=0 // pred_check
    _
  $region7: #{conformer_separator_forward.12} parent=0 // pred_check_branch
    %11 = sbr.rel (0) target = $region9
  $region8: #{conformer_separator_forward.12} parent=0 // pred_region
    _
  $region9: #{conformer_separator_forward.12} parent=0 // pred_fallthru
    _
  // Predicated region
  $region10: #{conformer_separator_forward.12} parent=0 // pred_check
    _
  $region11: #{conformer_separator_forward.12} parent=0 // pred_check_branch
    %13 = sbr.rel (0) target = $region13
  $region12: #{conformer_separator_forward.12} parent=0 // pred_region
    _
  $region13: #{conformer_separator_forward.12} parent=0 // pred_fallthru
    _
  %v15 = vld [vmem:[%s0] sm:$0xf]
  %v16 = vld [vmem:[%s0 + $0x4] sm:$0xf]
  %v17 = vld [vmem:[%s0 + $0x8] sm:$0xf]
  %v18 = vld [vmem:[%s0 + $0xc] sm:$0xf]
  %v19 = vld [vmem:[%s0 + $0x10] sm:$0xf]
  %v20 = vld [vmem:[%s0 + $0x14] sm:$0xf]
  %v21 = vld [vmem:[%s0 + $0x18] sm:$0xf]
  %v22 = vld [vmem:[%s0 + $0x1c] sm:$0xf]
  %v23 = vld [vmem:[%s0 + $0x20] sm:$0xf]
  %v24 = vld [vmem:[%s0 + $0x24] sm:$0xf]
  %v25 = vld [vmem:[%s0 + $0x28] sm:$0xf]
  %v26 = vld [vmem:[%s0 + $0x2c] sm:$0xf]
  %v27 = vld [vmem:[%s0 + $0x30] sm:$0xf]
  %v28 = vld [vmem:[%s0 + $0x34] sm:$0xf]
  %v29 = vld [vmem:[%s0 + $0x38] sm:$0xf]
  %v30 = vld [vmem:[%s0 + $0x3c] sm:$0xf]
  %v31 = vld [vmem:[%s1] sm:$0xf]
  %v32 = vld [vmem:[%s1 + $0x4] sm:$0xf]
  %v33 = vld [vmem:[%s1 + $0x8] sm:$0xf]
  %v34 = vld [vmem:[%s1 + $0xc] sm:$0xf]
  %v35 = vld [vmem:[%s2] sm:$0x1]
  %v37 = vperm.slane %v35, 0
  %v55 = vunpack.c.l.b16 %v15
  %v56 = vunpack.c.l.b16 %v16
  %v57 = vunpack.c.l.b16 %v17
  %v58 = vunpack.c.l.b16 %v18
  %v59 = vunpack.c.l.b16 %v19
  %v60 = vunpack.c.l.b16 %v20
  %v61 = vunpack.c.l.b16 %v21
  %v62 = vunpack.c.l.b16 %v22
  %v63 = vunpack.c.l.b16 %v23
  %v64 = vunpack.c.l.b16 %v24
  %v65 = vunpack.c.l.b16 %v25
  %v66 = vunpack.c.l.b16 %v26
  %v67 = vunpack.c.l.b16 %v27
  %v68 = vunpack.c.l.b16 %v28
  %v69 = vunpack.c.l.b16 %v29
  %v70 = vunpack.c.l.b16 %v30
  %v71 = vpack.c.b16 %v56, %v55
  %v72 = vpack.c.b16 %v58, %v57
  %v73 = vpack.c.b16 %v60, %v59
  %v74 = vpack.c.b16 %v62, %v61
  %v75 = vpack.c.b16 %v64, %v63
  %v76 = vpack.c.b16 %v66, %v65
  %v77 = vpack.c.b16 %v68, %v67
  %v78 = vpack.c.b16 %v70, %v69
  %v83 = vunpack.c.l.b16 %v31
  %v84 = vunpack.c.l.b16 %v32
  %v85 = vunpack.c.l.b16 %v33
  %v86 = vunpack.c.l.b16 %v34
  %v87 = vpack.c.b16 %v84, %v83
  %v88 = vpack.c.b16 %v86, %v85
  %vm91 = vcmask 261120
  %v93 = vsel %vm91, %v71, 0
  %v96 = vsel %vm91, %v72, 0
  %v99 = vsel %vm91, %v73, 0
  %v102 = vsel %vm91, %v74, 0
  %v105 = vsel %vm91, %v75, 0
  %v108 = vsel %vm91, %v76, 0
  %v111 = vsel %vm91, %v77, 0
  %v114 = vsel %vm91, %v78, 0
  %116 = vmatpush.bf16.msra.mxu0 0
  %117 = vmatpush.bf16.msra.mxu0 0
  %118 = vmatpush.bf16.msra.mxu0 0
  %119 = vmatpush.bf16.msra.mxu0 0
  %120 = vmatpush.bf16.msra.mxu0 0
  %121 = vmatpush.bf16.msra.mxu0 0
  %122 = vmatpush.bf16.msra.mxu0 %v88
  %123 = vmatpush.bf16.msra.mxu0 %v87
  %124 = vmatmul.bf16.gmra.mxu0 %v93
  %v125 = vpop.f32.mrf.mxu0
  %v126 = vadd.f32 %v37, %v125
  %v127 = vpop.f32.mrf.mxu0
  %v128 = vadd.f32 %v37, %v127
  %129 = vmatmul.bf16.gmra.mxu0 %v96
  %v130 = vpop.f32.mrf.mxu0
  %v131 = vadd.f32 %v37, %v130
  %v132 = vpop.f32.mrf.mxu0
  %v133 = vadd.f32 %v37, %v132
  %134 = vmatmul.bf16.gmra.mxu0 %v99
  %v135 = vpop.f32.mrf.mxu0
  %v136 = vadd.f32 %v37, %v135
  %v137 = vpop.f32.mrf.mxu0
  %v138 = vadd.f32 %v37, %v137
  %139 = vmatmul.bf16.gmra.mxu0 %v102
  %v140 = vpop.f32.mrf.mxu0
  %v141 = vadd.f32 %v37, %v140
  %v142 = vpop.f32.mrf.mxu0
  %v143 = vadd.f32 %v37, %v142
  %144 = vmatmul.bf16.gmra.mxu0 %v105
  %v145 = vpop.f32.mrf.mxu0
  %v146 = vadd.f32 %v37, %v145
  %v147 = vpop.f32.mrf.mxu0
  %v148 = vadd.f32 %v37, %v147
  %149 = vmatmul.bf16.gmra.mxu0 %v108
  %v150 = vpop.f32.mrf.mxu0
  %v151 = vadd.f32 %v37, %v150
  %v152 = vpop.f32.mrf.mxu0
  %v153 = vadd.f32 %v37, %v152
  %154 = vmatmul.bf16.gmra.mxu0 %v111
  %v155 = vpop.f32.mrf.mxu0
  %v156 = vadd.f32 %v37, %v155
  %v157 = vpop.f32.mrf.mxu0
  %v158 = vadd.f32 %v37, %v157
  %159 = vmatmul.bf16.gmra.mxu0 %v114
  %v160 = vpop.f32.mrf.mxu0
  %v161 = vadd.f32 %v37, %v160
  %v162 = vpop.f32.mrf.mxu0
  %v163 = vadd.f32 %v37, %v162
  %164 = vdwg.mxu0
  %v165 = vpack.c.bf16 %v126, %v126
  %v166 = vpack.c.bf16 %v128, %v128
  %v167 = vpack.c.bf16 %v131, %v131
  %v168 = vpack.c.bf16 %v133, %v133
  %v169 = vpack.c.bf16 %v136, %v136
  %v170 = vpack.c.bf16 %v138, %v138
  %v171 = vpack.c.bf16 %v141, %v141
  %v172 = vpack.c.bf16 %v143, %v143
  %v173 = vpack.c.bf16 %v146, %v146
  %v174 = vpack.c.bf16 %v148, %v148
  %v175 = vpack.c.bf16 %v151, %v151
  %v176 = vpack.c.bf16 %v153, %v153
  %v177 = vpack.c.bf16 %v156, %v156
  %v178 = vpack.c.bf16 %v158, %v158
  %v179 = vpack.c.bf16 %v161, %v161
  %v180 = vpack.c.bf16 %v163, %v163
  %vm181 = vcmask 519168
  %182 = vst.msk [vmem:[%s3] sm:$0xf] %vm181, %v165
  %183 = vst.msk [vmem:[%s3 + $0x4] sm:$0xf] %vm181, %v166
  %184 = vst.msk [vmem:[%s3 + $0x8] sm:$0xf] %vm181, %v167
  %185 = vst.msk [vmem:[%s3 + $0xc] sm:$0xf] %vm181, %v168
  %186 = vst.msk [vmem:[%s3 + $0x10] sm:$0xf] %vm181, %v169
  %187 = vst.msk [vmem:[%s3 + $0x14] sm:$0xf] %vm181, %v170
  %188 = vst.msk [vmem:[%s3 + $0x18] sm:$0xf] %vm181, %v171
  %189 = vst.msk [vmem:[%s3 + $0x1c] sm:$0xf] %vm181, %v172
  %190 = vst.msk [vmem:[%s3 + $0x20] sm:$0xf] %vm181, %v173
  %191 = vst.msk [vmem:[%s3 + $0x24] sm:$0xf] %vm181, %v174
  %192 = vst.msk [vmem:[%s3 + $0x28] sm:$0xf] %vm181, %v175
  %193 = vst.msk [vmem:[%s3 + $0x2c] sm:$0xf] %vm181, %v176
  %194 = vst.msk [vmem:[%s3 + $0x30] sm:$0xf] %vm181, %v177
  %195 = vst.msk [vmem:[%s3 + $0x34] sm:$0xf] %vm181, %v178
  %196 = vst.msk [vmem:[%s3 + $0x38] sm:$0xf] %vm181, %v179
  %197 = vst.msk [vmem:[%s3 + $0x3c] sm:$0xf] %vm181, %v180
  // Predicated region
  $region14: #{conformer_separator_forward.12} parent=0 // pred_check
    _
  $region15: #{conformer_separator_forward.12} parent=0 // pred_check_branch
    %199 = sbr.rel (0) target = $region17
  $region16: #{conformer_separator_forward.12} parent=0 // pred_region
    _
  $region17: #{conformer_separator_forward.12} parent=0 // pred_fallthru
    _
  // Predicated region
  $region18: #{conformer_separator_forward.12} parent=0 // pred_check
    _
  $region19: #{conformer_separator_forward.12} parent=0 // pred_check_branch
    %201 = sbr.rel (0) target = $region21
  $region20: #{conformer_separator_forward.12} parent=0 // pred_region
    _
  $region21: #{conformer_separator_forward.12} parent=0 // pred_fallthru
    _

// kernel: conformer_separator_forward.13
$region0: #{conformer_separator_forward.13}
  #allocation0 [shape = 'u32[]', space=smem, size = 0x4, offset = 0x4, fixed_abs, tag = 'smem constant byte address 0x4 - core index']
  #allocation1 [shape = 'u32[72,128]{1,0:T(1,128)}', space=vmem, size = 0x9000, scoped, tag = 'internal scratch']
  %s0 = inlined_call_operand.vmem [shape: bf16[32,32], index: 0, kind: input, shape index: {}]
  %s1 = inlined_call_operand.vmem [shape: bf16[32,64], index: 1, kind: input, shape index: {}]
  %s2 = inlined_call_operand.vmem [shape: f32[1,64], index: 2, kind: input, shape index: {}]
  %s3 = inlined_call_operand.vmem [shape: bf16[64,32], index: 3, kind: input, shape index: {}]
  %s4 = inlined_call_operand.vmem [shape: f32[1,32], index: 4, kind: input, shape index: {}]
  %s5 = inlined_call_operand.vmem [shape: f32[1,32], index: 5, kind: input, shape index: {}]
  %s6 = inlined_call_operand.vmem [shape: f32[1,32], index: 6, kind: input, shape index: {}]
  %s7 = inlined_call_operand.vmem [shape: bf16[32,32], index: 7, kind: output, shape index: {}]
  %s8 = sld [smem:[#allocation0]]
  $region38: #{conformer_separator_forward.13} parent=0
    _
  %s10 = ssub.s32 1, %s8
  %s11 = scalar_select 0, %s10, %s8
  // Predicated region
  $region2: #{conformer_separator_forward.13} parent=0 // pred_check
    _
  $region3: #{conformer_separator_forward.13} parent=0 // pred_check_branch
    %13 = sbr.rel (0) target = $region5
  $region4: #{conformer_separator_forward.13} parent=0 // pred_region
    _
  $region5: #{conformer_separator_forward.13} parent=0 // pred_fallthru
    _
  // Predicated region
  $region6: #{conformer_separator_forward.13} parent=0 // pred_check
    _
  $region7: #{conformer_separator_forward.13} parent=0 // pred_check_branch
    %15 = sbr.rel (0) target = $region9
  $region8: #{conformer_separator_forward.13} parent=0 // pred_region
    _
  $region9: #{conformer_separator_forward.13} parent=0 // pred_fallthru
    _
  // Predicated region
  $region10: #{conformer_separator_forward.13} parent=0 // pred_check
    _
  $region11: #{conformer_separator_forward.13} parent=0 // pred_check_branch
    %17 = sbr.rel (0) target = $region13
  $region12: #{conformer_separator_forward.13} parent=0 // pred_region
    _
  $region13: #{conformer_separator_forward.13} parent=0 // pred_fallthru
    _
  // Predicated region
  $region14: #{conformer_separator_forward.13} parent=0 // pred_check
    _
  $region15: #{conformer_separator_forward.13} parent=0 // pred_check_branch
    %19 = sbr.rel (0) target = $region17
  $region16: #{conformer_separator_forward.13} parent=0 // pred_region
    _
  $region17: #{conformer_separator_forward.13} parent=0 // pred_fallthru
    _
  // Predicated region
  $region18: #{conformer_separator_forward.13} parent=0 // pred_check
    _
  $region19: #{conformer_separator_forward.13} parent=0 // pred_check_branch
    %21 = sbr.rel (0) target = $region21
  $region20: #{conformer_separator_forward.13} parent=0 // pred_region
    _
  $region21: #{conformer_separator_forward.13} parent=0 // pred_fallthru
    _
  // Predicated region
  $region22: #{conformer_separator_forward.13} parent=0 // pred_check
    _
  $region23: #{conformer_separator_forward.13} parent=0 // pred_check_branch
    %23 = sbr.rel (0) target = $region25
  $region24: #{conformer_separator_forward.13} parent=0 // pred_region
    _
  $region25: #{conformer_separator_forward.13} parent=0 // pred_fallthru
    _
  // Predicated region
  $region26: #{conformer_separator_forward.13} parent=0 // pred_check
    _
  $region27: #{conformer_separator_forward.13} parent=0 // pred_check_branch
    %25 = sbr.rel (0) target = $region29
  $region28: #{conformer_separator_forward.13} parent=0 // pred_region
    _
  $region29: #{conformer_separator_forward.13} parent=0 // pred_fallthru
    _
  %v27 = vld [vmem:[%s0] sm:$0xf]
  %v28 = vld [vmem:[%s0 + $0x4] sm:$0xf]
  %v29 = vld [vmem:[%s0 + $0x8] sm:$0xf]
  %v30 = vld [vmem:[%s0 + $0xc] sm:$0xf]
  %v31 = vld [vmem:[%s1] sm:$0xf]
  %v32 = vld [vmem:[%s1 + $0x4] sm:$0xf]
  %v33 = vld [vmem:[%s1 + $0x8] sm:$0xf]
  %v34 = vld [vmem:[%s1 + $0xc] sm:$0xf]
  %v35 = vld [vmem:[%s2] sm:$0x1]
  %v37 = vperm.slane %v35, 0
  %v43 = vunpack.c.l.b16 %v27
  %v44 = vunpack.c.l.b16 %v28
  %v45 = vunpack.c.l.b16 %v29
  %v46 = vunpack.c.l.b16 %v30
  %v47 = vpack.c.b16 %v44, %v43
  %v48 = vpack.c.b16 %v46, %v45
  %v53 = vunpack.c.l.b16 %v31
  %v54 = vunpack.c.l.b16 %v32
  %v55 = vunpack.c.l.b16 %v33
  %v56 = vunpack.c.l.b16 %v34
  %v57 = vpack.c.b16 %v54, %v53
  %v58 = vpack.c.b16 %v56, %v55
  %vm61 = vcmask 261120
  %v63 = vsel %vm61, %v47, 0
  %v66 = vsel %vm61, %v48, 0
  %68 = vmatpush.bf16.msra.mxu0 0
  %69 = vmatpush.bf16.msra.mxu0 0
  %70 = vmatpush.bf16.msra.mxu0 0
  %71 = vmatpush.bf16.msra.mxu0 0
  %72 = vmatpush.bf16.msra.mxu0 0
  %73 = vmatpush.bf16.msra.mxu0 0
  %74 = vmatpush.bf16.msra.mxu0 %v58
  %75 = vmatpush.bf16.msra.mxu0 %v57
  %76 = vmatmul.bf16.gmra.mxu0 %v63
  %v77 = vpop.f32.mrf.mxu0
  %v78 = vadd.f32 %v37, %v77
  %v79 = vpop.f32.mrf.mxu0
  %v80 = vadd.f32 %v37, %v79
  %81 = vmatmul.bf16.gmra.mxu0 %v66
  %v82 = vpop.f32.mrf.mxu0
  %v83 = vadd.f32 %v37, %v82
  %v84 = vpop.f32.mrf.mxu0
  %v85 = vadd.f32 %v37, %v84
  %86 = vdwg.mxu0
  %v87 = vsub.f32 0.0, %v78
  %v88 = vsub.f32 0.0, %v80
  %v89 = vsub.f32 0.0, %v83
  %v90 = vsub.f32 0.0, %v85
  %v91 = vmul.f32 %v87, 1.442695
  %v92 = vpow.pop %v91
  %v93 = vmul.f32 %v88, 1.442695
  %v94 = vpow.pop %v93
  %v95 = vmul.f32 %v89, 1.442695
  %v96 = vpow.pop %v95
  %v97 = vmul.f32 %v90, 1.442695
  %v98 = vpow.pop %v97
  %v99 = vadd.f32 %v92, 1.0
  %v100 = vadd.f32 %v94, 1.0
  %v101 = vadd.f32 %v96, 1.0
  %v102 = vadd.f32 %v98, 1.0
  %v103 = vrcp.pop %v99
  %v104 = vrcp.pop %v100
  %v105 = vrcp.pop %v101
  %v106 = vrcp.pop %v102
  %v107 = vmul.f32 %v78, %v103
  %v108 = vmul.f32 %v80, %v104
  %v109 = vmul.f32 %v83, %v105
  %v110 = vmul.f32 %v85, %v106
  %v111 = vpack.c.bf16 %v108, %v107
  %v112 = vpack.c.bf16 %v110, %v109
  %v113 = vld [vmem:[%s3] sm:$0xf]
  %v114 = vld [vmem:[%s3 + $0x4] sm:$0xf]
  %v115 = vld [vmem:[%s3 + $0x8] sm:$0xf]
  %v116 = vld [vmem:[%s3 + $0xc] sm:$0xf]
  %v117 = vld [vmem:[%s3 + $0x10] sm:$0xf]
  %v118 = vld [vmem:[%s3 + $0x14] sm:$0xf]
  %v119 = vld [vmem:[%s3 + $0x18] sm:$0xf]
  %v120 = vld [vmem:[%s3 + $0x1c] sm:$0xf]
  %v121 = vld [vmem:[%s4] sm:$0x1]
  %v123 = vperm.slane %v121, 0
  %v133 = vunpack.c.l.b16 %v113
  %v134 = vunpack.c.l.b16 %v114
  %v135 = vunpack.c.l.b16 %v115
  %v136 = vunpack.c.l.b16 %v116
  %v137 = vunpack.c.l.b16 %v117
  %v138 = vunpack.c.l.b16 %v118
  %v139 = vunpack.c.l.b16 %v119
  %v140 = vunpack.c.l.b16 %v120
  %v141 = vpack.c.b16 %v134, %v133
  %v142 = vpack.c.b16 %v136, %v135
  %v143 = vpack.c.b16 %v138, %v137
  %v144 = vpack.c.b16 %v140, %v139
  %vm149 = vcmask 523264
  %v151 = vsel %vm149, %v111, 0
  %v154 = vsel %vm149, %v112, 0
  %156 = vmatpush.bf16.msra.mxu0 0
  %157 = vmatpush.bf16.msra.mxu0 0
  %158 = vmatpush.bf16.msra.mxu0 0
  %159 = vmatpush.bf16.msra.mxu0 0
  %160 = vmatpush.bf16.msra.mxu0 %v144
  %161 = vmatpush.bf16.msra.mxu0 %v143
  %162 = vmatpush.bf16.msra.mxu0 %v142
  %163 = vmatpush.bf16.msra.mxu0 %v141
  %164 = vmatmul.bf16.gmra.mxu0 %v151
  %v165 = vpop.f32.mrf.mxu0
  %v166 = vadd.f32 %v123, %v165
  %v167 = vpop.f32.mrf.mxu0
  %v168 = vadd.f32 %v123, %v167
  %169 = vmatmul.bf16.gmra.mxu0 %v154
  %v170 = vpop.f32.mrf.mxu0
  %v171 = vadd.f32 %v123, %v170
  %v172 = vpop.f32.mrf.mxu0
  %v173 = vadd.f32 %v123, %v172
  %174 = vdwg.mxu0
  %v175 = vunpack.c.l.bf16 %v27
  %v176 = vunpack.c.l.bf16 %v28
  %v177 = vunpack.c.l.bf16 %v29
  %v178 = vunpack.c.l.bf16 %v30
  %v179 = vmul.f32 %v166, 0.5
  %v180 = vmul.f32 %v168, 0.5
  %v181 = vmul.f32 %v171, 0.5
  %v182 = vmul.f32 %v173, 0.5
  %v183 = vadd.f32 %v175, %v179
  %v184 = vadd.f32 %v176, %v180
  %v185 = vadd.f32 %v177, %v181
  %v186 = vadd.f32 %v178, %v182
  %v187 = vld [vmem:[%s5] sm:$0x1]
  %v188 = vld [vmem:[%s6] sm:$0x1]
  %v189 = vsel %vm61, %v183, 0.0
  %190 = vadd.xlane.f32.xlu0 %v189
  %v191 = vpop.xlane.xlu0 %190
  %v192 = vsel %vm61, %v184, 0.0
  %193 = vadd.xlane.f32.xlu0 %v192
  %v194 = vpop.xlane.xlu0 %193
  %v195 = vsel %vm61, %v185, 0.0
  %196 = vadd.xlane.f32.xlu0 %v195
  %v197 = vpop.xlane.xlu0 %196
  %v198 = vsel %vm61, %v186, 0.0
  %199 = vadd.xlane.f32.xlu0 %v198
  %v200 = vpop.xlane.xlu0 %199
  %v201 = vrcp.pop 32.0
  %v202 = vmul.f32 32.0, %v201
  %v203 = vsub.f32 1.0, %v202
  %v204 = vmul.f32 %v201, %v203
  %v205 = vadd.f32 %v201, %v204
  %vm206 = vweird.f32 %v201
  %v207 = vsel %vm206, %v201, %v205
  %v208 = vmul.f32 %v191, %v207
  %v209 = vmul.f32 %v194, %v207
  %v210 = vmul.f32 %v197, %v207
  %v211 = vmul.f32 %v200, %v207
  %v212 = vsub.f32 %v183, %v208
  %v213 = vsub.f32 %v184, %v209
  %v214 = vsub.f32 %v185, %v210
  %v215 = vsub.f32 %v186, %v211
  %v216 = vmul.f32 %v212, %v212
  %v217 = vmul.f32 %v213, %v213
  %v218 = vmul.f32 %v214, %v214
  %v219 = vmul.f32 %v215, %v215
  %v220 = vsel %vm61, %v216, 0.0
  %221 = vadd.xlane.f32.xlu0 %v220
  %v222 = vpop.xlane.xlu0 %221
  %v223 = vsel %vm61, %v217, 0.0
  %224 = vadd.xlane.f32.xlu0 %v223
  %v225 = vpop.xlane.xlu0 %224
  %v226 = vsel %vm61, %v218, 0.0
  %227 = vadd.xlane.f32.xlu0 %v226
  %v228 = vpop.xlane.xlu0 %227
  %v229 = vsel %vm61, %v219, 0.0
  %230 = vadd.xlane.f32.xlu0 %v229
  %v231 = vpop.xlane.xlu0 %230
  %v232 = vmul.f32 %v222, %v207
  %v233 = vmul.f32 %v225, %v207
  %v234 = vmul.f32 %v228, %v207
  %v235 = vmul.f32 %v231, %v207
  %v236 = vadd.f32 %v232, 1e-12
  %v237 = vadd.f32 %v233, 1e-12
  %v238 = vadd.f32 %v234, 1e-12
  %v239 = vadd.f32 %v235, 1e-12
  %v240 = vrsqrt.pop %v236
  %v241 = vmul.f32 %v240, %v236
  %v242 = vmul.f32 %v241, %v240
  %v243 = vmul.f32 0.5, %v242
  %v244 = vsub.f32 1.5, %v243
  %v245 = vmul.f32 %v240, %v244
  %vm246 = vweird.f32 %v236
  %vm247 = vweird.f32 %v240
  %vm248 = vmor %vm246, %vm247
  %v249 = vsel %vm248, %v240, %v245
  %v250 = vrsqrt.pop %v237
  %v251 = vmul.f32 %v250, %v237
  %v252 = vmul.f32 %v251, %v250
  %v253 = vmul.f32 0.5, %v252
  %v254 = vsub.f32 1.5, %v253
  %v255 = vmul.f32 %v250, %v254
  %vm256 = vweird.f32 %v237
  %vm257 = vweird.f32 %v250
  %vm258 = vmor %vm256, %vm257
  %v259 = vsel %vm258, %v250, %v255
  %v260 = vrsqrt.pop %v238
  %v261 = vmul.f32 %v260, %v238
  %v262 = vmul.f32 %v261, %v260
  %v263 = vmul.f32 0.5, %v262
  %v264 = vsub.f32 1.5, %v263
  %v265 = vmul.f32 %v260, %v264
  %vm266 = vweird.f32 %v238
  %vm267 = vweird.f32 %v260
  %vm268 = vmor %vm266, %vm267
  %v269 = vsel %vm268, %v260, %v265
  %v270 = vrsqrt.pop %v239
  %v271 = vmul.f32 %v270, %v239
  %v272 = vmul.f32 %v271, %v270
  %v273 = vmul.f32 0.5, %v272
  %v274 = vsub.f32 1.5, %v273
  %v275 = vmul.f32 %v270, %v274
  %vm276 = vweird.f32 %v239
  %vm277 = vweird.f32 %v270
  %vm278 = vmor %vm276, %vm277
  %v279 = vsel %vm278, %v270, %v275
  %v280 = vmul.f32 %v212, %v249
  %v281 = vmul.f32 %v213, %v259
  %v282 = vmul.f32 %v214, %v269
  %v283 = vmul.f32 %v215, %v279
  %v285 = vperm.slane %v187, 0
  %v287 = vmul.f32 %v280, %v285
  %v288 = vmul.f32 %v281, %v285
  %v289 = vmul.f32 %v282, %v285
  %v290 = vmul.f32 %v283, %v285
  %v292 = vperm.slane %v188, 0
  %v294 = vadd.f32 %v287, %v292
  %v295 = vadd.f32 %v288, %v292
  %v296 = vadd.f32 %v289, %v292
  %v297 = vadd.f32 %v290, %v292
  %v298 = vpack.c.bf16 %v294, %v294
  %v299 = vpack.c.bf16 %v295, %v295
  %v300 = vpack.c.bf16 %v296, %v296
  %v301 = vpack.c.bf16 %v297, %v297
  %vm302 = vcmask 257024
  %303 = vst.msk [vmem:[%s7] sm:$0xf] %vm302, %v298
  %304 = vst.msk [vmem:[%s7 + $0x4] sm:$0xf] %vm302, %v299
  %305 = vst.msk [vmem:[%s7 + $0x8] sm:$0xf] %vm302, %v300
  %306 = vst.msk [vmem:[%s7 + $0xc] sm:$0xf] %vm302, %v301
  // Predicated region
  $region30: #{conformer_separator_forward.13} parent=0 // pred_check
    _
  $region31: #{conformer_separator_forward.13} parent=0 // pred_check_branch
    %308 = sbr.rel (0) target = $region33
  $region32: #{conformer_separator_forward.13} parent=0 // pred_region
    _
  $region33: #{conformer_separator_forward.13} parent=0 // pred_fallthru
    _
  // Predicated region
  $region34: #{conformer_separator_forward.13} parent=0 // pred_check
    _
  $region35: #{conformer_separator_forward.13} parent=0 // pred_check_branch
    %310 = sbr.rel (0) target = $region37
  $region36: #{conformer_separator_forward.13} parent=0 // pred_region
    _
  $region37: #{conformer_separator_forward.13} parent=0 // pred_fallthru
    _

// kernel: conformer_separator_forward.21
$region0: #{conformer_separator_forward.21}
  #allocation0 [shape = 'u32[]', space=smem, size = 0x4, offset = 0x4, fixed_abs, tag = 'smem constant byte address 0x4 - core index']
  #allocation1 [shape = 'u32[72,128]{1,0:T(1,128)}', space=vmem, size = 0x9000, scoped, tag = 'internal scratch']
  %s0 = inlined_call_operand.vmem [shape: bf16[32,32], index: 0, kind: input, shape index: {}]
  %s1 = inlined_call_operand.vmem [shape: bf16[32,16], index: 1, kind: input, shape index: {}]
  %s2 = inlined_call_operand.vmem [shape: f32[1,16], index: 2, kind: input, shape index: {}]
  %s3 = inlined_call_operand.vmem [shape: f32[32,16], index: 3, kind: output, shape index: {}]
  %s4 = sld [smem:[#allocation0]]
  $region22: #{conformer_separator_forward.21} parent=0
    _
  %s6 = ssub.s32 1, %s4
  %s7 = scalar_select 0, %s6, %s4
  // Predicated region
  $region2: #{conformer_separator_forward.21} parent=0 // pred_check
    _
  $region3: #{conformer_separator_forward.21} parent=0 // pred_check_branch
    %9 = sbr.rel (0) target = $region5
  $region4: #{conformer_separator_forward.21} parent=0 // pred_region
    _
  $region5: #{conformer_separator_forward.21} parent=0 // pred_fallthru
    _
  // Predicated region
  $region6: #{conformer_separator_forward.21} parent=0 // pred_check
    _
  $region7: #{conformer_separator_forward.21} parent=0 // pred_check_branch
    %11 = sbr.rel (0) target = $region9
  $region8: #{conformer_separator_forward.21} parent=0 // pred_region
    _
  $region9: #{conformer_separator_forward.21} parent=0 // pred_fallthru
    _
  // Predicated region
  $region10: #{conformer_separator_forward.21} parent=0 // pred_check
    _
  $region11: #{conformer_separator_forward.21} parent=0 // pred_check_branch
    %13 = sbr.rel (0) target = $region13
  $region12: #{conformer_separator_forward.21} parent=0 // pred_region
    _
  $region13: #{conformer_separator_forward.21} parent=0 // pred_fallthru
    _
  %v15 = vld [vmem:[%s0] sm:$0xf]
  %v16 = vld [vmem:[%s0 + $0x4] sm:$0xf]
  %v17 = vld [vmem:[%s0 + $0x8] sm:$0xf]
  %v18 = vld [vmem:[%s0 + $0xc] sm:$0xf]
  %v19 = vld [vmem:[%s1] sm:$0xf]
  %v20 = vld [vmem:[%s1 + $0x4] sm:$0xf]
  %v21 = vld [vmem:[%s1 + $0x8] sm:$0xf]
  %v22 = vld [vmem:[%s1 + $0xc] sm:$0xf]
  %v23 = vld [vmem:[%s2] sm:$0x1]
  %v25 = vperm.slane %v23, 0
  %v31 = vunpack.c.l.b16 %v15
  %v32 = vunpack.c.l.b16 %v16
  %v33 = vunpack.c.l.b16 %v17
  %v34 = vunpack.c.l.b16 %v18
  %v35 = vpack.c.b16 %v32, %v31
  %v36 = vpack.c.b16 %v34, %v33
  %v41 = vunpack.c.l.b16 %v19
  %v42 = vunpack.c.l.b16 %v20
  %v43 = vunpack.c.l.b16 %v21
  %v44 = vunpack.c.l.b16 %v22
  %v45 = vpack.c.b16 %v42, %v41
  %v46 = vpack.c.b16 %v44, %v43
  %vm49 = vcmask 261120
  %v51 = vsel %vm49, %v35, 0
  %v54 = vsel %vm49, %v36, 0
  %56 = vmatpush.bf16.msra.mxu0 0
  %57 = vmatpush.bf16.msra.mxu0 0
  %58 = vmatpush.bf16.msra.mxu0 0
  %59 = vmatpush.bf16.msra.mxu0 0
  %60 = vmatpush.bf16.msra.mxu0 0
  %61 = vmatpush.bf16.msra.mxu0 0
  %62 = vmatpush.bf16.msra.mxu0 %v46
  %63 = vmatpush.bf16.msra.mxu0 %v45
  %64 = vmatmul.bf16.gmra.mxu0 %v51
  %v65 = vpop.f32.mrf.mxu0
  %v66 = vadd.f32 %v25, %v65
  %v67 = vpop.f32.mrf.mxu0
  %v68 = vadd.f32 %v25, %v67
  %69 = vmatmul.bf16.gmra.mxu0 %v54
  %v70 = vpop.f32.mrf.mxu0
  %v71 = vadd.f32 %v25, %v70
  %v72 = vpop.f32.mrf.mxu0
  %v73 = vadd.f32 %v25, %v72
  %74 = vdwg.mxu0
  %v75 = vmax.f32 %v66, 0.0
  %v76 = vmax.f32 %v68, 0.0
  %v77 = vmax.f32 %v71, 0.0
  %v78 = vmax.f32 %v73, 0.0
  %vm79 = vcmask 130048
  %80 = vst.msk [vmem:[%s3] sm:$0xff] %vm79, %v75
  %81 = vst.msk [vmem:[%s3 + $0x8] sm:$0xff] %vm79, %v76
  %82 = vst.msk [vmem:[%s3 + $0x10] sm:$0xff] %vm79, %v77
  %83 = vst.msk [vmem:[%s3 + $0x18] sm:$0xff] %vm79, %v78
  // Predicated region
  $region14: #{conformer_separator_forward.21} parent=0 // pred_check
    _
  $region15: #{conformer_separator_forward.21} parent=0 // pred_check_branch
    %85 = sbr.rel (0) target = $region17
  $region16: #{conformer_separator_forward.21} parent=0 // pred_region
    _
  $region17: #{conformer_separator_forward.21} parent=0 // pred_fallthru
    _
  // Predicated region
  $region18: #{conformer_separator_forward.21} parent=0 // pred_check
    _
  $region19: #{conformer_separator_forward.21} parent=0 // pred_check_branch
    %87 = sbr.rel (0) target = $region21
  $region20: #{conformer_separator_forward.21} parent=0 // pred_region
    _
  $region21: #{conformer_separator_forward.21} parent=0 // pred_fallthru
    _

// kernel: conformer_separator_forward.16
$region0: #{conformer_separator_forward.16}
  #allocation0 [shape = 'u32[]', space=smem, size = 0x4, offset = 0x4, fixed_abs, tag = 'smem constant byte address 0x4 - core index']
  #allocation1 [shape = 'u32[72,128]{1,0:T(1,128)}', space=vmem, size = 0x9000, scoped, tag = 'internal scratch']
  %s0 = inlined_call_operand.vmem [shape: bf16[32,32], index: 0, kind: input, shape index: {}]
  %s1 = inlined_call_operand.vmem [shape: bf16[32,64], index: 1, kind: input, shape index: {}]
  %s2 = inlined_call_operand.vmem [shape: f32[1,64], index: 2, kind: input, shape index: {}]
  %s3 = inlined_call_operand.vmem [shape: bf16[64,32], index: 3, kind: input, shape index: {}]
  %s4 = inlined_call_operand.vmem [shape: f32[1,32], index: 4, kind: input, shape index: {}]
  %s5 = inlined_call_operand.vmem [shape: f32[1,32], index: 5, kind: input, shape index: {}]
  %s6 = inlined_call_operand.vmem [shape: f32[1,32], index: 6, kind: input, shape index: {}]
  %s7 = inlined_call_operand.vmem [shape: f32[1,32], index: 7, kind: input, shape index: {}]
  %s8 = inlined_call_operand.vmem [shape: f32[1,32], index: 8, kind: input, shape index: {}]
  %s9 = inlined_call_operand.vmem [shape: bf16[32,32], index: 9, kind: output, shape index: {}]
  %s10 = sld [smem:[#allocation0]]
  $region46: #{conformer_separator_forward.16} parent=0
    _
  %s12 = ssub.s32 1, %s10
  %s13 = scalar_select 0, %s12, %s10
  // Predicated region
  $region2: #{conformer_separator_forward.16} parent=0 // pred_check
    _
  $region3: #{conformer_separator_forward.16} parent=0 // pred_check_branch
    %15 = sbr.rel (0) target = $region5
  $region4: #{conformer_separator_forward.16} parent=0 // pred_region
    _
  $region5: #{conformer_separator_forward.16} parent=0 // pred_fallthru
    _
  // Predicated region
  $region6: #{conformer_separator_forward.16} parent=0 // pred_check
    _
  $region7: #{conformer_separator_forward.16} parent=0 // pred_check_branch
    %17 = sbr.rel (0) target = $region9
  $region8: #{conformer_separator_forward.16} parent=0 // pred_region
    _
  $region9: #{conformer_separator_forward.16} parent=0 // pred_fallthru
    _
  // Predicated region
  $region10: #{conformer_separator_forward.16} parent=0 // pred_check
    _
  $region11: #{conformer_separator_forward.16} parent=0 // pred_check_branch
    %19 = sbr.rel (0) target = $region13
  $region12: #{conformer_separator_forward.16} parent=0 // pred_region
    _
  $region13: #{conformer_separator_forward.16} parent=0 // pred_fallthru
    _
  // Predicated region
  $region14: #{conformer_separator_forward.16} parent=0 // pred_check
    _
  $region15: #{conformer_separator_forward.16} parent=0 // pred_check_branch
    %21 = sbr.rel (0) target = $region17
  $region16: #{conformer_separator_forward.16} parent=0 // pred_region
    _
  $region17: #{conformer_separator_forward.16} parent=0 // pred_fallthru
    _
  // Predicated region
  $region18: #{conformer_separator_forward.16} parent=0 // pred_check
    _
  $region19: #{conformer_separator_forward.16} parent=0 // pred_check_branch
    %23 = sbr.rel (0) target = $region21
  $region20: #{conformer_separator_forward.16} parent=0 // pred_region
    _
  $region21: #{conformer_separator_forward.16} parent=0 // pred_fallthru
    _
  // Predicated region
  $region22: #{conformer_separator_forward.16} parent=0 // pred_check
    _
  $region23: #{conformer_separator_forward.16} parent=0 // pred_check_branch
    %25 = sbr.rel (0) target = $region25
  $region24: #{conformer_separator_forward.16} parent=0 // pred_region
    _
  $region25: #{conformer_separator_forward.16} parent=0 // pred_fallthru
    _
  // Predicated region
  $region26: #{conformer_separator_forward.16} parent=0 // pred_check
    _
  $region27: #{conformer_separator_forward.16} parent=0 // pred_check_branch
    %27 = sbr.rel (0) target = $region29
  $region28: #{conformer_separator_forward.16} parent=0 // pred_region
    _
  $region29: #{conformer_separator_forward.16} parent=0 // pred_fallthru
    _
  // Predicated region
  $region30: #{conformer_separator_forward.16} parent=0 // pred_check
    _
  $region31: #{conformer_separator_forward.16} parent=0 // pred_check_branch
    %29 = sbr.rel (0) target = $region33
  $region32: #{conformer_separator_forward.16} parent=0 // pred_region
    _
  $region33: #{conformer_separator_forward.16} parent=0 // pred_fallthru
    _
  // Predicated region
  $region34: #{conformer_separator_forward.16} parent=0 // pred_check
    _
  $region35: #{conformer_separator_forward.16} parent=0 // pred_check_branch
    %31 = sbr.rel (0) target = $region37
  $region36: #{conformer_separator_forward.16} parent=0 // pred_region
    _
  $region37: #{conformer_separator_forward.16} parent=0 // pred_fallthru
    _
  %v33 = vld [vmem:[%s0] sm:$0xf]
  %v34 = vld [vmem:[%s0 + $0x4] sm:$0xf]
  %v35 = vld [vmem:[%s0 + $0x8] sm:$0xf]
  %v36 = vld [vmem:[%s0 + $0xc] sm:$0xf]
  %v37 = vld [vmem:[%s1] sm:$0xf]
  %v38 = vld [vmem:[%s1 + $0x4] sm:$0xf]
  %v39 = vld [vmem:[%s1 + $0x8] sm:$0xf]
  %v40 = vld [vmem:[%s1 + $0xc] sm:$0xf]
  %v41 = vld [vmem:[%s2] sm:$0x1]
  %v43 = vperm.slane %v41, 0
  %v49 = vunpack.c.l.b16 %v33
  %v50 = vunpack.c.l.b16 %v34
  %v51 = vunpack.c.l.b16 %v35
  %v52 = vunpack.c.l.b16 %v36
  %v53 = vpack.c.b16 %v50, %v49
  %v54 = vpack.c.b16 %v52, %v51
  %v59 = vunpack.c.l.b16 %v37
  %v60 = vunpack.c.l.b16 %v38
  %v61 = vunpack.c.l.b16 %v39
  %v62 = vunpack.c.l.b16 %v40
  %v63 = vpack.c.b16 %v60, %v59
  %v64 = vpack.c.b16 %v62, %v61
  %vm67 = vcmask 261120
  %v69 = vsel %vm67, %v53, 0
  %v72 = vsel %vm67, %v54, 0
  %74 = vmatpush.bf16.msra.mxu0 0
  %75 = vmatpush.bf16.msra.mxu0 0
  %76 = vmatpush.bf16.msra.mxu0 0
  %77 = vmatpush.bf16.msra.mxu0 0
  %78 = vmatpush.bf16.msra.mxu0 0
  %79 = vmatpush.bf16.msra.mxu0 0
  %80 = vmatpush.bf16.msra.mxu0 %v64
  %81 = vmatpush.bf16.msra.mxu0 %v63
  %82 = vmatmul.bf16.gmra.mxu0 %v69
  %v83 = vpop.f32.mrf.mxu0
  %v84 = vadd.f32 %v43, %v83
  %v85 = vpop.f32.mrf.mxu0
  %v86 = vadd.f32 %v43, %v85
  %87 = vmatmul.bf16.gmra.mxu0 %v72
  %v88 = vpop.f32.mrf.mxu0
  %v89 = vadd.f32 %v43, %v88
  %v90 = vpop.f32.mrf.mxu0
  %v91 = vadd.f32 %v43, %v90
  %92 = vdwg.mxu0
  %v93 = vsub.f32 0.0, %v84
  %v94 = vsub.f32 0.0, %v86
  %v95 = vsub.f32 0.0, %v89
  %v96 = vsub.f32 0.0, %v91
  %v97 = vmul.f32 %v93, 1.442695
  %v98 = vpow.pop %v97
  %v99 = vmul.f32 %v94, 1.442695
  %v100 = vpow.pop %v99
  %v101 = vmul.f32 %v95, 1.442695
  %v102 = vpow.pop %v101
  %v103 = vmul.f32 %v96, 1.442695
  %v104 = vpow.pop %v103
  %v105 = vadd.f32 %v98, 1.0
  %v106 = vadd.f32 %v100, 1.0
  %v107 = vadd.f32 %v102, 1.0
  %v108 = vadd.f32 %v104, 1.0
  %v109 = vrcp.pop %v105
  %v110 = vrcp.pop %v106
  %v111 = vrcp.pop %v107
  %v112 = vrcp.pop %v108
  %v113 = vmul.f32 %v84, %v109
  %v114 = vmul.f32 %v86, %v110
  %v115 = vmul.f32 %v89, %v111
  %v116 = vmul.f32 %v91, %v112
  %v117 = vpack.c.bf16 %v114, %v113
  %v118 = vpack.c.bf16 %v116, %v115
  %v119 = vld [vmem:[%s3] sm:$0xf]
  %v120 = vld [vmem:[%s3 + $0x4] sm:$0xf]
  %v121 = vld [vmem:[%s3 + $0x8] sm:$0xf]
  %v122 = vld [vmem:[%s3 + $0xc] sm:$0xf]
  %v123 = vld [vmem:[%s3 + $0x10] sm:$0xf]
  %v124 = vld [vmem:[%s3 + $0x14] sm:$0xf]
  %v125 = vld [vmem:[%s3 + $0x18] sm:$0xf]
  %v126 = vld [vmem:[%s3 + $0x1c] sm:$0xf]
  %v127 = vld [vmem:[%s4] sm:$0x1]
  %v129 = vperm.slane %v127, 0
  %v139 = vunpack.c.l.b16 %v119
  %v140 = vunpack.c.l.b16 %v120
  %v141 = vunpack.c.l.b16 %v121
  %v142 = vunpack.c.l.b16 %v122
  %v143 = vunpack.c.l.b16 %v123
  %v144 = vunpack.c.l.b16 %v124
  %v145 = vunpack.c.l.b16 %v125
  %v146 = vunpack.c.l.b16 %v126
  %v147 = vpack.c.b16 %v140, %v139
  %v148 = vpack.c.b16 %v142, %v141
  %v149 = vpack.c.b16 %v144, %v143
  %v150 = vpack.c.b16 %v146, %v145
  %vm155 = vcmask 523264
  %v157 = vsel %vm155, %v117, 0
  %v160 = vsel %vm155, %v118, 0
  %162 = vmatpush.bf16.msra.mxu0 0
  %163 = vmatpush.bf16.msra.mxu0 0
  %164 = vmatpush.bf16.msra.mxu0 0
  %165 = vmatpush.bf16.msra.mxu0 0
  %166 = vmatpush.bf16.msra.mxu0 %v150
  %167 = vmatpush.bf16.msra.mxu0 %v149
  %168 = vmatpush.bf16.msra.mxu0 %v148
  %169 = vmatpush.bf16.msra.mxu0 %v147
  %170 = vmatmul.bf16.gmra.mxu0 %v157
  %v171 = vpop.f32.mrf.mxu0
  %v172 = vadd.f32 %v129, %v171
  %v173 = vpop.f32.mrf.mxu0
  %v174 = vadd.f32 %v129, %v173
  %175 = vmatmul.bf16.gmra.mxu0 %v160
  %v176 = vpop.f32.mrf.mxu0
  %v177 = vadd.f32 %v129, %v176
  %v178 = vpop.f32.mrf.mxu0
  %v179 = vadd.f32 %v129, %v178
  %180 = vdwg.mxu0
  %v181 = vunpack.c.l.bf16 %v33
  %v182 = vunpack.c.l.bf16 %v34
  %v183 = vunpack.c.l.bf16 %v35
  %v184 = vunpack.c.l.bf16 %v36
  %v185 = vmul.f32 %v172, 0.5
  %v186 = vmul.f32 %v174, 0.5
  %v187 = vmul.f32 %v177, 0.5
  %v188 = vmul.f32 %v179, 0.5
  %v189 = vadd.f32 %v181, %v185
  %v190 = vadd.f32 %v182, %v186
  %v191 = vadd.f32 %v183, %v187
  %v192 = vadd.f32 %v184, %v188
  %v193 = vld [vmem:[%s5] sm:$0x1]
  %v194 = vld [vmem:[%s6] sm:$0x1]
  %v195 = vsel %vm67, %v189, 0.0
  %196 = vadd.xlane.f32.xlu0 %v195
  %v197 = vpop.xlane.xlu0 %196
  %v198 = vsel %vm67, %v190, 0.0
  %199 = vadd.xlane.f32.xlu0 %v198
  %v200 = vpop.xlane.xlu0 %199
  %v201 = vsel %vm67, %v191, 0.0
  %202 = vadd.xlane.f32.xlu0 %v201
  %v203 = vpop.xlane.xlu0 %202
  %v204 = vsel %vm67, %v192, 0.0
  %205 = vadd.xlane.f32.xlu0 %v204
  %v206 = vpop.xlane.xlu0 %205
  %v207 = vrcp.pop 32.0
  %v208 = vmul.f32 32.0, %v207
  %v209 = vsub.f32 1.0, %v208
  %v210 = vmul.f32 %v207, %v209
  %v211 = vadd.f32 %v207, %v210
  %vm212 = vweird.f32 %v207
  %v213 = vsel %vm212, %v207, %v211
  %v214 = vmul.f32 %v197, %v213
  %v215 = vmul.f32 %v200, %v213
  %v216 = vmul.f32 %v203, %v213
  %v217 = vmul.f32 %v206, %v213
  %v218 = vsub.f32 %v189, %v214
  %v219 = vsub.f32 %v190, %v215
  %v220 = vsub.f32 %v191, %v216
  %v221 = vsub.f32 %v192, %v217
  %v222 = vmul.f32 %v218, %v218
  %v223 = vmul.f32 %v219, %v219
  %v224 = vmul.f32 %v220, %v220
  %v225 = vmul.f32 %v221, %v221
  %v226 = vsel %vm67, %v222, 0.0
  %227 = vadd.xlane.f32.xlu0 %v226
  %v228 = vpop.xlane.xlu0 %227
  %v229 = vsel %vm67, %v223, 0.0
  %230 = vadd.xlane.f32.xlu0 %v229
  %v231 = vpop.xlane.xlu0 %230
  %v232 = vsel %vm67, %v224, 0.0
  %233 = vadd.xlane.f32.xlu0 %v232
  %v234 = vpop.xlane.xlu0 %233
  %v235 = vsel %vm67, %v225, 0.0
  %236 = vadd.xlane.f32.xlu0 %v235
  %v237 = vpop.xlane.xlu0 %236
  %v238 = vmul.f32 %v228, %v213
  %v239 = vmul.f32 %v231, %v213
  %v240 = vmul.f32 %v234, %v213
  %v241 = vmul.f32 %v237, %v213
  %v242 = vadd.f32 %v238, 1e-12
  %v243 = vadd.f32 %v239, 1e-12
  %v244 = vadd.f32 %v240, 1e-12
  %v245 = vadd.f32 %v241, 1e-12
  %v246 = vrsqrt.pop %v242
  %v247 = vmul.f32 %v246, %v242
  %v248 = vmul.f32 %v247, %v246
  %v249 = vmul.f32 0.5, %v248
  %v250 = vsub.f32 1.5, %v249
  %v251 = vmul.f32 %v246, %v250
  %vm252 = vweird.f32 %v242
  %vm253 = vweird.f32 %v246
  %vm254 = vmor %vm252, %vm253
  %v255 = vsel %vm254, %v246, %v251
  %v256 = vrsqrt.pop %v243
  %v257 = vmul.f32 %v256, %v243
  %v258 = vmul.f32 %v257, %v256
  %v259 = vmul.f32 0.5, %v258
  %v260 = vsub.f32 1.5, %v259
  %v261 = vmul.f32 %v256, %v260
  %vm262 = vweird.f32 %v243
  %vm263 = vweird.f32 %v256
  %vm264 = vmor %vm262, %vm263
  %v265 = vsel %vm264, %v256, %v261
  %v266 = vrsqrt.pop %v244
  %v267 = vmul.f32 %v266, %v244
  %v268 = vmul.f32 %v267, %v266
  %v269 = vmul.f32 0.5, %v268
  %v270 = vsub.f32 1.5, %v269
  %v271 = vmul.f32 %v266, %v270
  %vm272 = vweird.f32 %v244
  %vm273 = vweird.f32 %v266
  %vm274 = vmor %vm272, %vm273
  %v275 = vsel %vm274, %v266, %v271
  %v276 = vrsqrt.pop %v245
  %v277 = vmul.f32 %v276, %v245
  %v278 = vmul.f32 %v277, %v276
  %v279 = vmul.f32 0.5, %v278
  %v280 = vsub.f32 1.5, %v279
  %v281 = vmul.f32 %v276, %v280
  %vm282 = vweird.f32 %v245
  %vm283 = vweird.f32 %v276
  %vm284 = vmor %vm282, %vm283
  %v285 = vsel %vm284, %v276, %v281
  %v286 = vmul.f32 %v218, %v255
  %v287 = vmul.f32 %v219, %v265
  %v288 = vmul.f32 %v220, %v275
  %v289 = vmul.f32 %v221, %v285
  %v291 = vperm.slane %v193, 0
  %v293 = vmul.f32 %v286, %v291
  %v294 = vmul.f32 %v287, %v291
  %v295 = vmul.f32 %v288, %v291
  %v296 = vmul.f32 %v289, %v291
  %v298 = vperm.slane %v194, 0
  %v300 = vadd.f32 %v293, %v298
  %v301 = vadd.f32 %v294, %v298
  %v302 = vadd.f32 %v295, %v298
  %v303 = vadd.f32 %v296, %v298
  %v304 = vld [vmem:[%s7] sm:$0x1]
  %v305 = vld [vmem:[%s8] sm:$0x1]
  %v306 = vsel %vm67, %v300, 0.0
  %307 = vadd.xlane.f32.xlu0 %v306
  %v308 = vpop.xlane.xlu0 %307
  %v309 = vsel %vm67, %v301, 0.0
  %310 = vadd.xlane.f32.xlu0 %v309
  %v311 = vpop.xlane.xlu0 %310
  %v312 = vsel %vm67, %v302, 0.0
  %313 = vadd.xlane.f32.xlu0 %v312
  %v314 = vpop.xlane.xlu0 %313
  %v315 = vsel %vm67, %v303, 0.0
  %316 = vadd.xlane.f32.xlu0 %v315
  %v317 = vpop.xlane.xlu0 %316
  %v318 = vmul.f32 %v308, %v213
  %v319 = vmul.f32 %v311, %v213
  %v320 = vmul.f32 %v314, %v213
  %v321 = vmul.f32 %v317, %v213
  %v322 = vsub.f32 %v300, %v318
  %v323 = vsub.f32 %v301, %v319
  %v324 = vsub.f32 %v302, %v320
  %v325 = vsub.f32 %v303, %v321
  %v326 = vmul.f32 %v322, %v322
  %v327 = vmul.f32 %v323, %v323
  %v328 = vmul.f32 %v324, %v324
  %v329 = vmul.f32 %v325, %v325
  %v330 = vsel %vm67, %v326, 0.0
  %331 = vadd.xlane.f32.xlu0 %v330
  %v332 = vpop.xlane.xlu0 %331
  %v333 = vsel %vm67, %v327, 0.0
  %334 = vadd.xlane.f32.xlu0 %v333
  %v335 = vpop.xlane.xlu0 %334
  %v336 = vsel %vm67, %v328, 0.0
  %337 = vadd.xlane.f32.xlu0 %v336
  %v338 = vpop.xlane.xlu0 %337
  %v339 = vsel %vm67, %v329, 0.0
  %340 = vadd.xlane.f32.xlu0 %v339
  %v341 = vpop.xlane.xlu0 %340
  %v342 = vmul.f32 %v332, %v213
  %v343 = vmul.f32 %v335, %v213
  %v344 = vmul.f32 %v338, %v213
  %v345 = vmul.f32 %v341, %v213
  %v346 = vadd.f32 %v342, 1e-12
  %v347 = vadd.f32 %v343, 1e-12
  %v348 = vadd.f32 %v344, 1e-12
  %v349 = vadd.f32 %v345, 1e-12
  %v350 = vrsqrt.pop %v346
  %v351 = vmul.f32 %v350, %v346
  %v352 = vmul.f32 %v351, %v350
  %v353 = vmul.f32 0.5, %v352
  %v354 = vsub.f32 1.5, %v353
  %v355 = vmul.f32 %v350, %v354
  %vm356 = vweird.f32 %v346
  %vm357 = vweird.f32 %v350
  %vm358 = vmor %vm356, %vm357
  %v359 = vsel %vm358, %v350, %v355
  %v360 = vrsqrt.pop %v347
  %v361 = vmul.f32 %v360, %v347
  %v362 = vmul.f32 %v361, %v360
  %v363 = vmul.f32 0.5, %v362
  %v364 = vsub.f32 1.5, %v363
  %v365 = vmul.f32 %v360, %v364
  %vm366 = vweird.f32 %v347
  %vm367 = vweird.f32 %v360
  %vm368 = vmor %vm366, %vm367
  %v369 = vsel %vm368, %v360, %v365
  %v370 = vrsqrt.pop %v348
  %v371 = vmul.f32 %v370, %v348
  %v372 = vmul.f32 %v371, %v370
  %v373 = vmul.f32 0.5, %v372
  %v374 = vsub.f32 1.5, %v373
  %v375 = vmul.f32 %v370, %v374
  %vm376 = vweird.f32 %v348
  %vm377 = vweird.f32 %v370
  %vm378 = vmor %vm376, %vm377
  %v379 = vsel %vm378, %v370, %v375
  %v380 = vrsqrt.pop %v349
  %v381 = vmul.f32 %v380, %v349
  %v382 = vmul.f32 %v381, %v380
  %v383 = vmul.f32 0.5, %v382
  %v384 = vsub.f32 1.5, %v383
  %v385 = vmul.f32 %v380, %v384
  %vm386 = vweird.f32 %v349
  %vm387 = vweird.f32 %v380
  %vm388 = vmor %vm386, %vm387
  %v389 = vsel %vm388, %v380, %v385
  %v390 = vmul.f32 %v322, %v359
  %v391 = vmul.f32 %v323, %v369
  %v392 = vmul.f32 %v324, %v379
  %v393 = vmul.f32 %v325, %v389
  %v395 = vperm.slane %v304, 0
  %v397 = vmul.f32 %v390, %v395
  %v398 = vmul.f32 %v391, %v395
  %v399 = vmul.f32 %v392, %v395
  %v400 = vmul.f32 %v393, %v395
  %v402 = vperm.slane %v305, 0
  %v404 = vadd.f32 %v397, %v402
  %v405 = vadd.f32 %v398, %v402
  %v406 = vadd.f32 %v399, %v402
  %v407 = vadd.f32 %v400, %v402
  %v408 = vpack.c.bf16 %v404, %v404
  %v409 = vpack.c.bf16 %v405, %v405
  %v410 = vpack.c.bf16 %v406, %v406
  %v411 = vpack.c.bf16 %v407, %v407
  %vm412 = vcmask 257024
  %413 = vst.msk [vmem:[%s9] sm:$0xf] %vm412, %v408
  %414 = vst.msk [vmem:[%s9 + $0x4] sm:$0xf] %vm412, %v409
  %415 = vst.msk [vmem:[%s9 + $0x8] sm:$0xf] %vm412, %v410
  %416 = vst.msk [vmem:[%s9 + $0xc] sm:$0xf] %vm412, %v411
  // Predicated region
  $region38: #{conformer_separator_forward.16} parent=0 // pred_check
    _
  $region39: #{conformer_separator_forward.16} parent=0 // pred_check_branch
    %418 = sbr.rel (0) target = $region41
  $region40: #{conformer_separator_forward.16} parent=0 // pred_region
    _
  $region41: #{conformer_separator_forward.16} parent=0 // pred_fallthru
    _
  // Predicated region
  $region42: #{conformer_separator_forward.16} parent=0 // pred_check
    _
  $region43: #{conformer_separator_forward.16} parent=0 // pred_check_branch
    %420 = sbr.rel (0) target = $region45
  $region44: #{conformer_separator_forward.16} parent=0 // pred_region
    _
  $region45: #{conformer_separator_forward.16} parent=0 // pred_fallthru
    _

// kernel: conformer_separator_forward.14
$region0: #{conformer_separator_forward.14}
  #allocation0 [shape = 'u32[]', space=smem, size = 0x4, offset = 0x4, fixed_abs, tag = 'smem constant byte address 0x4 - core index']
  #allocation1 [shape = 'u32[72,128]{1,0:T(1,128)}', space=vmem, size = 0x9000, scoped, tag = 'internal scratch']
  #allocation2 [shape = 'f32[16,32]{1,0:T(8,128)}', space=vmem, size = 0x2000, scoped, tag = 'scratch operand']
  %s0 = inlined_call_operand.vmem [shape: bf16[2,16,32], index: 0, kind: input, shape index: {}]
  %s1 = inlined_call_operand.vmem [shape: bf16[4,32,8], index: 1, kind: input, shape index: {}]
  %s2 = inlined_call_operand.vmem [shape: bf16[4,32,8], index: 2, kind: input, shape index: {}]
  %s3 = inlined_call_operand.vmem [shape: bf16[4,32,8], index: 3, kind: input, shape index: {}]
  %s4 = inlined_call_operand.vmem [shape: f32[4,1,8], index: 4, kind: input, shape index: {}]
  %s5 = inlined_call_operand.vmem [shape: f32[4,1,8], index: 5, kind: input, shape index: {}]
  %s6 = inlined_call_operand.vmem [shape: f32[4,1,8], index: 6, kind: input, shape index: {}]
  %s7 = inlined_call_operand.vmem [shape: f32[4,1,8], index: 7, kind: input, shape index: {}]
  %s8 = inlined_call_operand.vmem [shape: f32[4,1,8], index: 8, kind: input, shape index: {}]
  %s9 = inlined_call_operand.vmem [shape: bf16[4,128,8], index: 9, kind: input, shape index: {}]
  %s10 = inlined_call_operand.vmem [shape: bf16[4,8,32], index: 10, kind: input, shape index: {}]
  %s11 = inlined_call_operand.vmem [shape: f32[1,32], index: 11, kind: input, shape index: {}]
  %s12 = inlined_call_operand.vmem [shape: f32[1,32], index: 12, kind: input, shape index: {}]
  %s13 = inlined_call_operand.vmem [shape: f32[1,32], index: 13, kind: input, shape index: {}]
  %s14 = inlined_call_operand.vmem [shape: bf16[2,16,32], index: 14, kind: output, shape index: {}]
  %s15 = sld [smem:[#allocation0]]
  $region97: #{conformer_separator_forward.14} parent=0
    _
  %s17 = ssub.s32 1, %s15
  %s18 = scalar_select 0, %s17, %s15
  loop: start=0, step=1, limit=10
  $region2: #{conformer_separator_forward.14} parent=0 // loop_pre_header
    _
  $region3: #{conformer_separator_forward.14} parent=0 // loop_header
    %s20 = sphi 0, %s24
    %p21 = scmp.ge.s32.totalorder %s20, 10
    %s27 = sphi 0, %s46
    %s28 = sphi 0, %s42
    %s29 = sphi 0, %s38
    %s30 = sphi 0, %s27
    %s31 = sphi 0, %s28
    %s32 = sphi 0, %s29
    %s33 = sphi 0, %s30
    %s34 = sphi 0, %s31
    %s35 = sphi 0, %s32
    %s49 = sphi 0, %s51
    %s52 = sphi 0, %s49
    %s53 = sphi 0, %s52
    %s69 = sphi 0, %s53
    %s75 = sphi 0, %s77
    %s78 = sphi 0, %s75
    %s79 = sphi 0, %s78
    %s95 = sphi 0, %s79
    %s101 = sphi 0, %s103
    %s104 = sphi 0, %s101
    %s105 = sphi 0, %s104
    %s121 = sphi 0, %s105
    %s127 = sphi 0, %s129
    %s130 = sphi 0, %s127
    %s131 = sphi 0, %s130
    %s147 = sphi 0, %s131
    %s153 = sphi 0, %s155
    %s156 = sphi 0, %s153
    %s157 = sphi 0, %s156
    %s173 = sphi 0, %s157
    %s179 = sphi 0, %s181
    %s182 = sphi 0, %s179
    %s183 = sphi 0, %s182
    %s199 = sphi 0, %s183
    %s205 = sphi 0, %s207
    %s208 = sphi 0, %s205
    %s209 = sphi 0, %s208
    %s225 = sphi 0, %s209
    %s231 = sphi 0, %s233
    %s234 = sphi 0, %s231
    %s235 = sphi 0, %s234
    %s251 = sphi 0, %s235
    %s257 = sphi 0, %s259
    %s260 = sphi 0, %s257
    %s261 = sphi 0, %s260
    %s277 = sphi 0, %s261
    %s283 = sphi 0, %s285
    %s286 = sphi 0, %s283
    %s287 = sphi 0, %s286
    %s303 = sphi 0, %s287
    %s309 = sphi 0, %s311
    %s312 = sphi 0, %s309
    %s313 = sphi 0, %s312
    %s329 = sphi 0, %s313
    %s333 = sphi 0, %s333
    %s335 = sphi 0, %s333
    %s336 = sphi 0, %s335
    %s350 = sphi 0, %s336
    %s354 = sphi 0, %s354
    %s356 = sphi 0, %s354
    %s357 = sphi 0, %s356
    %s371 = sphi 0, %s357
    %s375 = sphi 0, %s375
    %s377 = sphi 0, %s375
    %s378 = sphi 0, %s377
    %s392 = sphi 0, %s378
    %s400 = sphi 0, %s402
    %s403 = sphi 0, %s400
    %s404 = sphi 0, %s403
    %s420 = sphi 0, %s404
  $region4: #{conformer_separator_forward.14} parent=0 // loop_header_branch
    %23 = sbr.rel (%p21) target = $region8
  $region5: #{conformer_separator_forward.14} parent=0 // loop_body
    %s25 = ssub.s32 %s20, 1
    %s26 = ssub.s32 %s20, 2
    %s36 = sadd.s32 1, %s29
    %p37 = scmp.ge.s32.totalorder %s36, 4
    %s38 = scalar_select %p37, 0, %s36
    %s39 = sadd.s32 1, %s28
    %s40 = scalar_select %p37, %s39, %s28
    %p41 = scmp.ge.s32.totalorder %s40, 1
    %s42 = scalar_select %p41, 0, %s40
    %s43 = sadd.s32 1, %s27
    %s44 = scalar_select %p41, %s43, %s27
    %p45 = scmp.ge.s32.totalorder %s44, 2
    %s46 = scalar_select %p45, 0, %s44
    %s47 = ssub.s32 %s27, %s46
    %p48 = scmp.eq.s32.totalorder %s47, 0
    %s50 = sadd.s32 %s49, 1
    %s51 = scalar_select %p48, %s49, %s50
    %p54 = pneg %p48
    %p55 = scmp.eq.s32.totalorder %s20, 7
    %p56 = por %p54, %p55
    %p57 = scmp.ne.s32.totalorder %s49, %s52
    %p58 = scmp.eq.s32.totalorder %s20, 0
    %p59 = por %p57, %p58
    %p60 = scmp.ne.s32.totalorder %s49, %s52
    %p61 = scmp.eq.s32.totalorder %s25, 7
    %p62 = por %p60, %p61
    %p63 = scmp.ne.s32.totalorder %s52, %s53
    %p64 = scmp.eq.s32.totalorder %s25, 0
    %p65 = por %p63, %p64
    %p66 = scmp.ne.s32.totalorder %s52, %s53
    %p67 = scmp.eq.s32.totalorder %s26, 7
    %p68 = por %p66, %p67
    %p70 = scmp.ne.s32.totalorder %s53, %s69
    %p71 = scmp.eq.s32.totalorder %s26, 0
    %p72 = por %p70, %p71
    %s73 = ssub.s32 %s29, %s38
    %p74 = scmp.eq.s32.totalorder %s73, 0
    %s76 = sadd.s32 %s75, 1
    %s77 = scalar_select %p74, %s75, %s76
    %p80 = pneg %p74
    %p81 = scmp.eq.s32.totalorder %s20, 7
    %p82 = por %p80, %p81
    %p83 = scmp.ne.s32.totalorder %s75, %s78
    %p84 = scmp.eq.s32.totalorder %s20, 0
    %p85 = por %p83, %p84
    %p86 = scmp.ne.s32.totalorder %s75, %s78
    %p87 = scmp.eq.s32.totalorder %s25, 7
    %p88 = por %p86, %p87
    %p89 = scmp.ne.s32.totalorder %s78, %s79
    %p90 = scmp.eq.s32.totalorder %s25, 0
    %p91 = por %p89, %p90
    %p92 = scmp.ne.s32.totalorder %s78, %s79
    %p93 = scmp.eq.s32.totalorder %s26, 7
    %p94 = por %p92, %p93
    %p96 = scmp.ne.s32.totalorder %s79, %s95
    %p97 = scmp.eq.s32.totalorder %s26, 0
    %p98 = por %p96, %p97
    %s99 = ssub.s32 %s29, %s38
    %p100 = scmp.eq.s32.totalorder %s99, 0
    %s102 = sadd.s32 %s101, 1
    %s103 = scalar_select %p100, %s101, %s102
    %p106 = pneg %p100
    %p107 = scmp.eq.s32.totalorder %s20, 7
    %p108 = por %p106, %p107
    %p109 = scmp.ne.s32.totalorder %s101, %s104
    %p110 = scmp.eq.s32.totalorder %s20, 0
    %p111 = por %p109, %p110
    %p112 = scmp.ne.s32.totalorder %s101, %s104
    %p113 = scmp.eq.s32.totalorder %s25, 7
    %p114 = por %p112, %p113
    %p115 = scmp.ne.s32.totalorder %s104, %s105
    %p116 = scmp.eq.s32.totalorder %s25, 0
    %p117 = por %p115, %p116
    %p118 = scmp.ne.s32.totalorder %s104, %s105
    %p119 = scmp.eq.s32.totalorder %s26, 7
    %p120 = por %p118, %p119
    %p122 = scmp.ne.s32.totalorder %s105, %s121
    %p123 = scmp.eq.s32.totalorder %s26, 0
    %p124 = por %p122, %p123
    %s125 = ssub.s32 %s29, %s38
    %p126 = scmp.eq.s32.totalorder %s125, 0
    %s128 = sadd.s32 %s127, 1
    %s129 = scalar_select %p126, %s127, %s128
    %p132 = pneg %p126
    %p133 = scmp.eq.s32.totalorder %s20, 7
    %p134 = por %p132, %p133
    %p135 = scmp.ne.s32.totalorder %s127, %s130
    %p136 = scmp.eq.s32.totalorder %s20, 0
    %p137 = por %p135, %p136
    %p138 = scmp.ne.s32.totalorder %s127, %s130
    %p139 = scmp.eq.s32.totalorder %s25, 7
    %p140 = por %p138, %p139
    %p141 = scmp.ne.s32.totalorder %s130, %s131
    %p142 = scmp.eq.s32.totalorder %s25, 0
    %p143 = por %p141, %p142
    %p144 = scmp.ne.s32.totalorder %s130, %s131
    %p145 = scmp.eq.s32.totalorder %s26, 7
    %p146 = por %p144, %p145
    %p148 = scmp.ne.s32.totalorder %s131, %s147
    %p149 = scmp.eq.s32.totalorder %s26, 0
    %p150 = por %p148, %p149
    %s151 = ssub.s32 %s29, %s38
    %p152 = scmp.eq.s32.totalorder %s151, 0
    %s154 = sadd.s32 %s153, 1
    %s155 = scalar_select %p152, %s153, %s154
    %p158 = pneg %p152
    %p159 = scmp.eq.s32.totalorder %s20, 7
    %p160 = por %p158, %p159
    %p161 = scmp.ne.s32.totalorder %s153, %s156
    %p162 = scmp.eq.s32.totalorder %s20, 0
    %p163 = por %p161, %p162
    %p164 = scmp.ne.s32.totalorder %s153, %s156
    %p165 = scmp.eq.s32.totalorder %s25, 7
    %p166 = por %p164, %p165
    %p167 = scmp.ne.s32.totalorder %s156, %s157
    %p168 = scmp.eq.s32.totalorder %s25, 0
    %p169 = por %p167, %p168
    %p170 = scmp.ne.s32.totalorder %s156, %s157
    %p171 = scmp.eq.s32.totalorder %s26, 7
    %p172 = por %p170, %p171
    %p174 = scmp.ne.s32.totalorder %s157, %s173
    %p175 = scmp.eq.s32.totalorder %s26, 0
    %p176 = por %p174, %p175
    %s177 = ssub.s32 %s29, %s38
    %p178 = scmp.eq.s32.totalorder %s177, 0
    %s180 = sadd.s32 %s179, 1
    %s181 = scalar_select %p178, %s179, %s180
    %p184 = pneg %p178
    %p185 = scmp.eq.s32.totalorder %s20, 7
    %p186 = por %p184, %p185
    %p187 = scmp.ne.s32.totalorder %s179, %s182
    %p188 = scmp.eq.s32.totalorder %s20, 0
    %p189 = por %p187, %p188
    %p190 = scmp.ne.s32.totalorder %s179, %s182
    %p191 = scmp.eq.s32.totalorder %s25, 7
    %p192 = por %p190, %p191
    %p193 = scmp.ne.s32.totalorder %s182, %s183
    %p194 = scmp.eq.s32.totalorder %s25, 0
    %p195 = por %p193, %p194
    %p196 = scmp.ne.s32.totalorder %s182, %s183
    %p197 = scmp.eq.s32.totalorder %s26, 7
    %p198 = por %p196, %p197
    %p200 = scmp.ne.s32.totalorder %s183, %s199
    %p201 = scmp.eq.s32.totalorder %s26, 0
    %p202 = por %p200, %p201
    %s203 = ssub.s32 %s29, %s38
    %p204 = scmp.eq.s32.totalorder %s203, 0
    %s206 = sadd.s32 %s205, 1
    %s207 = scalar_select %p204, %s205, %s206
    %p210 = pneg %p204
    %p211 = scmp.eq.s32.totalorder %s20, 7
    %p212 = por %p210, %p211
    %p213 = scmp.ne.s32.totalorder %s205, %s208
    %p214 = scmp.eq.s32.totalorder %s20, 0
    %p215 = por %p213, %p214
    %p216 = scmp.ne.s32.totalorder %s205, %s208
    %p217 = scmp.eq.s32.totalorder %s25, 7
    %p218 = por %p216, %p217
    %p219 = scmp.ne.s32.totalorder %s208, %s209
    %p220 = scmp.eq.s32.totalorder %s25, 0
    %p221 = por %p219, %p220
    %p222 = scmp.ne.s32.totalorder %s208, %s209
    %p223 = scmp.eq.s32.totalorder %s26, 7
    %p224 = por %p222, %p223
    %p226 = scmp.ne.s32.totalorder %s209, %s225
    %p227 = scmp.eq.s32.totalorder %s26, 0
    %p228 = por %p226, %p227
    %s229 = ssub.s32 %s29, %s38
    %p230 = scmp.eq.s32.totalorder %s229, 0
    %s232 = sadd.s32 %s231, 1
    %s233 = scalar_select %p230, %s231, %s232
    %p236 = pneg %p230
    %p237 = scmp.eq.s32.totalorder %s20, 7
    %p238 = por %p236, %p237
    %p239 = scmp.ne.s32.totalorder %s231, %s234
    %p240 = scmp.eq.s32.totalorder %s20, 0
    %p241 = por %p239, %p240
    %p242 = scmp.ne.s32.totalorder %s231, %s234
    %p243 = scmp.eq.s32.totalorder %s25, 7
    %p244 = por %p242, %p243
    %p245 = scmp.ne.s32.totalorder %s234, %s235
    %p246 = scmp.eq.s32.totalorder %s25, 0
    %p247 = por %p245, %p246
    %p248 = scmp.ne.s32.totalorder %s234, %s235
    %p249 = scmp.eq.s32.totalorder %s26, 7
    %p250 = por %p248, %p249
    %p252 = scmp.ne.s32.totalorder %s235, %s251
    %p253 = scmp.eq.s32.totalorder %s26, 0
    %p254 = por %p252, %p253
    %s255 = ssub.s32 %s29, %s38
    %p256 = scmp.eq.s32.totalorder %s255, 0
    %s258 = sadd.s32 %s257, 1
    %s259 = scalar_select %p256, %s257, %s258
    %p262 = pneg %p256
    %p263 = scmp.eq.s32.totalorder %s20, 7
    %p264 = por %p262, %p263
    %p265 = scmp.ne.s32.totalorder %s257, %s260
    %p266 = scmp.eq.s32.totalorder %s20, 0
    %p267 = por %p265, %p266
    %p268 = scmp.ne.s32.totalorder %s257, %s260
    %p269 = scmp.eq.s32.totalorder %s25, 7
    %p270 = por %p268, %p269
    %p271 = scmp.ne.s32.totalorder %s260, %s261
    %p272 = scmp.eq.s32.totalorder %s25, 0
    %p273 = por %p271, %p272
    %p274 = scmp.ne.s32.totalorder %s260, %s261
    %p275 = scmp.eq.s32.totalorder %s26, 7
    %p276 = por %p274, %p275
    %p278 = scmp.ne.s32.totalorder %s261, %s277
    %p279 = scmp.eq.s32.totalorder %s26, 0
    %p280 = por %p278, %p279
    %s281 = ssub.s32 %s29, %s38
    %p282 = scmp.eq.s32.totalorder %s281, 0
    %s284 = sadd.s32 %s283, 1
    %s285 = scalar_select %p282, %s283, %s284
    %p288 = pneg %p282
    %p289 = scmp.eq.s32.totalorder %s20, 7
    %p290 = por %p288, %p289
    %p291 = scmp.ne.s32.totalorder %s283, %s286
    %p292 = scmp.eq.s32.totalorder %s20, 0
    %p293 = por %p291, %p292
    %p294 = scmp.ne.s32.totalorder %s283, %s286
    %p295 = scmp.eq.s32.totalorder %s25, 7
    %p296 = por %p294, %p295
    %p297 = scmp.ne.s32.totalorder %s286, %s287
    %p298 = scmp.eq.s32.totalorder %s25, 0
    %p299 = por %p297, %p298
    %p300 = scmp.ne.s32.totalorder %s286, %s287
    %p301 = scmp.eq.s32.totalorder %s26, 7
    %p302 = por %p300, %p301
    %p304 = scmp.ne.s32.totalorder %s287, %s303
    %p305 = scmp.eq.s32.totalorder %s26, 0
    %p306 = por %p304, %p305
    %s307 = ssub.s32 %s29, %s38
    %p308 = scmp.eq.s32.totalorder %s307, 0
    %s310 = sadd.s32 %s309, 1
    %s311 = scalar_select %p308, %s309, %s310
    %p314 = pneg %p308
    %p315 = scmp.eq.s32.totalorder %s20, 7
    %p316 = por %p314, %p315
    %p317 = scmp.ne.s32.totalorder %s309, %s312
    %p318 = scmp.eq.s32.totalorder %s20, 0
    %p319 = por %p317, %p318
    %p320 = scmp.ne.s32.totalorder %s309, %s312
    %p321 = scmp.eq.s32.totalorder %s25, 7
    %p322 = por %p320, %p321
    %p323 = scmp.ne.s32.totalorder %s312, %s313
    %p324 = scmp.eq.s32.totalorder %s25, 0
    %p325 = por %p323, %p324
    %p326 = scmp.ne.s32.totalorder %s312, %s313
    %p327 = scmp.eq.s32.totalorder %s26, 7
    %p328 = por %p326, %p327
    %p330 = scmp.ne.s32.totalorder %s313, %s329
    %p331 = scmp.eq.s32.totalorder %s26, 0
    %p332 = por %p330, %p331
    %s334 = sadd.s32 %s333, 1
    %p337 = scmp.eq.s32.totalorder %s20, 7
    %p338 = scmp.ne.s32.totalorder %s333, %s335
    %p339 = scmp.eq.s32.totalorder %s20, 0
    %p340 = por %p338, %p339
    %p341 = scmp.ne.s32.totalorder %s333, %s335
    %p342 = scmp.eq.s32.totalorder %s25, 7
    %p343 = por %p341, %p342
    %p344 = scmp.ne.s32.totalorder %s335, %s336
    %p345 = scmp.eq.s32.totalorder %s25, 0
    %p346 = por %p344, %p345
    %p347 = scmp.ne.s32.totalorder %s335, %s336
    %p348 = scmp.eq.s32.totalorder %s26, 7
    %p349 = por %p347, %p348
    %p351 = scmp.ne.s32.totalorder %s336, %s350
    %p352 = scmp.eq.s32.totalorder %s26, 0
    %p353 = por %p351, %p352
    %s355 = sadd.s32 %s354, 1
    %p358 = scmp.eq.s32.totalorder %s20, 7
    %p359 = scmp.ne.s32.totalorder %s354, %s356
    %p360 = scmp.eq.s32.totalorder %s20, 0
    %p361 = por %p359, %p360
    %p362 = scmp.ne.s32.totalorder %s354, %s356
    %p363 = scmp.eq.s32.totalorder %s25, 7
    %p364 = por %p362, %p363
    %p365 = scmp.ne.s32.totalorder %s356, %s357
    %p366 = scmp.eq.s32.totalorder %s25, 0
    %p367 = por %p365, %p366
    %p368 = scmp.ne.s32.totalorder %s356, %s357
    %p369 = scmp.eq.s32.totalorder %s26, 7
    %p370 = por %p368, %p369
    %p372 = scmp.ne.s32.totalorder %s357, %s371
    %p373 = scmp.eq.s32.totalorder %s26, 0
    %p374 = por %p372, %p373
    %s376 = sadd.s32 %s375, 1
    %p379 = scmp.eq.s32.totalorder %s20, 7
    %p380 = scmp.ne.s32.totalorder %s375, %s377
    %p381 = scmp.eq.s32.totalorder %s20, 0
    %p382 = por %p380, %p381
    %p383 = scmp.ne.s32.totalorder %s375, %s377
    %p384 = scmp.eq.s32.totalorder %s25, 7
    %p385 = por %p383, %p384
    %p386 = scmp.ne.s32.totalorder %s377, %s378
    %p387 = scmp.eq.s32.totalorder %s25, 0
    %p388 = por %p386, %p387
    %p389 = scmp.ne.s32.totalorder %s377, %s378
    %p390 = scmp.eq.s32.totalorder %s26, 7
    %p391 = por %p389, %p390
    %p393 = scmp.ne.s32.totalorder %s378, %s392
    %p394 = scmp.eq.s32.totalorder %s26, 0
    %p395 = por %p393, %p394
    %s396 = ssub.s32 %s27, %s46
    %s397 = ssub.s32 %s28, %s42
    %s398 = sor.u32 %s396, %s397
    %p399 = scmp.eq.s32.totalorder %s398, 0
    %s401 = sadd.s32 %s400, 1
    %s402 = scalar_select %p399, %s400, %s401
    %p405 = pneg %p399
    %p406 = scmp.eq.s32.totalorder %s20, 7
    %p407 = por %p405, %p406
    %p408 = scmp.ne.s32.totalorder %s400, %s403
    %p409 = scmp.eq.s32.totalorder %s20, 0
    %p410 = por %p408, %p409
    %p411 = scmp.ne.s32.totalorder %s400, %s403
    %p412 = scmp.eq.s32.totalorder %s25, 7
    %p413 = por %p411, %p412
    %p414 = scmp.ne.s32.totalorder %s403, %s404
    %p415 = scmp.eq.s32.totalorder %s25, 0
    %p416 = por %p414, %p415
    %p417 = scmp.ne.s32.totalorder %s403, %s404
    %p418 = scmp.eq.s32.totalorder %s26, 7
    %p419 = por %p417, %p418
    %p421 = scmp.ne.s32.totalorder %s404, %s420
    %p422 = scmp.eq.s32.totalorder %s26, 0
    %p423 = por %p421, %p422
    %p424 = scmp.le.s32.totalorder 1, %s20
    %p425 = scmp.lt.s32.totalorder %s20, 9
    %p426 = pnand %p424, %p425
    %p427 = pneg %p426
    // Predicated region
    $region9: #{conformer_separator_forward.14} parent=5 // pred_check
      _
    $region10: #{conformer_separator_forward.14} parent=5 // pred_check_branch
      %429 = sbr.rel (%p426) target = $region12
    $region11: #{conformer_separator_forward.14} parent=5 // pred_region
      %s430 = ssub.s32 %s20, 1
      // Predicated region
      $region13: #{conformer_separator_forward.14} parent=11 // pred_check
        %p431 = pneg %p346
      $region14: #{conformer_separator_forward.14} parent=11 // pred_check_branch
        %433 = sbr.rel (%p431) target = $region16
      $region15: #{conformer_separator_forward.14} parent=11 // pred_region
        _
      $region16: #{conformer_separator_forward.14} parent=11 // pred_fallthru
        _
      // Predicated region
      $region17: #{conformer_separator_forward.14} parent=11 // pred_check
        %p434 = pneg %p367
      $region18: #{conformer_separator_forward.14} parent=11 // pred_check_branch
        %436 = sbr.rel (%p434) target = $region20
      $region19: #{conformer_separator_forward.14} parent=11 // pred_region
        _
      $region20: #{conformer_separator_forward.14} parent=11 // pred_fallthru
        _
      // Predicated region
      $region21: #{conformer_separator_forward.14} parent=11 // pred_check
        %p437 = pneg %p388
      $region22: #{conformer_separator_forward.14} parent=11 // pred_check_branch
        %439 = sbr.rel (%p437) target = $region24
      $region23: #{conformer_separator_forward.14} parent=11 // pred_region
        _
      $region24: #{conformer_separator_forward.14} parent=11 // pred_fallthru
        _
    $region12: #{conformer_separator_forward.14} parent=5 // pred_fallthru
      _
    %p440 = scmp.lt.s32.totalorder %s20, 8
    // Predicated region
    $region25: #{conformer_separator_forward.14} parent=5 // pred_check
      %p441 = pneg %p440
    $region26: #{conformer_separator_forward.14} parent=5 // pred_check_branch
      %443 = sbr.rel (%p441) target = $region28
    $region27: #{conformer_separator_forward.14} parent=5 // pred_region
      // Predicated region
      $region29: #{conformer_separator_forward.14} parent=27 // pred_check
        %p444 = pneg %p59
      $region30: #{conformer_separator_forward.14} parent=27 // pred_check_branch
        %446 = sbr.rel (%p444) target = $region32
      $region31: #{conformer_separator_forward.14} parent=27 // pred_region
        %p447 = scmp.lt.s32.totalorder %s27, 1
        %s448 = scalar_select %p447, %s27, 1
        %s449 = smul.addr %s448, 2
        %s450 = smul.addr %s449, 4
        %s451 = scalar_lea.vmem %s0, %s450
      $region32: #{conformer_separator_forward.14} parent=27 // pred_fallthru
        _
      // Predicated region
      $region33: #{conformer_separator_forward.14} parent=27 // pred_check
        %p452 = pneg %p85
      $region34: #{conformer_separator_forward.14} parent=27 // pred_check_branch
        %454 = sbr.rel (%p452) target = $region36
      $region35: #{conformer_separator_forward.14} parent=27 // pred_region
        %p455 = scmp.lt.s32.totalorder %s29, 3
        %s456 = scalar_select %p455, %s29, 3
        %s457 = smul.addr %s456, 4
        %s458 = smul.addr %s457, 4
        %s459 = scalar_lea.vmem %s1, %s458
      $region36: #{conformer_separator_forward.14} parent=27 // pred_fallthru
        _
      // Predicated region
      $region37: #{conformer_separator_forward.14} parent=27 // pred_check
        %p460 = pneg %p111
      $region38: #{conformer_separator_forward.14} parent=27 // pred_check_branch
        %462 = sbr.rel (%p460) target = $region40
      $region39: #{conformer_separator_forward.14} parent=27 // pred_region
        %p463 = scmp.lt.s32.totalorder %s29, 3
        %s464 = scalar_select %p463, %s29, 3
        %s465 = smul.addr %s464, 4
        %s466 = smul.addr %s465, 4
        %s467 = scalar_lea.vmem %s2, %s466
      $region40: #{conformer_separator_forward.14} parent=27 // pred_fallthru
        _
      // Predicated region
      $region41: #{conformer_separator_forward.14} parent=27 // pred_check
        %p468 = pneg %p137
      $region42: #{conformer_separator_forward.14} parent=27 // pred_check_branch
        %470 = sbr.rel (%p468) target = $region44
      $region43: #{conformer_separator_forward.14} parent=27 // pred_region
        %p471 = scmp.lt.s32.totalorder %s29, 3
        %s472 = scalar_select %p471, %s29, 3
        %s473 = smul.addr %s472, 4
        %s474 = smul.addr %s473, 4
        %s475 = scalar_lea.vmem %s3, %s474
      $region44: #{conformer_separator_forward.14} parent=27 // pred_fallthru
        _
      // Predicated region
      $region45: #{conformer_separator_forward.14} parent=27 // pred_check
        %p476 = pneg %p163
      $region46: #{conformer_separator_forward.14} parent=27 // pred_check_branch
        %478 = sbr.rel (%p476) target = $region48
      $region47: #{conformer_separator_forward.14} parent=27 // pred_region
        %p479 = scmp.lt.s32.totalorder %s29, 3
        %s480 = scalar_select %p479, %s29, 3
        %s481 = scalar_lea.vmem %s4, %s480
      $region48: #{conformer_separator_forward.14} parent=27 // pred_fallthru
        _
      // Predicated region
      $region49: #{conformer_separator_forward.14} parent=27 // pred_check
        %p482 = pneg %p189
      $region50: #{conformer_separator_forward.14} parent=27 // pred_check_branch
        %484 = sbr.rel (%p482) target = $region52
      $region51: #{conformer_separator_forward.14} parent=27 // pred_region
        %p485 = scmp.lt.s32.totalorder %s29, 3
        %s486 = scalar_select %p485, %s29, 3
        %s487 = scalar_lea.vmem %s5, %s486
      $region52: #{conformer_separator_forward.14} parent=27 // pred_fallthru
        _
      // Predicated region
      $region53: #{conformer_separator_forward.14} parent=27 // pred_check
        %p488 = pneg %p215
      $region54: #{conformer_separator_forward.14} parent=27 // pred_check_branch
        %490 = sbr.rel (%p488) target = $region56
      $region55: #{conformer_separator_forward.14} parent=27 // pred_region
        %p491 = scmp.lt.s32.totalorder %s29, 3
        %s492 = scalar_select %p491, %s29, 3
        %s493 = scalar_lea.vmem %s6, %s492
      $region56: #{conformer_separator_forward.14} parent=27 // pred_fallthru
        _
      // Predicated region
      $region57: #{conformer_separator_forward.14} parent=27 // pred_check
        %p494 = pneg %p241
      $region58: #{conformer_separator_forward.14} parent=27 // pred_check_branch
        %496 = sbr.rel (%p494) target = $region60
      $region59: #{conformer_separator_forward.14} parent=27 // pred_region
        %p497 = scmp.lt.s32.totalorder %s29, 3
        %s498 = scalar_select %p497, %s29, 3
        %s499 = scalar_lea.vmem %s7, %s498
      $region60: #{conformer_separator_forward.14} parent=27 // pred_fallthru
        _
      // Predicated region
      $region61: #{conformer_separator_forward.14} parent=27 // pred_check
        %p500 = pneg %p267
      $region62: #{conformer_separator_forward.14} parent=27 // pred_check_branch
        %502 = sbr.rel (%p500) target = $region64
      $region63: #{conformer_separator_forward.14} parent=27 // pred_region
        %p503 = scmp.lt.s32.totalorder %s29, 3
        %s504 = scalar_select %p503, %s29, 3
        %s505 = scalar_lea.vmem %s8, %s504
      $region64: #{conformer_separator_forward.14} parent=27 // pred_fallthru
        _
      // Predicated region
      $region65: #{conformer_separator_forward.14} parent=27 // pred_check
        %p506 = pneg %p293
      $region66: #{conformer_separator_forward.14} parent=27 // pred_check_branch
        %508 = sbr.rel (%p506) target = $region68
      $region67: #{conformer_separator_forward.14} parent=27 // pred_region
        %p509 = scmp.lt.s32.totalorder %s29, 3
        %s510 = scalar_select %p509, %s29, 3
        %s511 = smul.addr %s510, 16
        %s512 = smul.addr %s511, 4
        %s513 = scalar_lea.vmem %s9, %s512
      $region68: #{conformer_separator_forward.14} parent=27 // pred_fallthru
        _
      // Predicated region
      $region69: #{conformer_separator_forward.14} parent=27 // pred_check
        %p514 = pneg %p319
      $region70: #{conformer_separator_forward.14} parent=27 // pred_check_branch
        %516 = sbr.rel (%p514) target = $region72
      $region71: #{conformer_separator_forward.14} parent=27 // pred_region
        %p517 = scmp.lt.s32.totalorder %s29, 3
        %s518 = scalar_select %p517, %s29, 3
        %s519 = smul.addr %s518, 4
        %s520 = scalar_lea.vmem %s10, %s519
      $region72: #{conformer_separator_forward.14} parent=27 // pred_fallthru
        _
    $region28: #{conformer_separator_forward.14} parent=5 // pred_fallthru
      _
    %p521 = scmp.le.s32.totalorder 1, %s20
    %p522 = scmp.lt.s32.totalorder %s20, 9
    %p523 = pnand %p521, %p522
    %p524 = pneg %p523
    // Predicated region
    $region73: #{conformer_separator_forward.14} parent=5 // pred_check
      _
    $region74: #{conformer_separator_forward.14} parent=5 // pred_check_branch
      %526 = sbr.rel (%p523) target = $region76
    $region75: #{conformer_separator_forward.14} parent=5 // pred_region
      %s527 = ssub.s32 %s20, 1
      %p528 = scmp.lt.s32.totalorder %s30, 1
      %s529 = scalar_select %p528, %s30, 1
      %s530 = smul.addr %s529, 2
      %s531 = smul.addr %s530, 4
      %s532 = scalar_lea.vmem %s0, %s531
      %p533 = pneg %p65
      %p534 = pneg %p62
      %p535 = scmp.lt.s32.totalorder %s32, 3
      %s536 = scalar_select %p535, %s32, 3
      %s537 = smul.addr %s536, 4
      %s538 = smul.addr %s537, 4
      %s539 = scalar_lea.vmem %s1, %s538
      %p540 = pneg %p91
      %p541 = pneg %p88
      %p542 = scmp.lt.s32.totalorder %s32, 3
      %s543 = scalar_select %p542, %s32, 3
      %s544 = smul.addr %s543, 4
      %s545 = smul.addr %s544, 4
      %s546 = scalar_lea.vmem %s2, %s545
      %p547 = pneg %p117
      %p548 = pneg %p114
      %p549 = scmp.lt.s32.totalorder %s32, 3
      %s550 = scalar_select %p549, %s32, 3
      %s551 = smul.addr %s550, 4
      %s552 = smul.addr %s551, 4
      %s553 = scalar_lea.vmem %s3, %s552
      %p554 = pneg %p143
      %p555 = pneg %p140
      %p556 = scmp.lt.s32.totalorder %s32, 3
      %s557 = scalar_select %p556, %s32, 3
      %s558 = scalar_lea.vmem %s4, %s557
      %p559 = pneg %p169
      %p560 = pneg %p166
      %p561 = scmp.lt.s32.totalorder %s32, 3
      %s562 = scalar_select %p561, %s32, 3
      %s563 = scalar_lea.vmem %s5, %s562
      %p564 = pneg %p195
      %p565 = pneg %p192
      %p566 = scmp.lt.s32.totalorder %s32, 3
      %s567 = scalar_select %p566, %s32, 3
      %s568 = scalar_lea.vmem %s6, %s567
      %p569 = pneg %p221
      %p570 = pneg %p218
      %p571 = scmp.lt.s32.totalorder %s32, 3
      %s572 = scalar_select %p571, %s32, 3
      %s573 = scalar_lea.vmem %s7, %s572
      %p574 = pneg %p247
      %p575 = pneg %p244
      %p576 = scmp.lt.s32.totalorder %s32, 3
      %s577 = scalar_select %p576, %s32, 3
      %s578 = scalar_lea.vmem %s8, %s577
      %p579 = pneg %p273
      %p580 = pneg %p270
      %p581 = scmp.lt.s32.totalorder %s32, 3
      %s582 = scalar_select %p581, %s32, 3
      %s583 = smul.addr %s582, 16
      %s584 = smul.addr %s583, 4
      %s585 = scalar_lea.vmem %s9, %s584
      %p586 = pneg %p299
      %p587 = pneg %p296
      %p588 = scmp.lt.s32.totalorder %s32, 3
      %s589 = scalar_select %p588, %s32, 3
      %s590 = smul.addr %s589, 4
      %s591 = scalar_lea.vmem %s10, %s590
      %p592 = pneg %p325
      %p593 = pneg %p322
      %p594 = pneg %p346
      %p595 = pneg %p343
      %p596 = pneg %p367
      %p597 = pneg %p364
      %p598 = pneg %p388
      %p599 = pneg %p385
      %p600 = pneg %p416
      %p601 = pneg %p413
      %s602 = smul.u32 2, %s31
      %p603 = scmp.lt.s32.totalorder %s30, 1
      %s604 = scalar_select %p603, %s30, 1
      %p605 = scmp.lt.s32.totalorder %s602, 1
      %s606 = scalar_select %p605, %s602, 1
      %s607 = smul.addr %s604, 2
      %s608 = sadd.s32 %s606, %s607
      %s609 = smul.addr %s608, 4
      %s610 = scalar_lea.vmem %s14, %s609
      %p611 = scmp.lt.s32.totalorder %s30, 1
      %s612 = scalar_select %p611, %s30, 1
      %s613 = smul.addr %s612, 2
      %s614 = smul.addr %s613, 4
      %s615 = scalar_lea.vmem %s0, %s614
      %p616 = scmp.lt.s32.totalorder %s32, 3
      %s617 = scalar_select %p616, %s32, 3
      %s618 = smul.addr %s617, 4
      %s619 = smul.addr %s618, 4
      %s620 = scalar_lea.vmem %s1, %s619
      %p621 = scmp.lt.s32.totalorder %s32, 3
      %s622 = scalar_select %p621, %s32, 3
      %s623 = smul.addr %s622, 4
      %s624 = smul.addr %s623, 4
      %s625 = scalar_lea.vmem %s2, %s624
      %p626 = scmp.lt.s32.totalorder %s32, 3
      %s627 = scalar_select %p626, %s32, 3
      %s628 = smul.addr %s627, 4
      %s629 = smul.addr %s628, 4
      %s630 = scalar_lea.vmem %s3, %s629
      %p631 = scmp.lt.s32.totalorder %s32, 3
      %s632 = scalar_select %p631, %s32, 3
      %s633 = scalar_lea.vmem %s4, %s632
      %p634 = scmp.lt.s32.totalorder %s32, 3
      %s635 = scalar_select %p634, %s32, 3
      %s636 = scalar_lea.vmem %s5, %s635
      %p637 = scmp.lt.s32.totalorder %s32, 3
      %s638 = scalar_select %p637, %s32, 3
      %s639 = scalar_lea.vmem %s6, %s638
      %p640 = scmp.lt.s32.totalorder %s32, 3
      %s641 = scalar_select %p640, %s32, 3
      %s642 = scalar_lea.vmem %s7, %s641
      %p643 = scmp.lt.s32.totalorder %s32, 3
      %s644 = scalar_select %p643, %s32, 3
      %s645 = scalar_lea.vmem %s8, %s644
      %p646 = scmp.lt.s32.totalorder %s32, 3
      %s647 = scalar_select %p646, %s32, 3
      %s648 = smul.addr %s647, 16
      %s649 = smul.addr %s648, 4
      %s650 = scalar_lea.vmem %s9, %s649
      %p651 = scmp.lt.s32.totalorder %s32, 3
      %s652 = scalar_select %p651, %s32, 3
      %s653 = smul.addr %s652, 4
      %s654 = scalar_lea.vmem %s10, %s653
      %s655 = smul.u32 2, %s31
      %p656 = scmp.lt.s32.totalorder %s30, 1
      %s657 = scalar_select %p656, %s30, 1
      %p658 = scmp.lt.s32.totalorder %s655, 1
      %s659 = scalar_select %p658, %s655, 1
      %s660 = smul.addr %s657, 2
      %s661 = sadd.s32 %s659, %s660
      %s662 = smul.addr %s661, 4
      %s663 = scalar_lea.vmem %s14, %s662
      %s664 = smul.u32 2, %s31
      %p666 = scmp.eq.s32.totalorder %s32, 0
      // Predicated region
      $region77: #{conformer_separator_forward.14} parent=75 // pred_check
        %p667 = pneg %p666
      $region78: #{conformer_separator_forward.14} parent=75 // pred_check_branch
        %669 = sbr.rel (%p667) target = $region80
      $region79: #{conformer_separator_forward.14} parent=75 // pred_region
        %vm670 = vcmask 261120
        %671 = vst.msk [vmem:[#allocation2] sm:$0xff] %vm670, 0.0
        %672 = vst.msk [vmem:[#allocation2 + $0x8] sm:$0xff] %vm670, 0.0
      $region80: #{conformer_separator_forward.14} parent=75 // pred_fallthru
        _
      %v673 = vld [vmem:[%s615] sm:$0xf]
      %v674 = vld [vmem:[%s615 + $0x4] sm:$0xf]
      %v675 = vld [vmem:[%s620] sm:$0xf]
      %v676 = vld [vmem:[%s620 + $0x4] sm:$0xf]
      %v677 = vld [vmem:[%s620 + $0x8] sm:$0xf]
      %v678 = vld [vmem:[%s620 + $0xc] sm:$0xf]
      %v679 = vld [vmem:[%s633] sm:$0x1]
      %v681 = vperm.slane %v679, 0
      %v685 = vunpack.c.l.b16 %v673
      %v686 = vunpack.c.l.b16 %v674
      %v687 = vpack.c.b16 %v686, %v685
      %v692 = vunpack.c.l.b16 %v675
      %v693 = vunpack.c.l.b16 %v676
      %v694 = vunpack.c.l.b16 %v677
      %v695 = vunpack.c.l.b16 %v678
      %v696 = vpack.c.b16 %v693, %v692
      %v697 = vpack.c.b16 %v695, %v694
      %vm700 = vcmask 261120
      %v702 = vsel %vm700, %v687, 0
      %704 = vmatpush.bf16.msra.mxu0 0
      %705 = vmatpush.bf16.msra.mxu0 0
      %706 = vmatpush.bf16.msra.mxu0 0
      %707 = vmatpush.bf16.msra.mxu0 0
      %708 = vmatpush.bf16.msra.mxu0 0
      %709 = vmatpush.bf16.msra.mxu0 0
      %710 = vmatpush.bf16.msra.mxu0 %v697
      %711 = vmatpush.bf16.msra.mxu0 %v696
      %712 = vmatmul.bf16.gmra.mxu0 %v702
      %v713 = vpop.f32.mrf.mxu0
      %v714 = vadd.f32 %v681, %v713
      %v715 = vpop.f32.mrf.mxu0
      %v716 = vadd.f32 %v681, %v715
      %717 = vdwg.mxu0
      %v718 = vld [vmem:[%s625] sm:$0xf]
      %v719 = vld [vmem:[%s625 + $0x4] sm:$0xf]
      %v720 = vld [vmem:[%s625 + $0x8] sm:$0xf]
      %v721 = vld [vmem:[%s625 + $0xc] sm:$0xf]
      %v722 = vld [vmem:[%s636] sm:$0x1]
      %v724 = vperm.slane %v722, 0
      %v730 = vunpack.c.l.b16 %v718
      %v731 = vunpack.c.l.b16 %v719
      %v732 = vunpack.c.l.b16 %v720
      %v733 = vunpack.c.l.b16 %v721
      %v734 = vpack.c.b16 %v731, %v730
      %v735 = vpack.c.b16 %v733, %v732
      %738 = vmatpush.bf16.msra.mxu0 0
      %739 = vmatpush.bf16.msra.mxu0 0
      %740 = vmatpush.bf16.msra.mxu0 0
      %741 = vmatpush.bf16.msra.mxu0 0
      %742 = vmatpush.bf16.msra.mxu0 0
      %743 = vmatpush.bf16.msra.mxu0 0
      %744 = vmatpush.bf16.msra.mxu0 %v735
      %745 = vmatpush.bf16.msra.mxu0 %v734
      %746 = vmatmul.bf16.gmra.mxu0 %v702
      %v747 = vpop.f32.mrf.mxu0
      %v748 = vadd.f32 %v724, %v747
      %v749 = vpop.f32.mrf.mxu0
      %v750 = vadd.f32 %v724, %v749
      %751 = vdwg.mxu0
      %v752 = vld [vmem:[%s630] sm:$0xf]
      %v753 = vld [vmem:[%s630 + $0x4] sm:$0xf]
      %v754 = vld [vmem:[%s630 + $0x8] sm:$0xf]
      %v755 = vld [vmem:[%s630 + $0xc] sm:$0xf]
      %v756 = vld [vmem:[%s639] sm:$0x1]
      %v758 = vperm.slane %v756, 0
      %v764 = vunpack.c.l.b16 %v752
      %v765 = vunpack.c.l.b16 %v753
      %v766 = vunpack.c.l.b16 %v754
      %v767 = vunpack.c.l.b16 %v755
      %v768 = vpack.c.b16 %v765, %v764
      %v769 = vpack.c.b16 %v767, %v766
      %772 = vmatpush.bf16.msra.mxu0 0
      %773 = vmatpush.bf16.msra.mxu0 0
      %774 = vmatpush.bf16.msra.mxu0 0
      %775 = vmatpush.bf16.msra.mxu0 0
      %776 = vmatpush.bf16.msra.mxu0 0
      %777 = vmatpush.bf16.msra.mxu0 0
      %778 = vmatpush.bf16.msra.mxu0 %v769
      %779 = vmatpush.bf16.msra.mxu0 %v768
      %780 = vmatmul.bf16.gmra.mxu0 %v702
      %v781 = vpop.f32.mrf.mxu0
      %v782 = vadd.f32 %v758, %v781
      %v783 = vpop.f32.mrf.mxu0
      %v784 = vadd.f32 %v758, %v783
      %785 = vdwg.mxu0
      %v786 = vld [vmem:[%s642] sm:$0x1]
      %v788 = vperm.slane %v786, 0
      %v790 = vadd.f32 %v714, %v788
      %v791 = vadd.f32 %v716, %v788
      %v792 = vpack.c.bf16 %v791, %v790
      %v793 = vld [vmem:[%s645] sm:$0x1]
      %v795 = vperm.slane %v793, 0
      %v797 = vadd.f32 %v714, %v795
      %v798 = vadd.f32 %v716, %v795
      %v799 = vpack.c.bf16 %v798, %v797
      %v800 = vpack.c.bf16 %v750, %v748
      %v801 = vpack.c.bf16 %v784, %v782
      %v802 = vld [vmem:[%s650] sm:$0xf]
      %v803 = vld [vmem:[%s650 + $0x4] sm:$0xf]
      %v804 = vld [vmem:[%s650 + $0x8] sm:$0xf]
      %v805 = vld [vmem:[%s650 + $0xc] sm:$0xf]
      %v806 = vld [vmem:[%s650 + $0x10] sm:$0xf]
      %v807 = vld [vmem:[%s650 + $0x14] sm:$0xf]
      %v808 = vld [vmem:[%s650 + $0x18] sm:$0xf]
      %v809 = vld [vmem:[%s650 + $0x1c] sm:$0xf]
      %v810 = vld [vmem:[%s650 + $0x20] sm:$0xf]
      %v811 = vld [vmem:[%s650 + $0x24] sm:$0xf]
      %v812 = vld [vmem:[%s650 + $0x28] sm:$0xf]
      %v813 = vld [vmem:[%s650 + $0x2c] sm:$0xf]
      %v814 = vld [vmem:[%s650 + $0x30] sm:$0xf]
      %v815 = vld [vmem:[%s650 + $0x34] sm:$0xf]
      %v816 = vld [vmem:[%s650 + $0x38] sm:$0xf]
      %v817 = vld [vmem:[%s650 + $0x3c] sm:$0xf]
      %v834 = vunpack.c.l.b16 %v802
      %v835 = vunpack.c.l.b16 %v803
      %v836 = vunpack.c.l.b16 %v804
      %v837 = vunpack.c.l.b16 %v805
      %v838 = vunpack.c.l.b16 %v806
      %v839 = vunpack.c.l.b16 %v807
      %v840 = vunpack.c.l.b16 %v808
      %v841 = vunpack.c.l.b16 %v809
      %v842 = vunpack.c.l.b16 %v810
      %v843 = vunpack.c.l.b16 %v811
      %v844 = vunpack.c.l.b16 %v812
      %v845 = vunpack.c.l.b16 %v813
      %v846 = vunpack.c.l.b16 %v814
      %v847 = vunpack.c.l.b16 %v815
      %v848 = vunpack.c.l.b16 %v816
      %v849 = vunpack.c.l.b16 %v817
      %v850 = vpack.c.b16 %v835, %v834
      %v851 = vpack.c.b16 %v837, %v836
      %v852 = vpack.c.b16 %v839, %v838
      %v853 = vpack.c.b16 %v841, %v840
      %v854 = vpack.c.b16 %v843, %v842
      %v855 = vpack.c.b16 %v845, %v844
      %v856 = vpack.c.b16 %v847, %v846
      %v857 = vpack.c.b16 %v849, %v848
      %vm858 = vcmask 64512
      %v860 = vsel %vm858, %v799, 0
      %v863 = vsel %vm858, %v850, 0
      %v866 = vsel %vm858, %v851, 0
      %v869 = vsel %vm858, %v852, 0
      %v872 = vsel %vm858, %v853, 0
      %v875 = vsel %vm858, %v854, 0
      %v878 = vsel %vm858, %v855, 0
      %v881 = vsel %vm858, %v856, 0
      %v884 = vsel %vm858, %v857, 0
      %886 = vmatpush.bf16.xpose.msra.mxu0 %v884
      %887 = vmatpush.bf16.xpose.msra.mxu0 %v881
      %888 = vmatpush.bf16.xpose.msra.mxu0 %v878
      %889 = vmatpush.bf16.xpose.msra.mxu0 %v875
      %890 = vmatpush.bf16.xpose.msra.mxu0 %v872
      %891 = vmatpush.bf16.xpose.msra.mxu0 %v869
      %892 = vmatpush.bf16.xpose.msra.mxu0 %v866
      %893 = vmatpush.bf16.xpose.msra.mxu0 %v863
      %894 = vmatmul.bf16.gmra.mxu0 %v860
      %v895 = vpop.f32.mrf.mxu0
      %v896 = vadd.f32 0.0, %v895
      %v897 = vpop.f32.mrf.mxu0
      %v898 = vadd.f32 0.0, %v897
      %899 = vdwg.mxu0
      %v900 = vlaneseq
      %v901 = vshrl.u32 %v900, 7
      %v902 = vadd.s32 %v901, 8
      %vm903 = vcmp.eq.s32.totalorder %v901, 0
      %vm904 = vcmp.eq.s32.totalorder %v902, 0
      %v905 = vperm.slane %v896, 0
      %v906 = vsel %vm903, %v905, 0.0
      %v907 = vsel %vm904, %v905, 0.0
      %vm908 = vcmp.eq.s32.totalorder %v901, 1
      %vm909 = vcmp.eq.s32.totalorder %v902, 1
      %v910 = vperm.slane %v896, 1
      %913 = vrot.lane.b32.xlu0 %v906, 127
      %v914 = vpop.permute.xlu0 %913
      %915 = vrot.lane.b32.xlu0 %v907, 127
      %v916 = vpop.permute.xlu0 %915
      %v919 = vsel %vm908, %v910, %v914
      %v920 = vsel %vm909, %v910, %v916
      %vm921 = vcmp.eq.s32.totalorder %v901, 2
      %vm922 = vcmp.eq.s32.totalorder %v902, 2
      %v923 = vperm.slane %v896, 2
      %926 = vrot.lane.b32.xlu0 %v919, 127
      %v927 = vpop.permute.xlu0 %926
      %928 = vrot.lane.b32.xlu0 %v920, 127
      %v929 = vpop.permute.xlu0 %928
      %v932 = vsel %vm921, %v923, %v927
      %v933 = vsel %vm922, %v923, %v929
      %vm934 = vcmp.eq.s32.totalorder %v901, 3
      %vm935 = vcmp.eq.s32.totalorder %v902, 3
      %v936 = vperm.slane %v896, 3
      %939 = vrot.lane.b32.xlu0 %v932, 127
      %v940 = vpop.permute.xlu0 %939
      %941 = vrot.lane.b32.xlu0 %v933, 127
      %v942 = vpop.permute.xlu0 %941
      %v945 = vsel %vm934, %v936, %v940
      %v946 = vsel %vm935, %v936, %v942
      %vm947 = vcmp.eq.s32.totalorder %v901, 4
      %vm948 = vcmp.eq.s32.totalorder %v902, 4
      %v949 = vperm.slane %v896, 4
      %952 = vrot.lane.b32.xlu0 %v945, 127
      %v953 = vpop.permute.xlu0 %952
      %954 = vrot.lane.b32.xlu0 %v946, 127
      %v955 = vpop.permute.xlu0 %954
      %v958 = vsel %vm947, %v949, %v953
      %v959 = vsel %vm948, %v949, %v955
      %vm960 = vcmp.eq.s32.totalorder %v901, 5
      %vm961 = vcmp.eq.s32.totalorder %v902, 5
      %v962 = vperm.slane %v896, 5
      %965 = vrot.lane.b32.xlu0 %v958, 127
      %v966 = vpop.permute.xlu0 %965
      %967 = vrot.lane.b32.xlu0 %v959, 127
      %v968 = vpop.permute.xlu0 %967
      %v971 = vsel %vm960, %v962, %v966
      %v972 = vsel %vm961, %v962, %v968
      %vm973 = vcmp.eq.s32.totalorder %v901, 6
      %vm974 = vcmp.eq.s32.totalorder %v902, 6
      %v975 = vperm.slane %v896, 6
      %978 = vrot.lane.b32.xlu0 %v971, 127
      %v979 = vpop.permute.xlu0 %978
      %980 = vrot.lane.b32.xlu0 %v972, 127
      %v981 = vpop.permute.xlu0 %980
      %v984 = vsel %vm973, %v975, %v979
      %v985 = vsel %vm974, %v975, %v981
      %vm986 = vcmp.eq.s32.totalorder %v901, 7
      %vm987 = vcmp.eq.s32.totalorder %v902, 7
      %v988 = vperm.slane %v896, 7
      %991 = vrot.lane.b32.xlu0 %v984, 127
      %v992 = vpop.permute.xlu0 %991
      %993 = vrot.lane.b32.xlu0 %v985, 127
      %v994 = vpop.permute.xlu0 %993
      %v997 = vsel %vm986, %v988, %v992
      %v998 = vsel %vm987, %v988, %v994
      %vm999 = vcmp.eq.s32.totalorder %v901, 8
      %vm1000 = vcmp.eq.s32.totalorder %v902, 8
      %v1001 = vperm.slane %v898, 0
      %1004 = vrot.lane.b32.xlu0 %v997, 127
      %v1005 = vpop.permute.xlu0 %1004
      %1006 = vrot.lane.b32.xlu0 %v998, 127
      %v1007 = vpop.permute.xlu0 %1006
      %v1010 = vsel %vm999, %v1001, %v1005
      %v1011 = vsel %vm1000, %v1001, %v1007
      %vm1012 = vcmp.eq.s32.totalorder %v901, 9
      %vm1013 = vcmp.eq.s32.totalorder %v902, 9
      %v1014 = vperm.slane %v898, 1
      %1017 = vrot.lane.b32.xlu0 %v1010, 127
      %v1018 = vpop.permute.xlu0 %1017
      %1019 = vrot.lane.b32.xlu0 %v1011, 127
      %v1020 = vpop.permute.xlu0 %1019
      %v1023 = vsel %vm1012, %v1014, %v1018
      %v1024 = vsel %vm1013, %v1014, %v1020
      %vm1025 = vcmp.eq.s32.totalorder %v901, 10
      %vm1026 = vcmp.eq.s32.totalorder %v902, 10
      %v1027 = vperm.slane %v898, 2
      %1030 = vrot.lane.b32.xlu0 %v1023, 127
      %v1031 = vpop.permute.xlu0 %1030
      %1032 = vrot.lane.b32.xlu0 %v1024, 127
      %v1033 = vpop.permute.xlu0 %1032
      %v1036 = vsel %vm1025, %v1027, %v1031
      %v1037 = vsel %vm1026, %v1027, %v1033
      %vm1038 = vcmp.eq.s32.totalorder %v901, 11
      %vm1039 = vcmp.eq.s32.totalorder %v902, 11
      %v1040 = vperm.slane %v898, 3
      %1043 = vrot.lane.b32.xlu0 %v1036, 127
      %v1044 = vpop.permute.xlu0 %1043
      %1045 = vrot.lane.b32.xlu0 %v1037, 127
      %v1046 = vpop.permute.xlu0 %1045
      %v1049 = vsel %vm1038, %v1040, %v1044
      %v1050 = vsel %vm1039, %v1040, %v1046
      %vm1051 = vcmp.eq.s32.totalorder %v901, 12
      %vm1052 = vcmp.eq.s32.totalorder %v902, 12
      %v1053 = vperm.slane %v898, 4
      %1056 = vrot.lane.b32.xlu0 %v1049, 127
      %v1057 = vpop.permute.xlu0 %1056
      %1058 = vrot.lane.b32.xlu0 %v1050, 127
      %v1059 = vpop.permute.xlu0 %1058
      %v1062 = vsel %vm1051, %v1053, %v1057
      %v1063 = vsel %vm1052, %v1053, %v1059
      %vm1064 = vcmp.eq.s32.totalorder %v901, 13
      %vm1065 = vcmp.eq.s32.totalorder %v902, 13
      %v1066 = vperm.slane %v898, 5
      %1069 = vrot.lane.b32.xlu0 %v1062, 127
      %v1070 = vpop.permute.xlu0 %1069
      %1071 = vrot.lane.b32.xlu0 %v1063, 127
      %v1072 = vpop.permute.xlu0 %1071
      %v1075 = vsel %vm1064, %v1066, %v1070
      %v1076 = vsel %vm1065, %v1066, %v1072
      %vm1077 = vcmp.eq.s32.totalorder %v901, 14
      %vm1078 = vcmp.eq.s32.totalorder %v902, 14
      %v1079 = vperm.slane %v898, 6
      %1082 = vrot.lane.b32.xlu0 %v1075, 127
      %v1083 = vpop.permute.xlu0 %1082
      %1084 = vrot.lane.b32.xlu0 %v1076, 127
      %v1085 = vpop.permute.xlu0 %1084
      %v1088 = vsel %vm1077, %v1079, %v1083
      %v1089 = vsel %vm1078, %v1079, %v1085
      %vm1090 = vcmp.eq.s32.totalorder %v901, 15
      %vm1091 = vcmp.eq.s32.totalorder %v902, 15
      %v1092 = vperm.slane %v898, 7
      %1095 = vrot.lane.b32.xlu0 %v1088, 127
      %v1096 = vpop.permute.xlu0 %1095
      %1097 = vrot.lane.b32.xlu0 %v1089, 127
      %v1098 = vpop.permute.xlu0 %1097
      %v1101 = vsel %vm1090, %v1092, %v1096
      %v1102 = vsel %vm1091, %v1092, %v1098
      %1105 = vrot.lane.b32.xlu0 %v1101, 127
      %v1106 = vpop.permute.xlu0 %1105
      %1107 = vrot.lane.b32.xlu0 %v1102, 127
      %v1108 = vpop.permute.xlu0 %1107
      %v1112 = vsel %vm858, %v792, 0
      %v1115 = vsel %vm858, %v800, 0
      %1117 = vmatpush.bf16.xpose.msra.mxu0 0
      %1118 = vmatpush.bf16.xpose.msra.mxu0 0
      %1119 = vmatpush.bf16.xpose.msra.mxu0 0
      %1120 = vmatpush.bf16.xpose.msra.mxu0 0
      %1121 = vmatpush.bf16.xpose.msra.mxu0 0
      %1122 = vmatpush.bf16.xpose.msra.mxu0 0
      %1123 = vmatpush.bf16.xpose.msra.mxu0 0
      %1124 = vmatpush.bf16.xpose.msra.mxu0 %v1115
      %1125 = vmatmul.bf16.gmra.mxu0 %v1112
      %v1126 = vpop.f32.mrf.mxu0
      %v1127 = vadd.f32 %v1106, %v1126
      %v1128 = vpop.f32.mrf.mxu0
      %v1129 = vadd.f32 %v1108, %v1128
      %1130 = vdwg.mxu0
      %v1131 = vmul.f32 %v1127, 0.35355338
      %v1132 = vmul.f32 %v1129, 0.35355338
      %vm1133 = vcmask 130048
      %v1134 = vsel %vm1133, %v1131, -inf
      %1135 = vmax.xlane.f32.xlu0 %v1134
      %v1136 = vpop.xlane.xlu0 %1135
      %v1137 = vsel %vm1133, %v1132, -inf
      %1138 = vmax.xlane.f32.xlu0 %v1137
      %v1139 = vpop.xlane.xlu0 %1138
      %v1140 = vsub.f32 %v1131, %v1136
      %v1141 = vsub.f32 %v1132, %v1139
      %v1142 = vmul.f32 %v1140, 1.442695
      %v1143 = vpow.pop %v1142
      %v1144 = vmul.f32 %v1141, 1.442695
      %v1145 = vpow.pop %v1144
      %v1146 = vsel %vm1133, %v1143, 0.0
      %1147 = vadd.xlane.f32.xlu0 %v1146
      %v1148 = vpop.xlane.xlu0 %1147
      %v1149 = vsel %vm1133, %v1145, 0.0
      %1150 = vadd.xlane.f32.xlu0 %v1149
      %v1151 = vpop.xlane.xlu0 %1150
      %v1152 = vrcp.pop %v1148
      %v1153 = vrcp.pop %v1151
      %v1154 = vmul.f32 %v1143, %v1152
      %v1155 = vmul.f32 %v1145, %v1153
      %v1156 = vpack.c.bf16 %v1155, %v1154
      %v1158 = vsel %vm1133, %v1156, 0
      %1160 = vmatpush.bf16.msra.mxu0 0
      %1161 = vmatpush.bf16.msra.mxu0 0
      %1162 = vmatpush.bf16.msra.mxu0 0
      %1163 = vmatpush.bf16.msra.mxu0 0
      %1164 = vmatpush.bf16.msra.mxu0 0
      %1165 = vmatpush.bf16.msra.mxu0 0
      %1166 = vmatpush.bf16.msra.mxu0 0
      %1167 = vmatpush.bf16.msra.mxu0 %v801
      %1168 = vmatmul.bf16.gmra.mxu0 %v1158
      %v1169 = vpop.f32.mrf.mxu0
      %v1170 = vadd.f32 0.0, %v1169
      %v1171 = vpop.f32.mrf.mxu0
      %v1172 = vadd.f32 0.0, %v1171
      %1173 = vdwg.mxu0
      %v1174 = vld [vmem:[#allocation2] sm:$0xff]
      %v1175 = vld [vmem:[#allocation2 + $0x8] sm:$0xff]
      %v1176 = vpack.c.bf16 %v1172, %v1170
      %v1177 = vld [vmem:[%s654] sm:$0xf]
      %v1179 = vsel %vm858, %v1176, 0
      %vm1181 = vcmask 1043456
      %v1183 = vsel %vm1181, %v1177, 0
      %1185 = vmatpush.bf16.msra.mxu0 0
      %1186 = vmatpush.bf16.msra.mxu0 0
      %1187 = vmatpush.bf16.msra.mxu0 0
      %1188 = vmatpush.bf16.msra.mxu0 0
      %1189 = vmatpush.bf16.msra.mxu0 0
      %1190 = vmatpush.bf16.msra.mxu0 0
      %1191 = vmatpush.bf16.msra.mxu0 0
      %1192 = vmatpush.bf16.msra.mxu0 %v1183
      %1193 = vmatmul.bf16.gmra.mxu0 %v1179
      %v1194 = vpop.f32.mrf.mxu0
      %v1195 = vadd.f32 0.0, %v1194
      %v1196 = vpop.f32.mrf.mxu0
      %v1197 = vadd.f32 0.0, %v1196
      %1198 = vdwg.mxu0
      %v1199 = vadd.f32 %v1174, %v1195
      %v1200 = vadd.f32 %v1175, %v1197
      %1201 = vst.msk [vmem:[#allocation2] sm:$0xff] %vm700, %v1199
      %1202 = vst.msk [vmem:[#allocation2 + $0x8] sm:$0xff] %vm700, %v1200
      %p1203 = scmp.eq.s32.totalorder %s32, 3
      // Predicated region
      $region81: #{conformer_separator_forward.14} parent=75 // pred_check
        %p1204 = pneg %p1203
      $region82: #{conformer_separator_forward.14} parent=75 // pred_check_branch
        %1206 = sbr.rel (%p1204) target = $region84
      $region83: #{conformer_separator_forward.14} parent=75 // pred_region
        %v1207 = vunpack.c.l.bf16 %v673
        %v1208 = vunpack.c.l.bf16 %v674
        %v1209 = vld [vmem:[#allocation2] sm:$0xff]
        %v1210 = vld [vmem:[#allocation2 + $0x8] sm:$0xff]
        %v1211 = vadd.f32 %v1207, %v1209
        %v1212 = vadd.f32 %v1208, %v1210
        %v1213 = vld [vmem:[%s11] sm:$0x1]
        %v1215 = vperm.slane %v1213, 0
        %v1217 = vadd.f32 %v1211, %v1215
        %v1218 = vadd.f32 %v1212, %v1215
        %v1219 = vld [vmem:[%s12] sm:$0x1]
        %v1220 = vld [vmem:[%s13] sm:$0x1]
        %v1221 = vsel %vm700, %v1217, 0.0
        %1222 = vadd.xlane.f32.xlu0 %v1221
        %v1223 = vpop.xlane.xlu0 %1222
        %v1224 = vsel %vm700, %v1218, 0.0
        %1225 = vadd.xlane.f32.xlu0 %v1224
        %v1226 = vpop.xlane.xlu0 %1225
        %v1227 = vrcp.pop 32.0
        %v1228 = vmul.f32 32.0, %v1227
        %v1229 = vsub.f32 1.0, %v1228
        %v1230 = vmul.f32 %v1227, %v1229
        %v1231 = vadd.f32 %v1227, %v1230
        %vm1232 = vweird.f32 %v1227
        %v1233 = vsel %vm1232, %v1227, %v1231
        %v1234 = vmul.f32 %v1223, %v1233
        %v1235 = vmul.f32 %v1226, %v1233
        %v1236 = vsub.f32 %v1217, %v1234
        %v1237 = vsub.f32 %v1218, %v1235
        %v1238 = vmul.f32 %v1236, %v1236
        %v1239 = vmul.f32 %v1237, %v1237
        %v1240 = vsel %vm700, %v1238, 0.0
        %1241 = vadd.xlane.f32.xlu0 %v1240
        %v1242 = vpop.xlane.xlu0 %1241
        %v1243 = vsel %vm700, %v1239, 0.0
        %1244 = vadd.xlane.f32.xlu0 %v1243
        %v1245 = vpop.xlane.xlu0 %1244
        %v1246 = vmul.f32 %v1242, %v1233
        %v1247 = vmul.f32 %v1245, %v1233
        %v1248 = vadd.f32 %v1246, 1e-12
        %v1249 = vadd.f32 %v1247, 1e-12
        %v1250 = vrsqrt.pop %v1248
        %v1251 = vmul.f32 %v1250, %v1248
        %v1252 = vmul.f32 %v1251, %v1250
        %v1253 = vmul.f32 0.5, %v1252
        %v1254 = vsub.f32 1.5, %v1253
        %v1255 = vmul.f32 %v1250, %v1254
        %vm1256 = vweird.f32 %v1248
        %vm1257 = vweird.f32 %v1250
        %vm1258 = vmor %vm1256, %vm1257
        %v1259 = vsel %vm1258, %v1250, %v1255
        %v1260 = vrsqrt.pop %v1249
        %v1261 = vmul.f32 %v1260, %v1249
        %v1262 = vmul.f32 %v1261, %v1260
        %v1263 = vmul.f32 0.5, %v1262
        %v1264 = vsub.f32 1.5, %v1263
        %v1265 = vmul.f32 %v1260, %v1264
        %vm1266 = vweird.f32 %v1249
        %vm1267 = vweird.f32 %v1260
        %vm1268 = vmor %vm1266, %vm1267
        %v1269 = vsel %vm1268, %v1260, %v1265
        %v1270 = vmul.f32 %v1236, %v1259
        %v1271 = vmul.f32 %v1237, %v1269
        %v1273 = vperm.slane %v1219, 0
        %v1275 = vmul.f32 %v1270, %v1273
        %v1276 = vmul.f32 %v1271, %v1273
        %v1278 = vperm.slane %v1220, 0
        %v1280 = vadd.f32 %v1275, %v1278
        %v1281 = vadd.f32 %v1276, %v1278
        %v1282 = vpack.c.bf16 %v1280, %v1280
        %v1283 = vpack.c.bf16 %v1281, %v1281
        %vm1284 = vcmask 257024
        %1285 = vst.msk [vmem:[%s663] sm:$0xf] %vm1284, %v1282
        %1286 = vst.msk [vmem:[%s663 + $0x4] sm:$0xf] %vm1284, %v1283
      $region84: #{conformer_separator_forward.14} parent=75 // pred_fallthru
        _
      %s1287 = smul.u32 2, %s31
      %p1288 = scmp.lt.s32.totalorder %s30, 1
      %s1289 = scalar_select %p1288, %s30, 1
      %p1290 = scmp.lt.s32.totalorder %s1287, 1
      %s1291 = scalar_select %p1290, %s1287, 1
      %s1292 = smul.addr %s1289, 2
      %s1293 = sadd.s32 %s1291, %s1292
      %s1294 = smul.addr %s1293, 4
      %s1295 = scalar_lea.vmem %s14, %s1294
      // Predicated region
      $region85: #{conformer_separator_forward.14} parent=75 // pred_check
        %p1296 = pneg %p413
      $region86: #{conformer_separator_forward.14} parent=75 // pred_check_branch
        %1298 = sbr.rel (%p1296) target = $region88
      $region87: #{conformer_separator_forward.14} parent=75 // pred_region
        %s1299 = smul.u32 2, %s31
      $region88: #{conformer_separator_forward.14} parent=75 // pred_fallthru
        _
    $region76: #{conformer_separator_forward.14} parent=5 // pred_fallthru
      _
    %p1300 = scmp.le.s32.totalorder 2, %s20
    // Predicated region
    $region89: #{conformer_separator_forward.14} parent=5 // pred_check
      %p1301 = pneg %p1300
    $region90: #{conformer_separator_forward.14} parent=5 // pred_check_branch
      %1303 = sbr.rel (%p1301) target = $region92
    $region91: #{conformer_separator_forward.14} parent=5 // pred_region
      %s1304 = ssub.s32 %s20, 2
      // Predicated region
      $region93: #{conformer_separator_forward.14} parent=91 // pred_check
        %p1305 = pneg %p419
      $region94: #{conformer_separator_forward.14} parent=91 // pred_check_branch
        %1307 = sbr.rel (%p1305) target = $region96
      $region95: #{conformer_separator_forward.14} parent=91 // pred_region
        %s1308 = smul.u32 2, %s34
        %p1309 = scmp.lt.s32.totalorder %s33, 1
        %s1310 = scalar_select %p1309, %s33, 1
        %p1311 = scmp.lt.s32.totalorder %s1308, 1
        %s1312 = scalar_select %p1311, %s1308, 1
        %s1313 = smul.addr %s1310, 2
        %s1314 = sadd.s32 %s1312, %s1313
        %s1315 = smul.addr %s1314, 4
        %s1316 = scalar_lea.vmem %s14, %s1315
      $region96: #{conformer_separator_forward.14} parent=91 // pred_fallthru
        _
    $region92: #{conformer_separator_forward.14} parent=5 // pred_fallthru
      _
  $region6: #{conformer_separator_forward.14} parent=0 // loop_footer
    %s24 = sadd.s32 1, %s20
  $region7: #{conformer_separator_forward.14} parent=0 // loop_footer_branch
    %19 = sbr.rel target = $region3
  $region8: #{conformer_separator_forward.14} parent=0 // loop_exit
    _

// kernel: conformer_separator_forward.15
$region0: #{conformer_separator_forward.15}
  #allocation0 [shape = 'u32[]', space=smem, size = 0x4, offset = 0x4, fixed_abs, tag = 'smem constant byte address 0x4 - core index']
  #allocation1 [shape = 'u32[72,128]{1,0:T(1,128)}', space=vmem, size = 0x9000, scoped, tag = 'internal scratch']
  %s0 = inlined_call_operand.vmem [shape: bf16[2,16,32], index: 0, kind: input, shape index: {}]
  %s1 = inlined_call_operand.vmem [shape: bf16[32,32], index: 1, kind: input, shape index: {}]
  %s2 = inlined_call_operand.vmem [shape: f32[1,32], index: 2, kind: input, shape index: {}]
  %s3 = inlined_call_operand.vmem [shape: bf16[32,32], index: 3, kind: input, shape index: {}]
  %s4 = inlined_call_operand.vmem [shape: f32[1,32], index: 4, kind: input, shape index: {}]
  %s5 = inlined_call_operand.vmem [shape: f32[7,1,32], index: 5, kind: input, shape index: {}]
  %s6 = inlined_call_operand.vmem [shape: f32[1,32], index: 6, kind: input, shape index: {}]
  %s7 = inlined_call_operand.vmem [shape: bf16[32,32], index: 7, kind: input, shape index: {}]
  %s8 = inlined_call_operand.vmem [shape: f32[1,32], index: 8, kind: input, shape index: {}]
  %s9 = inlined_call_operand.vmem [shape: f32[1,32], index: 9, kind: input, shape index: {}]
  %s10 = inlined_call_operand.vmem [shape: f32[1,32], index: 10, kind: input, shape index: {}]
  %s11 = inlined_call_operand.vmem [shape: bf16[2,16,32], index: 11, kind: output, shape index: {}]
  %s12 = sld [smem:[#allocation0]]
  $region77: #{conformer_separator_forward.15} parent=0
    _
  %s14 = ssub.s32 1, %s12
  %s15 = scalar_select 0, %s14, %s12
  loop: start=0, step=1, limit=4
  $region2: #{conformer_separator_forward.15} parent=0 // loop_pre_header
    _
  $region3: #{conformer_separator_forward.15} parent=0 // loop_header
    %s17 = sphi 0, %s21
    %p18 = scmp.ge.s32.totalorder %s17, 4
    %s27 = sphi 0, %s29
    %s30 = sphi 0, %s27
    %s31 = sphi 0, %s30
    %s47 = sphi 0, %s31
    %s51 = sphi 0, %s51
    %s53 = sphi 0, %s51
    %s54 = sphi 0, %s53
    %s68 = sphi 0, %s54
    %s72 = sphi 0, %s72
    %s74 = sphi 0, %s72
    %s75 = sphi 0, %s74
    %s89 = sphi 0, %s75
    %s93 = sphi 0, %s93
    %s95 = sphi 0, %s93
    %s96 = sphi 0, %s95
    %s110 = sphi 0, %s96
    %s114 = sphi 0, %s114
    %s116 = sphi 0, %s114
    %s117 = sphi 0, %s116
    %s131 = sphi 0, %s117
    %s135 = sphi 0, %s135
    %s137 = sphi 0, %s135
    %s138 = sphi 0, %s137
    %s152 = sphi 0, %s138
    %s156 = sphi 0, %s156
    %s158 = sphi 0, %s156
    %s159 = sphi 0, %s158
    %s173 = sphi 0, %s159
    %s177 = sphi 0, %s177
    %s179 = sphi 0, %s177
    %s180 = sphi 0, %s179
    %s194 = sphi 0, %s180
    %s198 = sphi 0, %s198
    %s200 = sphi 0, %s198
    %s201 = sphi 0, %s200
    %s215 = sphi 0, %s201
    %s219 = sphi 0, %s219
    %s221 = sphi 0, %s219
    %s222 = sphi 0, %s221
    %s236 = sphi 0, %s222
    %s240 = sphi 0, %s240
    %s242 = sphi 0, %s240
    %s243 = sphi 0, %s242
    %s257 = sphi 0, %s243
    %s263 = sphi 0, %s265
    %s266 = sphi 0, %s263
    %s267 = sphi 0, %s266
    %s283 = sphi 0, %s267
  $region4: #{conformer_separator_forward.15} parent=0 // loop_header_branch
    %20 = sbr.rel (%p18) target = $region8
  $region5: #{conformer_separator_forward.15} parent=0 // loop_body
    %s22 = ssub.s32 %s17, 1
    %s23 = ssub.s32 %s17, 2
    %s24 = sadd.s32 %s17, 1
    %s25 = ssub.s32 %s17, %s24
    %p26 = scmp.eq.s32.totalorder %s25, 0
    %s28 = sadd.s32 %s27, 1
    %s29 = scalar_select %p26, %s27, %s28
    %p32 = pneg %p26
    %p33 = scmp.eq.s32.totalorder %s17, 1
    %p34 = por %p32, %p33
    %p35 = scmp.ne.s32.totalorder %s27, %s30
    %p36 = scmp.eq.s32.totalorder %s17, 0
    %p37 = por %p35, %p36
    %p38 = scmp.ne.s32.totalorder %s27, %s30
    %p39 = scmp.eq.s32.totalorder %s22, 1
    %p40 = por %p38, %p39
    %p41 = scmp.ne.s32.totalorder %s30, %s31
    %p42 = scmp.eq.s32.totalorder %s22, 0
    %p43 = por %p41, %p42
    %p44 = scmp.ne.s32.totalorder %s30, %s31
    %p45 = scmp.eq.s32.totalorder %s23, 1
    %p46 = por %p44, %p45
    %p48 = scmp.ne.s32.totalorder %s31, %s47
    %p49 = scmp.eq.s32.totalorder %s23, 0
    %p50 = por %p48, %p49
    %s52 = sadd.s32 %s51, 1
    %p55 = scmp.eq.s32.totalorder %s17, 1
    %p56 = scmp.ne.s32.totalorder %s51, %s53
    %p57 = scmp.eq.s32.totalorder %s17, 0
    %p58 = por %p56, %p57
    %p59 = scmp.ne.s32.totalorder %s51, %s53
    %p60 = scmp.eq.s32.totalorder %s22, 1
    %p61 = por %p59, %p60
    %p62 = scmp.ne.s32.totalorder %s53, %s54
    %p63 = scmp.eq.s32.totalorder %s22, 0
    %p64 = por %p62, %p63
    %p65 = scmp.ne.s32.totalorder %s53, %s54
    %p66 = scmp.eq.s32.totalorder %s23, 1
    %p67 = por %p65, %p66
    %p69 = scmp.ne.s32.totalorder %s54, %s68
    %p70 = scmp.eq.s32.totalorder %s23, 0
    %p71 = por %p69, %p70
    %s73 = sadd.s32 %s72, 1
    %p76 = scmp.eq.s32.totalorder %s17, 1
    %p77 = scmp.ne.s32.totalorder %s72, %s74
    %p78 = scmp.eq.s32.totalorder %s17, 0
    %p79 = por %p77, %p78
    %p80 = scmp.ne.s32.totalorder %s72, %s74
    %p81 = scmp.eq.s32.totalorder %s22, 1
    %p82 = por %p80, %p81
    %p83 = scmp.ne.s32.totalorder %s74, %s75
    %p84 = scmp.eq.s32.totalorder %s22, 0
    %p85 = por %p83, %p84
    %p86 = scmp.ne.s32.totalorder %s74, %s75
    %p87 = scmp.eq.s32.totalorder %s23, 1
    %p88 = por %p86, %p87
    %p90 = scmp.ne.s32.totalorder %s75, %s89
    %p91 = scmp.eq.s32.totalorder %s23, 0
    %p92 = por %p90, %p91
    %s94 = sadd.s32 %s93, 1
    %p97 = scmp.eq.s32.totalorder %s17, 1
    %p98 = scmp.ne.s32.totalorder %s93, %s95
    %p99 = scmp.eq.s32.totalorder %s17, 0
    %p100 = por %p98, %p99
    %p101 = scmp.ne.s32.totalorder %s93, %s95
    %p102 = scmp.eq.s32.totalorder %s22, 1
    %p103 = por %p101, %p102
    %p104 = scmp.ne.s32.totalorder %s95, %s96
    %p105 = scmp.eq.s32.totalorder %s22, 0
    %p106 = por %p104, %p105
    %p107 = scmp.ne.s32.totalorder %s95, %s96
    %p108 = scmp.eq.s32.totalorder %s23, 1
    %p109 = por %p107, %p108
    %p111 = scmp.ne.s32.totalorder %s96, %s110
    %p112 = scmp.eq.s32.totalorder %s23, 0
    %p113 = por %p111, %p112
    %s115 = sadd.s32 %s114, 1
    %p118 = scmp.eq.s32.totalorder %s17, 1
    %p119 = scmp.ne.s32.totalorder %s114, %s116
    %p120 = scmp.eq.s32.totalorder %s17, 0
    %p121 = por %p119, %p120
    %p122 = scmp.ne.s32.totalorder %s114, %s116
    %p123 = scmp.eq.s32.totalorder %s22, 1
    %p124 = por %p122, %p123
    %p125 = scmp.ne.s32.totalorder %s116, %s117
    %p126 = scmp.eq.s32.totalorder %s22, 0
    %p127 = por %p125, %p126
    %p128 = scmp.ne.s32.totalorder %s116, %s117
    %p129 = scmp.eq.s32.totalorder %s23, 1
    %p130 = por %p128, %p129
    %p132 = scmp.ne.s32.totalorder %s117, %s131
    %p133 = scmp.eq.s32.totalorder %s23, 0
    %p134 = por %p132, %p133
    %s136 = sadd.s32 %s135, 1
    %p139 = scmp.eq.s32.totalorder %s17, 1
    %p140 = scmp.ne.s32.totalorder %s135, %s137
    %p141 = scmp.eq.s32.totalorder %s17, 0
    %p142 = por %p140, %p141
    %p143 = scmp.ne.s32.totalorder %s135, %s137
    %p144 = scmp.eq.s32.totalorder %s22, 1
    %p145 = por %p143, %p144
    %p146 = scmp.ne.s32.totalorder %s137, %s138
    %p147 = scmp.eq.s32.totalorder %s22, 0
    %p148 = por %p146, %p147
    %p149 = scmp.ne.s32.totalorder %s137, %s138
    %p150 = scmp.eq.s32.totalorder %s23, 1
    %p151 = por %p149, %p150
    %p153 = scmp.ne.s32.totalorder %s138, %s152
    %p154 = scmp.eq.s32.totalorder %s23, 0
    %p155 = por %p153, %p154
    %s157 = sadd.s32 %s156, 1
    %p160 = scmp.eq.s32.totalorder %s17, 1
    %p161 = scmp.ne.s32.totalorder %s156, %s158
    %p162 = scmp.eq.s32.totalorder %s17, 0
    %p163 = por %p161, %p162
    %p164 = scmp.ne.s32.totalorder %s156, %s158
    %p165 = scmp.eq.s32.totalorder %s22, 1
    %p166 = por %p164, %p165
    %p167 = scmp.ne.s32.totalorder %s158, %s159
    %p168 = scmp.eq.s32.totalorder %s22, 0
    %p169 = por %p167, %p168
    %p170 = scmp.ne.s32.totalorder %s158, %s159
    %p171 = scmp.eq.s32.totalorder %s23, 1
    %p172 = por %p170, %p171
    %p174 = scmp.ne.s32.totalorder %s159, %s173
    %p175 = scmp.eq.s32.totalorder %s23, 0
    %p176 = por %p174, %p175
    %s178 = sadd.s32 %s177, 1
    %p181 = scmp.eq.s32.totalorder %s17, 1
    %p182 = scmp.ne.s32.totalorder %s177, %s179
    %p183 = scmp.eq.s32.totalorder %s17, 0
    %p184 = por %p182, %p183
    %p185 = scmp.ne.s32.totalorder %s177, %s179
    %p186 = scmp.eq.s32.totalorder %s22, 1
    %p187 = por %p185, %p186
    %p188 = scmp.ne.s32.totalorder %s179, %s180
    %p189 = scmp.eq.s32.totalorder %s22, 0
    %p190 = por %p188, %p189
    %p191 = scmp.ne.s32.totalorder %s179, %s180
    %p192 = scmp.eq.s32.totalorder %s23, 1
    %p193 = por %p191, %p192
    %p195 = scmp.ne.s32.totalorder %s180, %s194
    %p196 = scmp.eq.s32.totalorder %s23, 0
    %p197 = por %p195, %p196
    %s199 = sadd.s32 %s198, 1
    %p202 = scmp.eq.s32.totalorder %s17, 1
    %p203 = scmp.ne.s32.totalorder %s198, %s200
    %p204 = scmp.eq.s32.totalorder %s17, 0
    %p205 = por %p203, %p204
    %p206 = scmp.ne.s32.totalorder %s198, %s200
    %p207 = scmp.eq.s32.totalorder %s22, 1
    %p208 = por %p206, %p207
    %p209 = scmp.ne.s32.totalorder %s200, %s201
    %p210 = scmp.eq.s32.totalorder %s22, 0
    %p211 = por %p209, %p210
    %p212 = scmp.ne.s32.totalorder %s200, %s201
    %p213 = scmp.eq.s32.totalorder %s23, 1
    %p214 = por %p212, %p213
    %p216 = scmp.ne.s32.totalorder %s201, %s215
    %p217 = scmp.eq.s32.totalorder %s23, 0
    %p218 = por %p216, %p217
    %s220 = sadd.s32 %s219, 1
    %p223 = scmp.eq.s32.totalorder %s17, 1
    %p224 = scmp.ne.s32.totalorder %s219, %s221
    %p225 = scmp.eq.s32.totalorder %s17, 0
    %p226 = por %p224, %p225
    %p227 = scmp.ne.s32.totalorder %s219, %s221
    %p228 = scmp.eq.s32.totalorder %s22, 1
    %p229 = por %p227, %p228
    %p230 = scmp.ne.s32.totalorder %s221, %s222
    %p231 = scmp.eq.s32.totalorder %s22, 0
    %p232 = por %p230, %p231
    %p233 = scmp.ne.s32.totalorder %s221, %s222
    %p234 = scmp.eq.s32.totalorder %s23, 1
    %p235 = por %p233, %p234
    %p237 = scmp.ne.s32.totalorder %s222, %s236
    %p238 = scmp.eq.s32.totalorder %s23, 0
    %p239 = por %p237, %p238
    %s241 = sadd.s32 %s240, 1
    %p244 = scmp.eq.s32.totalorder %s17, 1
    %p245 = scmp.ne.s32.totalorder %s240, %s242
    %p246 = scmp.eq.s32.totalorder %s17, 0
    %p247 = por %p245, %p246
    %p248 = scmp.ne.s32.totalorder %s240, %s242
    %p249 = scmp.eq.s32.totalorder %s22, 1
    %p250 = por %p248, %p249
    %p251 = scmp.ne.s32.totalorder %s242, %s243
    %p252 = scmp.eq.s32.totalorder %s22, 0
    %p253 = por %p251, %p252
    %p254 = scmp.ne.s32.totalorder %s242, %s243
    %p255 = scmp.eq.s32.totalorder %s23, 1
    %p256 = por %p254, %p255
    %p258 = scmp.ne.s32.totalorder %s243, %s257
    %p259 = scmp.eq.s32.totalorder %s23, 0
    %p260 = por %p258, %p259
    %s261 = ssub.s32 %s17, %s24
    %p262 = scmp.eq.s32.totalorder %s261, 0
    %s264 = sadd.s32 %s263, 1
    %s265 = scalar_select %p262, %s263, %s264
    %p268 = pneg %p262
    %p269 = scmp.eq.s32.totalorder %s17, 1
    %p270 = por %p268, %p269
    %p271 = scmp.ne.s32.totalorder %s263, %s266
    %p272 = scmp.eq.s32.totalorder %s17, 0
    %p273 = por %p271, %p272
    %p274 = scmp.ne.s32.totalorder %s263, %s266
    %p275 = scmp.eq.s32.totalorder %s22, 1
    %p276 = por %p274, %p275
    %p277 = scmp.ne.s32.totalorder %s266, %s267
    %p278 = scmp.eq.s32.totalorder %s22, 0
    %p279 = por %p277, %p278
    %p280 = scmp.ne.s32.totalorder %s266, %s267
    %p281 = scmp.eq.s32.totalorder %s23, 1
    %p282 = por %p280, %p281
    %p284 = scmp.ne.s32.totalorder %s267, %s283
    %p285 = scmp.eq.s32.totalorder %s23, 0
    %p286 = por %p284, %p285
    %p287 = scmp.le.s32.totalorder 1, %s17
    %p288 = scmp.lt.s32.totalorder %s17, 3
    %p289 = pnand %p287, %p288
    %p290 = pneg %p289
    // Predicated region
    $region9: #{conformer_separator_forward.15} parent=5 // pred_check
      _
    $region10: #{conformer_separator_forward.15} parent=5 // pred_check_branch
      %292 = sbr.rel (%p289) target = $region12
    $region11: #{conformer_separator_forward.15} parent=5 // pred_region
      %s293 = ssub.s32 %s17, 1
      // Predicated region
      $region13: #{conformer_separator_forward.15} parent=11 // pred_check
        %p294 = pneg %p64
      $region14: #{conformer_separator_forward.15} parent=11 // pred_check_branch
        %296 = sbr.rel (%p294) target = $region16
      $region15: #{conformer_separator_forward.15} parent=11 // pred_region
        _
      $region16: #{conformer_separator_forward.15} parent=11 // pred_fallthru
        _
      // Predicated region
      $region17: #{conformer_separator_forward.15} parent=11 // pred_check
        %p297 = pneg %p85
      $region18: #{conformer_separator_forward.15} parent=11 // pred_check_branch
        %299 = sbr.rel (%p297) target = $region20
      $region19: #{conformer_separator_forward.15} parent=11 // pred_region
        _
      $region20: #{conformer_separator_forward.15} parent=11 // pred_fallthru
        _
      // Predicated region
      $region21: #{conformer_separator_forward.15} parent=11 // pred_check
        %p300 = pneg %p106
      $region22: #{conformer_separator_forward.15} parent=11 // pred_check_branch
        %302 = sbr.rel (%p300) target = $region24
      $region23: #{conformer_separator_forward.15} parent=11 // pred_region
        _
      $region24: #{conformer_separator_forward.15} parent=11 // pred_fallthru
        _
      // Predicated region
      $region25: #{conformer_separator_forward.15} parent=11 // pred_check
        %p303 = pneg %p127
      $region26: #{conformer_separator_forward.15} parent=11 // pred_check_branch
        %305 = sbr.rel (%p303) target = $region28
      $region27: #{conformer_separator_forward.15} parent=11 // pred_region
        _
      $region28: #{conformer_separator_forward.15} parent=11 // pred_fallthru
        _
      // Predicated region
      $region29: #{conformer_separator_forward.15} parent=11 // pred_check
        %p306 = pneg %p148
      $region30: #{conformer_separator_forward.15} parent=11 // pred_check_branch
        %308 = sbr.rel (%p306) target = $region32
      $region31: #{conformer_separator_forward.15} parent=11 // pred_region
        _
      $region32: #{conformer_separator_forward.15} parent=11 // pred_fallthru
        _
      // Predicated region
      $region33: #{conformer_separator_forward.15} parent=11 // pred_check
        %p309 = pneg %p169
      $region34: #{conformer_separator_forward.15} parent=11 // pred_check_branch
        %311 = sbr.rel (%p309) target = $region36
      $region35: #{conformer_separator_forward.15} parent=11 // pred_region
        _
      $region36: #{conformer_separator_forward.15} parent=11 // pred_fallthru
        _
      // Predicated region
      $region37: #{conformer_separator_forward.15} parent=11 // pred_check
        %p312 = pneg %p190
      $region38: #{conformer_separator_forward.15} parent=11 // pred_check_branch
        %314 = sbr.rel (%p312) target = $region40
      $region39: #{conformer_separator_forward.15} parent=11 // pred_region
        _
      $region40: #{conformer_separator_forward.15} parent=11 // pred_fallthru
        _
      // Predicated region
      $region41: #{conformer_separator_forward.15} parent=11 // pred_check
        %p315 = pneg %p211
      $region42: #{conformer_separator_forward.15} parent=11 // pred_check_branch
        %317 = sbr.rel (%p315) target = $region44
      $region43: #{conformer_separator_forward.15} parent=11 // pred_region
        _
      $region44: #{conformer_separator_forward.15} parent=11 // pred_fallthru
        _
      // Predicated region
      $region45: #{conformer_separator_forward.15} parent=11 // pred_check
        %p318 = pneg %p232
      $region46: #{conformer_separator_forward.15} parent=11 // pred_check_branch
        %320 = sbr.rel (%p318) target = $region48
      $region47: #{conformer_separator_forward.15} parent=11 // pred_region
        _
      $region48: #{conformer_separator_forward.15} parent=11 // pred_fallthru
        _
      // Predicated region
      $region49: #{conformer_separator_forward.15} parent=11 // pred_check
        %p321 = pneg %p253
      $region50: #{conformer_separator_forward.15} parent=11 // pred_check_branch
        %323 = sbr.rel (%p321) target = $region52
      $region51: #{conformer_separator_forward.15} parent=11 // pred_region
        _
      $region52: #{conformer_separator_forward.15} parent=11 // pred_fallthru
        _
    $region12: #{conformer_separator_forward.15} parent=5 // pred_fallthru
      _
    %p324 = scmp.lt.s32.totalorder %s17, 2
    // Predicated region
    $region53: #{conformer_separator_forward.15} parent=5 // pred_check
      %p325 = pneg %p324
    $region54: #{conformer_separator_forward.15} parent=5 // pred_check_branch
      %327 = sbr.rel (%p325) target = $region56
    $region55: #{conformer_separator_forward.15} parent=5 // pred_region
      // Predicated region
      $region57: #{conformer_separator_forward.15} parent=55 // pred_check
        %p328 = pneg %p37
      $region58: #{conformer_separator_forward.15} parent=55 // pred_check_branch
        %330 = sbr.rel (%p328) target = $region60
      $region59: #{conformer_separator_forward.15} parent=55 // pred_region
        %p331 = scmp.lt.s32.totalorder %s17, 1
        %s332 = scalar_select %p331, %s17, 1
        %s333 = smul.addr %s332, 2
        %s334 = smul.addr %s333, 4
        %s335 = scalar_lea.vmem %s0, %s334
      $region60: #{conformer_separator_forward.15} parent=55 // pred_fallthru
        _
    $region56: #{conformer_separator_forward.15} parent=5 // pred_fallthru
      _
    %p336 = scmp.le.s32.totalorder 1, %s17
    %p337 = scmp.lt.s32.totalorder %s17, 3
    %p338 = pnand %p336, %p337
    %p339 = pneg %p338
    // Predicated region
    $region61: #{conformer_separator_forward.15} parent=5 // pred_check
      _
    $region62: #{conformer_separator_forward.15} parent=5 // pred_check_branch
      %341 = sbr.rel (%p338) target = $region64
    $region63: #{conformer_separator_forward.15} parent=5 // pred_region
      %s342 = ssub.s32 %s17, 1
      %p343 = scmp.lt.s32.totalorder %s22, 1
      %s344 = scalar_select %p343, %s22, 1
      %s345 = smul.addr %s344, 2
      %s346 = smul.addr %s345, 4
      %s347 = scalar_lea.vmem %s0, %s346
      %p348 = pneg %p43
      %p349 = pneg %p40
      %p350 = pneg %p64
      %p351 = pneg %p61
      %p352 = pneg %p85
      %p353 = pneg %p82
      %p354 = pneg %p106
      %p355 = pneg %p103
      %p356 = pneg %p127
      %p357 = pneg %p124
      %p358 = pneg %p148
      %p359 = pneg %p145
      %p360 = pneg %p169
      %p361 = pneg %p166
      %p362 = pneg %p190
      %p363 = pneg %p187
      %p364 = pneg %p211
      %p365 = pneg %p208
      %p366 = pneg %p232
      %p367 = pneg %p229
      %p368 = pneg %p253
      %p369 = pneg %p250
      %p370 = pneg %p279
      %p371 = pneg %p276
      %p372 = scmp.lt.s32.totalorder %s22, 1
      %s373 = scalar_select %p372, %s22, 1
      %s374 = smul.addr %s373, 2
      %s375 = smul.addr %s374, 4
      %s376 = scalar_lea.vmem %s11, %s375
      %p377 = scmp.lt.s32.totalorder %s22, 1
      %s378 = scalar_select %p377, %s22, 1
      %s379 = smul.addr %s378, 2
      %s380 = smul.addr %s379, 4
      %s381 = scalar_lea.vmem %s0, %s380
      %p382 = scmp.lt.s32.totalorder %s22, 1
      %s383 = scalar_select %p382, %s22, 1
      %s384 = smul.addr %s383, 2
      %s385 = smul.addr %s384, 4
      %s386 = scalar_lea.vmem %s11, %s385
      %v388 = vld [vmem:[%s381] sm:$0xf]
      %v389 = vld [vmem:[%s381 + $0x4] sm:$0xf]
      %v390 = vld [vmem:[%s1] sm:$0xf]
      %v391 = vld [vmem:[%s1 + $0x4] sm:$0xf]
      %v392 = vld [vmem:[%s1 + $0x8] sm:$0xf]
      %v393 = vld [vmem:[%s1 + $0xc] sm:$0xf]
      %v394 = vld [vmem:[%s2] sm:$0x1]
      %v396 = vperm.slane %v394, 0
      %v400 = vunpack.c.l.b16 %v388
      %v401 = vunpack.c.l.b16 %v389
      %v402 = vpack.c.b16 %v401, %v400
      %v407 = vunpack.c.l.b16 %v390
      %v408 = vunpack.c.l.b16 %v391
      %v409 = vunpack.c.l.b16 %v392
      %v410 = vunpack.c.l.b16 %v393
      %v411 = vpack.c.b16 %v408, %v407
      %v412 = vpack.c.b16 %v410, %v409
      %vm415 = vcmask 261120
      %v417 = vsel %vm415, %v402, 0
      %419 = vmatpush.bf16.msra.mxu0 0
      %420 = vmatpush.bf16.msra.mxu0 0
      %421 = vmatpush.bf16.msra.mxu0 0
      %422 = vmatpush.bf16.msra.mxu0 0
      %423 = vmatpush.bf16.msra.mxu0 0
      %424 = vmatpush.bf16.msra.mxu0 0
      %425 = vmatpush.bf16.msra.mxu0 %v412
      %426 = vmatpush.bf16.msra.mxu0 %v411
      %427 = vmatmul.bf16.gmra.mxu0 %v417
      %v428 = vpop.f32.mrf.mxu0
      %v429 = vadd.f32 %v396, %v428
      %v430 = vpop.f32.mrf.mxu0
      %v431 = vadd.f32 %v396, %v430
      %432 = vdwg.mxu0
      %v433 = vld [vmem:[%s3] sm:$0xf]
      %v434 = vld [vmem:[%s3 + $0x4] sm:$0xf]
      %v435 = vld [vmem:[%s3 + $0x8] sm:$0xf]
      %v436 = vld [vmem:[%s3 + $0xc] sm:$0xf]
      %v437 = vld [vmem:[%s4] sm:$0x1]
      %v439 = vperm.slane %v437, 0
      %v445 = vunpack.c.l.b16 %v433
      %v446 = vunpack.c.l.b16 %v434
      %v447 = vunpack.c.l.b16 %v435
      %v448 = vunpack.c.l.b16 %v436
      %v449 = vpack.c.b16 %v446, %v445
      %v450 = vpack.c.b16 %v448, %v447
      %453 = vmatpush.bf16.msra.mxu0 0
      %454 = vmatpush.bf16.msra.mxu0 0
      %455 = vmatpush.bf16.msra.mxu0 0
      %456 = vmatpush.bf16.msra.mxu0 0
      %457 = vmatpush.bf16.msra.mxu0 0
      %458 = vmatpush.bf16.msra.mxu0 0
      %459 = vmatpush.bf16.msra.mxu0 %v450
      %460 = vmatpush.bf16.msra.mxu0 %v449
      %461 = vmatmul.bf16.gmra.mxu0 %v417
      %v462 = vpop.f32.mrf.mxu0
      %v463 = vadd.f32 %v439, %v462
      %v464 = vpop.f32.mrf.mxu0
      %v465 = vadd.f32 %v439, %v464
      %466 = vdwg.mxu0
      %v467 = vsub.f32 0.0, %v463
      %v468 = vsub.f32 0.0, %v465
      %v469 = vmul.f32 %v467, 1.442695
      %v470 = vpow.pop %v469
      %v471 = vmul.f32 %v468, 1.442695
      %v472 = vpow.pop %v471
      %v473 = vadd.f32 %v470, 1.0
      %v474 = vadd.f32 %v472, 1.0
      %v475 = vrcp.pop %v473
      %v476 = vrcp.pop %v474
      %v477 = vmul.f32 %v429, %v475
      %v478 = vmul.f32 %v431, %v476
      %v479 = vlaneseq
      %v480 = vshrl.u32 %v479, 7
      %v481 = vadd.s32 %v480, 8
      %s482 = scalar_lea.vmem %s5, 3
      %v483 = vld [vmem:[%s482] sm:$0x1]
      %v485 = vperm.slane %v483, 0
      %v487 = vmul.f32 %v477, %v485
      %v488 = vmul.f32 %v478, %v485
      %vm491 = vcmask 1042432
      %v492 = vrot.slane %v477, 5
      %v493 = vrot.slane %v478, 5
      %v494 = vsel %vm491, %v492, %v493
      %v497 = vsel %vm491, 0.0, %v492
      %v498 = vadd.s32 %v480, 4294967293
      %v499 = vadd.s32 %v481, 4294967293
      %vm500 = vcmp.ge.s32.totalorder %v498, 0
      %vm501 = vcmp.ge.s32.totalorder %v499, 0
      %vm502 = vcmp.lt.s32.totalorder %v498, 16
      %vm503 = vcmp.lt.s32.totalorder %v499, 16
      %vm504 = vmand %vm500, %vm502
      %vm505 = vmand %vm501, %vm503
      %v506 = vsel %vm504, %v497, 0.0
      %v507 = vsel %vm505, %v494, 0.0
      %v508 = vld [vmem:[%s5] sm:$0x1]
      %v510 = vperm.slane %v508, 0
      %v512 = vmul.f32 %v506, %v510
      %v513 = vmul.f32 %v507, %v510
      %v514 = vadd.f32 %v487, %v512
      %v515 = vadd.f32 %v488, %v513
      %vm516 = vcmask 1041408
      %v517 = vrot.slane %v477, 6
      %v518 = vrot.slane %v478, 6
      %v519 = vsel %vm516, %v517, %v518
      %v522 = vsel %vm516, 0.0, %v517
      %v523 = vadd.s32 %v480, 4294967294
      %v524 = vadd.s32 %v481, 4294967294
      %vm525 = vcmp.ge.s32.totalorder %v523, 0
      %vm526 = vcmp.ge.s32.totalorder %v524, 0
      %vm527 = vcmp.lt.s32.totalorder %v523, 16
      %vm528 = vcmp.lt.s32.totalorder %v524, 16
      %vm529 = vmand %vm525, %vm527
      %vm530 = vmand %vm526, %vm528
      %v531 = vsel %vm529, %v522, 0.0
      %v532 = vsel %vm530, %v519, 0.0
      %s533 = scalar_lea.vmem %s5, 1
      %v534 = vld [vmem:[%s533] sm:$0x1]
      %v536 = vperm.slane %v534, 0
      %v538 = vmul.f32 %v531, %v536
      %v539 = vmul.f32 %v532, %v536
      %v540 = vadd.f32 %v514, %v538
      %v541 = vadd.f32 %v515, %v539
      %vm542 = vcmask 1040384
      %v543 = vrot.slane %v477, 7
      %v544 = vrot.slane %v478, 7
      %v545 = vsel %vm542, %v543, %v544
      %v548 = vsel %vm542, 0.0, %v543
      %v549 = vadd.s32 %v480, 4294967295
      %v550 = vadd.s32 %v481, 4294967295
      %vm551 = vcmp.ge.s32.totalorder %v549, 0
      %vm552 = vcmp.ge.s32.totalorder %v550, 0
      %vm553 = vcmp.lt.s32.totalorder %v549, 16
      %vm554 = vcmp.lt.s32.totalorder %v550, 16
      %vm555 = vmand %vm551, %vm553
      %vm556 = vmand %vm552, %vm554
      %v557 = vsel %vm555, %v548, 0.0
      %v558 = vsel %vm556, %v545, 0.0
      %s559 = scalar_lea.vmem %s5, 2
      %v560 = vld [vmem:[%s559] sm:$0x1]
      %v562 = vperm.slane %v560, 0
      %v564 = vmul.f32 %v557, %v562
      %v565 = vmul.f32 %v558, %v562
      %v566 = vadd.f32 %v540, %v564
      %v567 = vadd.f32 %v541, %v565
      %vm568 = vcmask 1046528
      %v569 = vrot.slane %v477, 1
      %v570 = vrot.slane %v478, 1
      %v571 = vsel %vm568, %v569, %v570
      %v574 = vsel %vm568, %v570, 0.0
      %v575 = vadd.s32 %v480, 1
      %v576 = vadd.s32 %v481, 1
      %vm577 = vcmp.ge.s32.totalorder %v575, 0
      %vm578 = vcmp.ge.s32.totalorder %v576, 0
      %vm579 = vcmp.lt.s32.totalorder %v575, 16
      %vm580 = vcmp.lt.s32.totalorder %v576, 16
      %vm581 = vmand %vm577, %vm579
      %vm582 = vmand %vm578, %vm580
      %v583 = vsel %vm581, %v571, 0.0
      %v584 = vsel %vm582, %v574, 0.0
      %s585 = scalar_lea.vmem %s5, 4
      %v586 = vld [vmem:[%s585] sm:$0x1]
      %v588 = vperm.slane %v586, 0
      %v590 = vmul.f32 %v583, %v588
      %v591 = vmul.f32 %v584, %v588
      %v592 = vadd.f32 %v566, %v590
      %v593 = vadd.f32 %v567, %v591
      %vm594 = vcmask 1045504
      %v595 = vrot.slane %v477, 2
      %v596 = vrot.slane %v478, 2
      %v597 = vsel %vm594, %v595, %v596
      %v600 = vsel %vm594, %v596, 0.0
      %v601 = vadd.s32 %v480, 2
      %v602 = vadd.s32 %v481, 2
      %vm603 = vcmp.ge.s32.totalorder %v601, 0
      %vm604 = vcmp.ge.s32.totalorder %v602, 0
      %vm605 = vcmp.lt.s32.totalorder %v601, 16
      %vm606 = vcmp.lt.s32.totalorder %v602, 16
      %vm607 = vmand %vm603, %vm605
      %vm608 = vmand %vm604, %vm606
      %v609 = vsel %vm607, %v597, 0.0
      %v610 = vsel %vm608, %v600, 0.0
      %s611 = scalar_lea.vmem %s5, 5
      %v612 = vld [vmem:[%s611] sm:$0x1]
      %v614 = vperm.slane %v612, 0
      %v616 = vmul.f32 %v609, %v614
      %v617 = vmul.f32 %v610, %v614
      %v618 = vadd.f32 %v592, %v616
      %v619 = vadd.f32 %v593, %v617
      %vm620 = vcmask 1044480
      %v621 = vrot.slane %v477, 3
      %v622 = vrot.slane %v478, 3
      %v623 = vsel %vm620, %v621, %v622
      %v626 = vsel %vm620, %v622, 0.0
      %v627 = vadd.s32 %v480, 3
      %v628 = vadd.s32 %v481, 3
      %vm629 = vcmp.ge.s32.totalorder %v627, 0
      %vm630 = vcmp.ge.s32.totalorder %v628, 0
      %vm631 = vcmp.lt.s32.totalorder %v627, 16
      %vm632 = vcmp.lt.s32.totalorder %v628, 16
      %vm633 = vmand %vm629, %vm631
      %vm634 = vmand %vm630, %vm632
      %v635 = vsel %vm633, %v623, 0.0
      %v636 = vsel %vm634, %v626, 0.0
      %s637 = scalar_lea.vmem %s5, 6
      %v638 = vld [vmem:[%s637] sm:$0x1]
      %v640 = vperm.slane %v638, 0
      %v642 = vmul.f32 %v635, %v640
      %v643 = vmul.f32 %v636, %v640
      %v644 = vadd.f32 %v618, %v642
      %v645 = vadd.f32 %v619, %v643
      %v646 = vld [vmem:[%s6] sm:$0x1]
      %v648 = vperm.slane %v646, 0
      %v650 = vadd.f32 %v644, %v648
      %v651 = vadd.f32 %v645, %v648
      %v652 = vmul.f32 %v650, 0.999995
      %v653 = vmul.f32 %v651, 0.999995
      %v654 = vsub.f32 0.0, %v652
      %v655 = vsub.f32 0.0, %v653
      %v656 = vmul.f32 %v654, 1.442695
      %v657 = vpow.pop %v656
      %v658 = vmul.f32 %v655, 1.442695
      %v659 = vpow.pop %v658
      %v660 = vadd.f32 %v657, 1.0
      %v661 = vadd.f32 %v659, 1.0
      %v662 = vrcp.pop %v660
      %v663 = vrcp.pop %v661
      %v664 = vmul.f32 %v652, %v662
      %v665 = vmul.f32 %v653, %v663
      %v666 = vpack.c.bf16 %v665, %v664
      %v667 = vld [vmem:[%s7] sm:$0xf]
      %v668 = vld [vmem:[%s7 + $0x4] sm:$0xf]
      %v669 = vld [vmem:[%s7 + $0x8] sm:$0xf]
      %v670 = vld [vmem:[%s7 + $0xc] sm:$0xf]
      %v671 = vld [vmem:[%s8] sm:$0x1]
      %v673 = vperm.slane %v671, 0
      %v679 = vunpack.c.l.b16 %v667
      %v680 = vunpack.c.l.b16 %v668
      %v681 = vunpack.c.l.b16 %v669
      %v682 = vunpack.c.l.b16 %v670
      %v683 = vpack.c.b16 %v680, %v679
      %v684 = vpack.c.b16 %v682, %v681
      %v688 = vsel %vm415, %v666, 0
      %690 = vmatpush.bf16.msra.mxu0 0
      %691 = vmatpush.bf16.msra.mxu0 0
      %692 = vmatpush.bf16.msra.mxu0 0
      %693 = vmatpush.bf16.msra.mxu0 0
      %694 = vmatpush.bf16.msra.mxu0 0
      %695 = vmatpush.bf16.msra.mxu0 0
      %696 = vmatpush.bf16.msra.mxu0 %v684
      %697 = vmatpush.bf16.msra.mxu0 %v683
      %698 = vmatmul.bf16.gmra.mxu0 %v688
      %v699 = vpop.f32.mrf.mxu0
      %v700 = vadd.f32 %v673, %v699
      %v701 = vpop.f32.mrf.mxu0
      %v702 = vadd.f32 %v673, %v701
      %703 = vdwg.mxu0
      %v704 = vunpack.c.l.bf16 %v388
      %v705 = vunpack.c.l.bf16 %v389
      %v706 = vadd.f32 %v704, %v700
      %v707 = vadd.f32 %v705, %v702
      %v708 = vld [vmem:[%s9] sm:$0x1]
      %v709 = vld [vmem:[%s10] sm:$0x1]
      %v710 = vsel %vm415, %v706, 0.0
      %711 = vadd.xlane.f32.xlu0 %v710
      %v712 = vpop.xlane.xlu0 %711
      %v713 = vsel %vm415, %v707, 0.0
      %714 = vadd.xlane.f32.xlu0 %v713
      %v715 = vpop.xlane.xlu0 %714
      %v716 = vrcp.pop 32.0
      %v717 = vmul.f32 32.0, %v716
      %v718 = vsub.f32 1.0, %v717
      %v719 = vmul.f32 %v716, %v718
      %v720 = vadd.f32 %v716, %v719
      %vm721 = vweird.f32 %v716
      %v722 = vsel %vm721, %v716, %v720
      %v723 = vmul.f32 %v712, %v722
      %v724 = vmul.f32 %v715, %v722
      %v725 = vsub.f32 %v706, %v723
      %v726 = vsub.f32 %v707, %v724
      %v727 = vmul.f32 %v725, %v725
      %v728 = vmul.f32 %v726, %v726
      %v729 = vsel %vm415, %v727, 0.0
      %730 = vadd.xlane.f32.xlu0 %v729
      %v731 = vpop.xlane.xlu0 %730
      %v732 = vsel %vm415, %v728, 0.0
      %733 = vadd.xlane.f32.xlu0 %v732
      %v734 = vpop.xlane.xlu0 %733
      %v735 = vmul.f32 %v731, %v722
      %v736 = vmul.f32 %v734, %v722
      %v737 = vadd.f32 %v735, 1e-12
      %v738 = vadd.f32 %v736, 1e-12
      %v739 = vrsqrt.pop %v737
      %v740 = vmul.f32 %v739, %v737
      %v741 = vmul.f32 %v740, %v739
      %v742 = vmul.f32 0.5, %v741
      %v743 = vsub.f32 1.5, %v742
      %v744 = vmul.f32 %v739, %v743
      %vm745 = vweird.f32 %v737
      %vm746 = vweird.f32 %v739
      %vm747 = vmor %vm745, %vm746
      %v748 = vsel %vm747, %v739, %v744
      %v749 = vrsqrt.pop %v738
      %v750 = vmul.f32 %v749, %v738
      %v751 = vmul.f32 %v750, %v749
      %v752 = vmul.f32 0.5, %v751
      %v753 = vsub.f32 1.5, %v752
      %v754 = vmul.f32 %v749, %v753
      %vm755 = vweird.f32 %v738
      %vm756 = vweird.f32 %v749
      %vm757 = vmor %vm755, %vm756
      %v758 = vsel %vm757, %v749, %v754
      %v759 = vmul.f32 %v725, %v748
      %v760 = vmul.f32 %v726, %v758
      %v762 = vperm.slane %v708, 0
      %v764 = vmul.f32 %v759, %v762
      %v765 = vmul.f32 %v760, %v762
      %v767 = vperm.slane %v709, 0
      %v769 = vadd.f32 %v764, %v767
      %v770 = vadd.f32 %v765, %v767
      %v771 = vpack.c.bf16 %v769, %v769
      %v772 = vpack.c.bf16 %v770, %v770
      %vm773 = vcmask 257024
      %774 = vst.msk [vmem:[%s386] sm:$0xf] %vm773, %v771
      %775 = vst.msk [vmem:[%s386 + $0x4] sm:$0xf] %vm773, %v772
      %p776 = scmp.lt.s32.totalorder %s22, 1
      %s777 = scalar_select %p776, %s22, 1
      %s778 = smul.addr %s777, 2
      %s779 = smul.addr %s778, 4
      %s780 = scalar_lea.vmem %s11, %s779
      // Predicated region
      $region65: #{conformer_separator_forward.15} parent=63 // pred_check
        %p781 = pneg %p276
      $region66: #{conformer_separator_forward.15} parent=63 // pred_check_branch
        %783 = sbr.rel (%p781) target = $region68
      $region67: #{conformer_separator_forward.15} parent=63 // pred_region
        _
      $region68: #{conformer_separator_forward.15} parent=63 // pred_fallthru
        _
    $region64: #{conformer_separator_forward.15} parent=5 // pred_fallthru
      _
    %p784 = scmp.le.s32.totalorder 2, %s17
    // Predicated region
    $region69: #{conformer_separator_forward.15} parent=5 // pred_check
      %p785 = pneg %p784
    $region70: #{conformer_separator_forward.15} parent=5 // pred_check_branch
      %787 = sbr.rel (%p785) target = $region72
    $region71: #{conformer_separator_forward.15} parent=5 // pred_region
      %s788 = ssub.s32 %s17, 2
      // Predicated region
      $region73: #{conformer_separator_forward.15} parent=71 // pred_check
        %p789 = pneg %p282
      $region74: #{conformer_separator_forward.15} parent=71 // pred_check_branch
        %791 = sbr.rel (%p789) target = $region76
      $region75: #{conformer_separator_forward.15} parent=71 // pred_region
        %p792 = scmp.lt.s32.totalorder %s23, 1
        %s793 = scalar_select %p792, %s23, 1
        %s794 = smul.addr %s793, 2
        %s795 = smul.addr %s794, 4
        %s796 = scalar_lea.vmem %s11, %s795
      $region76: #{conformer_separator_forward.15} parent=71 // pred_fallthru
        _
    $region72: #{conformer_separator_forward.15} parent=5 // pred_fallthru
      _
  $region6: #{conformer_separator_forward.15} parent=0 // loop_footer
    %s21 = sadd.s32 1, %s17
  $region7: #{conformer_separator_forward.15} parent=0 // loop_footer_branch
    %16 = sbr.rel target = $region3
  $region8: #{conformer_separator_forward.15} parent=0 // loop_exit
    _

</llo_original>
